<compile_context>
chip_gen: v7x
topology: tpu7x:2x2x1
jax: 0.10.0
libtpu: 0.0.40
codegen_flags: <defaults>
</compile_context>

<pallas_src>
import numpy as np
import jax
import jax.numpy as jnp
from jax.experimental import pallas as pl
from jax.experimental.pallas import tpu as pltpu


def _conv_out(n, k, s):
    return (n - k) // s + 1


# --------------------------- fused Pallas kernel ----------------------------

def _fused_policy_kernel(col_ref, w1_ref, b1_ref, w2_ref, b2_ref,
                         w3_ref, b3_ref, wf1_ref, bf1_ref, wf2_ref, bf2_ref,
                         o_ref):
    """Entire Policy forward for the whole (tiny) batch in one invocation.

    col_ref : (16, P2*B, 64*C) conv1 im2col; slab r2 = kh2*4+kw2 holds, for
              conv2 output position p2 (major) and sample n (minor), the conv1
              patch of conv1-output pixel (2*h2+kh2, 2*w2+kw2); features are
              flattened (kh1, kw1, c).
    w1_ref  : (64*C, 32)   conv1 weight, rows (kh1, kw1, c)
    w2_ref  : (16, 32, 64) conv2 weight, [kh2*4+kw2, cin, cout]
    w3_ref  : (9, 64, 64)  conv3 weight, [kh3*3+kw3, cin, cout]
    wf1_ref : (64, 64), wf2_ref : (64, 1)  fc weights in (in, out) layout
    b*_ref  : (1, N) biases
    o_ref   : (B, 1) sigmoid output
    """
    batch = o_ref.shape[0]

    # conv1 + conv2, fused: accumulate over the 16 conv2 kernel positions.
    acc2 = None
    for r2 in range(col_ref.shape[0]):
        a1 = jnp.dot(col_ref[r2], w1_ref[...],
                     preferred_element_type=jnp.float32)
        a1 = jnp.maximum(a1 + b1_ref[...], 0.0)               # (P2*B, 32)
        c = jnp.dot(a1, w2_ref[r2], preferred_element_type=jnp.float32)
        acc2 = c if acc2 is None else acc2 + c
    a2 = jnp.maximum(acc2 + b2_ref[...], 0.0)                 # (P2*B, 64)

    # conv3: 3x3 input -> 1x1 output = full contraction over the 9 positions.
    acc3 = None
    for p in range(w3_ref.shape[0]):
        piece = a2[p * batch:(p + 1) * batch, :]              # (B, 64)
        c = jnp.dot(piece, w3_ref[p], preferred_element_type=jnp.float32)
        acc3 = c if acc3 is None else acc3 + c
    a3 = jnp.maximum(acc3 + b3_ref[...], 0.0)                 # (B, 64)

    # fc head: Linear(64) -> ReLU -> Linear(1) -> Sigmoid.
    h = jnp.dot(a3, wf1_ref[...], preferred_element_type=jnp.float32)
    h = jnp.maximum(h + bf1_ref[...], 0.0)
    logits = jnp.dot(h, wf2_ref[...], preferred_element_type=jnp.float32)
    logits = logits + bf2_ref[...]
    o_ref[...] = jax.nn.sigmoid(logits).astype(o_ref.dtype)


def _full_spec(shape):
    return pl.BlockSpec(shape, lambda i: (0,) * len(shape))


def _fused_policy_call(col, w1, b1, w2, b2, w3, b3, wf1, bf1, wf2, bf2, batch):
    args = (col, w1, b1, w2, b2, w3, b3, wf1, bf1, wf2, bf2)
    return pl.pallas_call(
        _fused_policy_kernel,
        out_shape=jax.ShapeDtypeStruct((batch, 1), jnp.float32),
        grid=(1,),
        in_specs=[_full_spec(a.shape) for a in args],
        out_specs=_full_spec((batch, 1)),
        compiler_params=pltpu.CompilerParams(
            dimension_semantics=("arbitrary",)),
    )(*args)


# --------------------- wrapper: conv1 im2col pre-gather ----------------------

def _build_conv1_cols(x_nchw):
    """conv1 im2col, duplicated & reordered for the in-kernel conv2 loop.

    Returns (16, H2*W2*B, 8*8*C) float32.  Slab r2 = kh2*4 + kw2 holds, for
    each conv2 output position p2 = h2*W2 + w2 (major) and sample n (minor),
    the 8x8xC conv1 patch of conv1-output pixel (2*h2+kh2, 2*w2+kw2),
    features flattened as (kh1, kw1, c).
    """
    B, C, H, W = x_nchw.shape
    H1, W1 = _conv_out(H, 8, 4), _conv_out(W, 8, 4)
    H2, W2 = _conv_out(H1, 4, 2), _conv_out(W1, 4, 2)
    x = jnp.transpose(x_nchw, (0, 2, 3, 1)).astype(jnp.float32)      # NHWC
    patches = []
    for kh in range(8):
        for kw in range(8):
            patches.append(x[:, kh:kh + 4 * H1:4, kw:kw + 4 * W1:4, :])
    patches = jnp.stack(patches, axis=3)             # (B, H1, W1, 64, C)

    r2 = np.arange(16)
    kh2, kw2 = r2 // 4, r2 % 4
    p2 = np.arange(H2 * W2)
    h2, w2 = p2 // W2, p2 % W2
    hidx = 2 * h2[None, :] + kh2[:, None]            # (16, H2*W2)
    widx = 2 * w2[None, :] + kw2[:, None]
    col = patches[:, hidx, widx, :, :]               # (B, 16, H2*W2, 64, C)
    col = jnp.transpose(col, (1, 2, 0, 3, 4))        # (16, H2*W2, B, 64, C)
    return col.reshape(16, H2 * W2 * B, 8 * 8 * C)


def policy_forward(params, x_nchw):
    B = x_nchw.shape[0]
    col = _build_conv1_cols(x_nchw)
    return _fused_policy_call(
        col, params["w1"], params["b1"], params["w2"], params["b2"],
        params["w3"], params["b3"], params["wf1"], params["bf1"],
        params["wf2"], params["bf2"], batch=B)


# ------------------------------ parameter init -------------------------------

def _uniform(key, shape, fan_in):
    bound = 1.0 / np.sqrt(fan_in)
    return jax.random.uniform(key, shape, jnp.float32, -bound, bound)


def init_policy_params(key, input_shape):
    """Returns (kernel-ready pre-flattened params, PyTorch-layout raw params)."""
    C, H, W = input_shape
    H1, W1 = _conv_out(H, 8, 4), _conv_out(W, 8, 4)
    H2, W2 = _conv_out(H1, 4, 2), _conv_out(W1, 4, 2)
    H3, W3 = _conv_out(H2, 3, 1), _conv_out(W2, 3, 1)
    # TODO(synk): generalize the fused kernel to conv3 outputs larger than 1x1
    # (would need the NCHW flatten permutation folded into the fc1 weight).
    assert H3 == 1 and W3 == 1, "fused kernel assumes a 1x1 conv3 output"
    conv_out_size = 64 * H3 * W3

    ks = jax.random.split(key, 10)
    raw = {
        "w_c1": _uniform(ks[0], (32, C, 8, 8), C * 8 * 8),
        "b_c1": _uniform(ks[1], (32,), C * 8 * 8),
        "w_c2": _uniform(ks[2], (64, 32, 4, 4), 32 * 4 * 4),
        "b_c2": _uniform(ks[3], (64,), 32 * 4 * 4),
        "w_c3": _uniform(ks[4], (64, 64, 3, 3), 64 * 3 * 3),
        "b_c3": _uniform(ks[5], (64,), 64 * 3 * 3),
        "w_f1": _uniform(ks[6], (64, conv_out_size), conv_out_size),
        "b_f1": _uniform(ks[7], (64,), conv_out_size),
        "w_f2": _uniform(ks[8], (1, 64), 64),
        "b_f2": _uniform(ks[9], (1,), 64),
    }
    # Pre-flatten to matmul-ready layouts ONCE (no per-forward transposes).
    params = {
        "w1": jnp.transpose(raw["w_c1"], (2, 3, 1, 0)).reshape(8 * 8 * C, 32),
        "b1": raw["b_c1"].reshape(1, 32),
        "w2": jnp.transpose(raw["w_c2"], (2, 3, 1, 0)).reshape(16, 32, 64),
        "b2": raw["b_c2"].reshape(1, 64),
        "w3": jnp.transpose(raw["w_c3"], (2, 3, 1, 0)).reshape(9, 64, 64),
        "b3": raw["b_c3"].reshape(1, 64),
        "wf1": raw["w_f1"].T,                    # (conv_out_size, 64)
        "bf1": raw["b_f1"].reshape(1, 64),
        "wf2": raw["w_f2"].T,                    # (64, 1)
        "bf2": raw["b_f2"].reshape(1, 1),
    }
    return params, raw


# --------------------- pure-JAX reference (sanity check) ---------------------

def reference_forward(raw, x):
    hp = jax.lax.Precision.HIGHEST
    dn = ("NCHW", "OIHW", "NCHW")
    y = jax.lax.conv_general_dilated(x, raw["w_c1"], (4, 4), "VALID",
                                     dimension_numbers=dn, precision=hp)
    y = jax.nn.relu(y + raw["b_c1"][None, :, None, None])
    y = jax.lax.conv_general_dilated(y, raw["w_c2"], (2, 2), "VALID",
                                     dimension_numbers=dn, precision=hp)
    y = jax.nn.relu(y + raw["b_c2"][None, :, None, None])
    y = jax.lax.conv_general_dilated(y, raw["w_c3"], (1, 1), "VALID",
                                     dimension_numbers=dn, precision=hp)
    y = jax.nn.relu(y + raw["b_c3"][None, :, None, None])
    v = y.reshape(y.shape[0], -1)
    h = jax.nn.relu(jnp.dot(v, raw["w_f1"].T, precision=hp) + raw["b_f1"])
    logit = jnp.dot(h, raw["w_f2"].T, precision=hp) + raw["b_f2"]
    return jax.nn.sigmoid(logit)


# ----------------------------------- main ------------------------------------

if __name__ == "__main__":
    input_shape = (4, 36, 36)   # (C, H, W); 36 is the smallest spatial size
                                # the 8/4 -> 4/2 -> 3/1 conv stack admits.
    batch = 2

    key = jax.random.PRNGKey(0)
    pkey, xkey = jax.random.split(key)
    params, raw = init_policy_params(pkey, input_shape)
    x = jax.random.normal(xkey, (batch,) + input_shape, dtype=jnp.float32)

    fwd = jax.jit(policy_forward)
    out = jax.block_until_ready(fwd(params, x))

    assert out.shape == (batch, 1), out.shape
    assert bool(jnp.all((out >= 0.0) & (out <= 1.0)))

    ref = jax.block_until_ready(reference_forward(raw, x))
    np.testing.assert_allclose(np.asarray(out), np.asarray(ref),
                               atol=1e-4, rtol=1e-4)
    print("KERNEL_OK")
</pallas_src>

<mosaic_0001>
module attributes {stable_mosaic.version = 11 : i64} {
  func.func @_fused_policy_kernel(%arg0: i32, %arg1: memref<16x18x256xf32, #tpu.memory_space<vmem>>, %arg2: memref<256x32xf32, #tpu.memory_space<vmem>>, %arg3: memref<1x32xf32, #tpu.memory_space<vmem>>, %arg4: memref<16x32x64xf32, #tpu.memory_space<vmem>>, %arg5: memref<1x64xf32, #tpu.memory_space<vmem>>, %arg6: memref<9x64x64xf32, #tpu.memory_space<vmem>>, %arg7: memref<1x64xf32, #tpu.memory_space<vmem>>, %arg8: memref<64x64xf32, #tpu.memory_space<vmem>>, %arg9: memref<1x64xf32, #tpu.memory_space<vmem>>, %arg10: memref<64x1xf32, #tpu.memory_space<vmem>>, %arg11: memref<1x1xf32, #tpu.memory_space<vmem>>, %arg12: memref<2x1xf32, #tpu.memory_space<vmem>>) attributes {dimension_semantics = [#tpu.dimension_semantics<arbitrary>], iteration_bounds = array<i64: 1>, scalar_prefetch = 0 : i64, scratch_operands = 0 : i64, tpu.core_type = #tpu.core_type<tc>, window_params = [{pipeline_mode = #tpu.pipeline_mode<synchronous>, transform_indices = @transform_0, window_bounds = array<i64: 16, 18, 256>}, {pipeline_mode = #tpu.pipeline_mode<synchronous>, transform_indices = @transform_1, window_bounds = array<i64: 256, 32>}, {pipeline_mode = #tpu.pipeline_mode<synchronous>, transform_indices = @transform_2, window_bounds = array<i64: 1, 32>}, {pipeline_mode = #tpu.pipeline_mode<synchronous>, transform_indices = @transform_3, window_bounds = array<i64: 16, 32, 64>}, {pipeline_mode = #tpu.pipeline_mode<synchronous>, transform_indices = @transform_4, window_bounds = array<i64: 1, 64>}, {pipeline_mode = #tpu.pipeline_mode<synchronous>, transform_indices = @transform_5, window_bounds = array<i64: 9, 64, 64>}, {pipeline_mode = #tpu.pipeline_mode<synchronous>, transform_indices = @transform_6, window_bounds = array<i64: 1, 64>}, {pipeline_mode = #tpu.pipeline_mode<synchronous>, transform_indices = @transform_7, window_bounds = array<i64: 64, 64>}, {pipeline_mode = #tpu.pipeline_mode<synchronous>, transform_indices = @transform_8, window_bounds = array<i64: 1, 64>}, {pipeline_mode = #tpu.pipeline_mode<synchronous>, transform_indices = @transform_9, window_bounds = array<i64: 64, 1>}, {pipeline_mode = #tpu.pipeline_mode<synchronous>, transform_indices = @transform_10, window_bounds = array<i64: 1, 1>}, {pipeline_mode = #tpu.pipeline_mode<synchronous>, transform_indices = @transform_11, window_bounds = array<i64: 2, 1>}]} {
    %c0 = arith.constant 0 : index
    %c0_0 = arith.constant 0 : index
    %c0_1 = arith.constant 0 : index
    %0 = vector.load %arg1[%c0, %c0_0, %c0_1] : memref<16x18x256xf32, #tpu.memory_space<vmem>>, vector<1x18x256xf32>
    %1 = vector.shape_cast %0 : vector<1x18x256xf32> to vector<18x256xf32>
    %c0_2 = arith.constant 0 : index
    %c0_3 = arith.constant 0 : index
    %2 = vector.load %arg2[%c0_2, %c0_3] : memref<256x32xf32, #tpu.memory_space<vmem>>, vector<256x32xf32>
    %cst = arith.constant dense<0.000000e+00> : vector<18x32xf32>
    %3 = tpu.matmul %1, %2, %cst {dimension_numbers = #tpu.dot_dimension_numbers<[1], [0], [0], [1], [0, 0, 1, 1], [], []>} : vector<18x256xf32>, vector<256x32xf32>, vector<18x32xf32> -> vector<18x32xf32>
    %c0_4 = arith.constant 0 : index
    %c0_5 = arith.constant 0 : index
    %4 = vector.load %arg3[%c0_4, %c0_5] : memref<1x32xf32, #tpu.memory_space<vmem>>, vector<1x32xf32>
    %5 = vector.broadcast %4 : vector<1x32xf32> to vector<18x32xf32>
    %6 = arith.addf %3, %5 : vector<18x32xf32>
    %cst_6 = arith.constant 0.000000e+00 : f32
    %7 = vector.broadcast %cst_6 : f32 to vector<18x32xf32>
    %8 = arith.maximumf %6, %7 : vector<18x32xf32>
    %c0_7 = arith.constant 0 : index
    %c0_8 = arith.constant 0 : index
    %c0_9 = arith.constant 0 : index
    %9 = vector.load %arg4[%c0_7, %c0_8, %c0_9] : memref<16x32x64xf32, #tpu.memory_space<vmem>>, vector<1x32x64xf32>
    %10 = vector.shape_cast %9 : vector<1x32x64xf32> to vector<32x64xf32>
    %cst_10 = arith.constant dense<0.000000e+00> : vector<18x64xf32>
    %11 = tpu.matmul %8, %10, %cst_10 {dimension_numbers = #tpu.dot_dimension_numbers<[1], [0], [0], [1], [0, 0, 1, 1], [], []>} : vector<18x32xf32>, vector<32x64xf32>, vector<18x64xf32> -> vector<18x64xf32>
    %c1 = arith.constant 1 : index
    %c0_11 = arith.constant 0 : index
    %c0_12 = arith.constant 0 : index
    %12 = vector.load %arg1[%c1, %c0_11, %c0_12] : memref<16x18x256xf32, #tpu.memory_space<vmem>>, vector<1x18x256xf32>
    %13 = vector.shape_cast %12 : vector<1x18x256xf32> to vector<18x256xf32>
    %c0_13 = arith.constant 0 : index
    %c0_14 = arith.constant 0 : index
    %14 = vector.load %arg2[%c0_13, %c0_14] : memref<256x32xf32, #tpu.memory_space<vmem>>, vector<256x32xf32>
    %cst_15 = arith.constant dense<0.000000e+00> : vector<18x32xf32>
    %15 = tpu.matmul %13, %14, %cst_15 {dimension_numbers = #tpu.dot_dimension_numbers<[1], [0], [0], [1], [0, 0, 1, 1], [], []>} : vector<18x256xf32>, vector<256x32xf32>, vector<18x32xf32> -> vector<18x32xf32>
    %c0_16 = arith.constant 0 : index
    %c0_17 = arith.constant 0 : index
    %16 = vector.load %arg3[%c0_16, %c0_17] : memref<1x32xf32, #tpu.memory_space<vmem>>, vector<1x32xf32>
    %17 = vector.broadcast %16 : vector<1x32xf32> to vector<18x32xf32>
    %18 = arith.addf %15, %17 : vector<18x32xf32>
    %cst_18 = arith.constant 0.000000e+00 : f32
    %19 = vector.broadcast %cst_18 : f32 to vector<18x32xf32>
    %20 = arith.maximumf %18, %19 : vector<18x32xf32>
    %c1_19 = arith.constant 1 : index
    %c0_20 = arith.constant 0 : index
    %c0_21 = arith.constant 0 : index
    %21 = vector.load %arg4[%c1_19, %c0_20, %c0_21] : memref<16x32x64xf32, #tpu.memory_space<vmem>>, vector<1x32x64xf32>
    %22 = vector.shape_cast %21 : vector<1x32x64xf32> to vector<32x64xf32>
    %cst_22 = arith.constant dense<0.000000e+00> : vector<18x64xf32>
    %23 = tpu.matmul %20, %22, %cst_22 {dimension_numbers = #tpu.dot_dimension_numbers<[1], [0], [0], [1], [0, 0, 1, 1], [], []>} : vector<18x32xf32>, vector<32x64xf32>, vector<18x64xf32> -> vector<18x64xf32>
    %24 = arith.addf %11, %23 : vector<18x64xf32>
    %c2 = arith.constant 2 : index
    %c0_23 = arith.constant 0 : index
    %c0_24 = arith.constant 0 : index
    %25 = vector.load %arg1[%c2, %c0_23, %c0_24] : memref<16x18x256xf32, #tpu.memory_space<vmem>>, vector<1x18x256xf32>
    %26 = vector.shape_cast %25 : vector<1x18x256xf32> to vector<18x256xf32>
    %c0_25 = arith.constant 0 : index
    %c0_26 = arith.constant 0 : index
    %27 = vector.load %arg2[%c0_25, %c0_26] : memref<256x32xf32, #tpu.memory_space<vmem>>, vector<256x32xf32>
    %cst_27 = arith.constant dense<0.000000e+00> : vector<18x32xf32>
    %28 = tpu.matmul %26, %27, %cst_27 {dimension_numbers = #tpu.dot_dimension_numbers<[1], [0], [0], [1], [0, 0, 1, 1], [], []>} : vector<18x256xf32>, vector<256x32xf32>, vector<18x32xf32> -> vector<18x32xf32>
    %c0_28 = arith.constant 0 : index
    %c0_29 = arith.constant 0 : index
    %29 = vector.load %arg3[%c0_28, %c0_29] : memref<1x32xf32, #tpu.memory_space<vmem>>, vector<1x32xf32>
    %30 = vector.broadcast %29 : vector<1x32xf32> to vector<18x32xf32>
    %31 = arith.addf %28, %30 : vector<18x32xf32>
    %cst_30 = arith.constant 0.000000e+00 : f32
    %32 = vector.broadcast %cst_30 : f32 to vector<18x32xf32>
    %33 = arith.maximumf %31, %32 : vector<18x32xf32>
    %c2_31 = arith.constant 2 : index
    %c0_32 = arith.constant 0 : index
    %c0_33 = arith.constant 0 : index
    %34 = vector.load %arg4[%c2_31, %c0_32, %c0_33] : memref<16x32x64xf32, #tpu.memory_space<vmem>>, vector<1x32x64xf32>
    %35 = vector.shape_cast %34 : vector<1x32x64xf32> to vector<32x64xf32>
    %cst_34 = arith.constant dense<0.000000e+00> : vector<18x64xf32>
    %36 = tpu.matmul %33, %35, %cst_34 {dimension_numbers = #tpu.dot_dimension_numbers<[1], [0], [0], [1], [0, 0, 1, 1], [], []>} : vector<18x32xf32>, vector<32x64xf32>, vector<18x64xf32> -> vector<18x64xf32>
    %37 = arith.addf %24, %36 : vector<18x64xf32>
    %c3 = arith.constant 3 : index
    %c0_35 = arith.constant 0 : index
    %c0_36 = arith.constant 0 : index
    %38 = vector.load %arg1[%c3, %c0_35, %c0_36] : memref<16x18x256xf32, #tpu.memory_space<vmem>>, vector<1x18x256xf32>
    %39 = vector.shape_cast %38 : vector<1x18x256xf32> to vector<18x256xf32>
    %c0_37 = arith.constant 0 : index
    %c0_38 = arith.constant 0 : index
    %40 = vector.load %arg2[%c0_37, %c0_38] : memref<256x32xf32, #tpu.memory_space<vmem>>, vector<256x32xf32>
    %cst_39 = arith.constant dense<0.000000e+00> : vector<18x32xf32>
    %41 = tpu.matmul %39, %40, %cst_39 {dimension_numbers = #tpu.dot_dimension_numbers<[1], [0], [0], [1], [0, 0, 1, 1], [], []>} : vector<18x256xf32>, vector<256x32xf32>, vector<18x32xf32> -> vector<18x32xf32>
    %c0_40 = arith.constant 0 : index
    %c0_41 = arith.constant 0 : index
    %42 = vector.load %arg3[%c0_40, %c0_41] : memref<1x32xf32, #tpu.memory_space<vmem>>, vector<1x32xf32>
    %43 = vector.broadcast %42 : vector<1x32xf32> to vector<18x32xf32>
    %44 = arith.addf %41, %43 : vector<18x32xf32>
    %cst_42 = arith.constant 0.000000e+00 : f32
    %45 = vector.broadcast %cst_42 : f32 to vector<18x32xf32>
    %46 = arith.maximumf %44, %45 : vector<18x32xf32>
    %c3_43 = arith.constant 3 : index
    %c0_44 = arith.constant 0 : index
    %c0_45 = arith.constant 0 : index
    %47 = vector.load %arg4[%c3_43, %c0_44, %c0_45] : memref<16x32x64xf32, #tpu.memory_space<vmem>>, vector<1x32x64xf32>
    %48 = vector.shape_cast %47 : vector<1x32x64xf32> to vector<32x64xf32>
    %cst_46 = arith.constant dense<0.000000e+00> : vector<18x64xf32>
    %49 = tpu.matmul %46, %48, %cst_46 {dimension_numbers = #tpu.dot_dimension_numbers<[1], [0], [0], [1], [0, 0, 1, 1], [], []>} : vector<18x32xf32>, vector<32x64xf32>, vector<18x64xf32> -> vector<18x64xf32>
    %50 = arith.addf %37, %49 : vector<18x64xf32>
    %c4 = arith.constant 4 : index
    %c0_47 = arith.constant 0 : index
    %c0_48 = arith.constant 0 : index
    %51 = vector.load %arg1[%c4, %c0_47, %c0_48] : memref<16x18x256xf32, #tpu.memory_space<vmem>>, vector<1x18x256xf32>
    %52 = vector.shape_cast %51 : vector<1x18x256xf32> to vector<18x256xf32>
    %c0_49 = arith.constant 0 : index
    %c0_50 = arith.constant 0 : index
    %53 = vector.load %arg2[%c0_49, %c0_50] : memref<256x32xf32, #tpu.memory_space<vmem>>, vector<256x32xf32>
    %cst_51 = arith.constant dense<0.000000e+00> : vector<18x32xf32>
    %54 = tpu.matmul %52, %53, %cst_51 {dimension_numbers = #tpu.dot_dimension_numbers<[1], [0], [0], [1], [0, 0, 1, 1], [], []>} : vector<18x256xf32>, vector<256x32xf32>, vector<18x32xf32> -> vector<18x32xf32>
    %c0_52 = arith.constant 0 : index
    %c0_53 = arith.constant 0 : index
    %55 = vector.load %arg3[%c0_52, %c0_53] : memref<1x32xf32, #tpu.memory_space<vmem>>, vector<1x32xf32>
    %56 = vector.broadcast %55 : vector<1x32xf32> to vector<18x32xf32>
    %57 = arith.addf %54, %56 : vector<18x32xf32>
    %cst_54 = arith.constant 0.000000e+00 : f32
    %58 = vector.broadcast %cst_54 : f32 to vector<18x32xf32>
    %59 = arith.maximumf %57, %58 : vector<18x32xf32>
    %c4_55 = arith.constant 4 : index
    %c0_56 = arith.constant 0 : index
    %c0_57 = arith.constant 0 : index
    %60 = vector.load %arg4[%c4_55, %c0_56, %c0_57] : memref<16x32x64xf32, #tpu.memory_space<vmem>>, vector<1x32x64xf32>
    %61 = vector.shape_cast %60 : vector<1x32x64xf32> to vector<32x64xf32>
    %cst_58 = arith.constant dense<0.000000e+00> : vector<18x64xf32>
    %62 = tpu.matmul %59, %61, %cst_58 {dimension_numbers = #tpu.dot_dimension_numbers<[1], [0], [0], [1], [0, 0, 1, 1], [], []>} : vector<18x32xf32>, vector<32x64xf32>, vector<18x64xf32> -> vector<18x64xf32>
    %63 = arith.addf %50, %62 : vector<18x64xf32>
    %c5 = arith.constant 5 : index
    %c0_59 = arith.constant 0 : index
    %c0_60 = arith.constant 0 : index
    %64 = vector.load %arg1[%c5, %c0_59, %c0_60] : memref<16x18x256xf32, #tpu.memory_space<vmem>>, vector<1x18x256xf32>
    %65 = vector.shape_cast %64 : vector<1x18x256xf32> to vector<18x256xf32>
    %c0_61 = arith.constant 0 : index
    %c0_62 = arith.constant 0 : index
    %66 = vector.load %arg2[%c0_61, %c0_62] : memref<256x32xf32, #tpu.memory_space<vmem>>, vector<256x32xf32>
    %cst_63 = arith.constant dense<0.000000e+00> : vector<18x32xf32>
    %67 = tpu.matmul %65, %66, %cst_63 {dimension_numbers = #tpu.dot_dimension_numbers<[1], [0], [0], [1], [0, 0, 1, 1], [], []>} : vector<18x256xf32>, vector<256x32xf32>, vector<18x32xf32> -> vector<18x32xf32>
    %c0_64 = arith.constant 0 : index
    %c0_65 = arith.constant 0 : index
    %68 = vector.load %arg3[%c0_64, %c0_65] : memref<1x32xf32, #tpu.memory_space<vmem>>, vector<1x32xf32>
    %69 = vector.broadcast %68 : vector<1x32xf32> to vector<18x32xf32>
    %70 = arith.addf %67, %69 : vector<18x32xf32>
    %cst_66 = arith.constant 0.000000e+00 : f32
    %71 = vector.broadcast %cst_66 : f32 to vector<18x32xf32>
    %72 = arith.maximumf %70, %71 : vector<18x32xf32>
    %c5_67 = arith.constant 5 : index
    %c0_68 = arith.constant 0 : index
    %c0_69 = arith.constant 0 : index
    %73 = vector.load %arg4[%c5_67, %c0_68, %c0_69] : memref<16x32x64xf32, #tpu.memory_space<vmem>>, vector<1x32x64xf32>
    %74 = vector.shape_cast %73 : vector<1x32x64xf32> to vector<32x64xf32>
    %cst_70 = arith.constant dense<0.000000e+00> : vector<18x64xf32>
    %75 = tpu.matmul %72, %74, %cst_70 {dimension_numbers = #tpu.dot_dimension_numbers<[1], [0], [0], [1], [0, 0, 1, 1], [], []>} : vector<18x32xf32>, vector<32x64xf32>, vector<18x64xf32> -> vector<18x64xf32>
    %76 = arith.addf %63, %75 : vector<18x64xf32>
    %c6 = arith.constant 6 : index
    %c0_71 = arith.constant 0 : index
    %c0_72 = arith.constant 0 : index
    %77 = vector.load %arg1[%c6, %c0_71, %c0_72] : memref<16x18x256xf32, #tpu.memory_space<vmem>>, vector<1x18x256xf32>
    %78 = vector.shape_cast %77 : vector<1x18x256xf32> to vector<18x256xf32>
    %c0_73 = arith.constant 0 : index
    %c0_74 = arith.constant 0 : index
    %79 = vector.load %arg2[%c0_73, %c0_74] : memref<256x32xf32, #tpu.memory_space<vmem>>, vector<256x32xf32>
    %cst_75 = arith.constant dense<0.000000e+00> : vector<18x32xf32>
    %80 = tpu.matmul %78, %79, %cst_75 {dimension_numbers = #tpu.dot_dimension_numbers<[1], [0], [0], [1], [0, 0, 1, 1], [], []>} : vector<18x256xf32>, vector<256x32xf32>, vector<18x32xf32> -> vector<18x32xf32>
    %c0_76 = arith.constant 0 : index
    %c0_77 = arith.constant 0 : index
    %81 = vector.load %arg3[%c0_76, %c0_77] : memref<1x32xf32, #tpu.memory_space<vmem>>, vector<1x32xf32>
    %82 = vector.broadcast %81 : vector<1x32xf32> to vector<18x32xf32>
    %83 = arith.addf %80, %82 : vector<18x32xf32>
    %cst_78 = arith.constant 0.000000e+00 : f32
    %84 = vector.broadcast %cst_78 : f32 to vector<18x32xf32>
    %85 = arith.maximumf %83, %84 : vector<18x32xf32>
    %c6_79 = arith.constant 6 : index
    %c0_80 = arith.constant 0 : index
    %c0_81 = arith.constant 0 : index
    %86 = vector.load %arg4[%c6_79, %c0_80, %c0_81] : memref<16x32x64xf32, #tpu.memory_space<vmem>>, vector<1x32x64xf32>
    %87 = vector.shape_cast %86 : vector<1x32x64xf32> to vector<32x64xf32>
    %cst_82 = arith.constant dense<0.000000e+00> : vector<18x64xf32>
    %88 = tpu.matmul %85, %87, %cst_82 {dimension_numbers = #tpu.dot_dimension_numbers<[1], [0], [0], [1], [0, 0, 1, 1], [], []>} : vector<18x32xf32>, vector<32x64xf32>, vector<18x64xf32> -> vector<18x64xf32>
    %89 = arith.addf %76, %88 : vector<18x64xf32>
    %c7 = arith.constant 7 : index
    %c0_83 = arith.constant 0 : index
    %c0_84 = arith.constant 0 : index
    %90 = vector.load %arg1[%c7, %c0_83, %c0_84] : memref<16x18x256xf32, #tpu.memory_space<vmem>>, vector<1x18x256xf32>
    %91 = vector.shape_cast %90 : vector<1x18x256xf32> to vector<18x256xf32>
    %c0_85 = arith.constant 0 : index
    %c0_86 = arith.constant 0 : index
    %92 = vector.load %arg2[%c0_85, %c0_86] : memref<256x32xf32, #tpu.memory_space<vmem>>, vector<256x32xf32>
    %cst_87 = arith.constant dense<0.000000e+00> : vector<18x32xf32>
    %93 = tpu.matmul %91, %92, %cst_87 {dimension_numbers = #tpu.dot_dimension_numbers<[1], [0], [0], [1], [0, 0, 1, 1], [], []>} : vector<18x256xf32>, vector<256x32xf32>, vector<18x32xf32> -> vector<18x32xf32>
    %c0_88 = arith.constant 0 : index
    %c0_89 = arith.constant 0 : index
    %94 = vector.load %arg3[%c0_88, %c0_89] : memref<1x32xf32, #tpu.memory_space<vmem>>, vector<1x32xf32>
    %95 = vector.broadcast %94 : vector<1x32xf32> to vector<18x32xf32>
    %96 = arith.addf %93, %95 : vector<18x32xf32>
    %cst_90 = arith.constant 0.000000e+00 : f32
    %97 = vector.broadcast %cst_90 : f32 to vector<18x32xf32>
    %98 = arith.maximumf %96, %97 : vector<18x32xf32>
    %c7_91 = arith.constant 7 : index
    %c0_92 = arith.constant 0 : index
    %c0_93 = arith.constant 0 : index
    %99 = vector.load %arg4[%c7_91, %c0_92, %c0_93] : memref<16x32x64xf32, #tpu.memory_space<vmem>>, vector<1x32x64xf32>
    %100 = vector.shape_cast %99 : vector<1x32x64xf32> to vector<32x64xf32>
    %cst_94 = arith.constant dense<0.000000e+00> : vector<18x64xf32>
    %101 = tpu.matmul %98, %100, %cst_94 {dimension_numbers = #tpu.dot_dimension_numbers<[1], [0], [0], [1], [0, 0, 1, 1], [], []>} : vector<18x32xf32>, vector<32x64xf32>, vector<18x64xf32> -> vector<18x64xf32>
    %102 = arith.addf %89, %101 : vector<18x64xf32>
    %c8 = arith.constant 8 : index
    %c0_95 = arith.constant 0 : index
    %c0_96 = arith.constant 0 : index
    %103 = vector.load %arg1[%c8, %c0_95, %c0_96] : memref<16x18x256xf32, #tpu.memory_space<vmem>>, vector<1x18x256xf32>
    %104 = vector.shape_cast %103 : vector<1x18x256xf32> to vector<18x256xf32>
    %c0_97 = arith.constant 0 : index
    %c0_98 = arith.constant 0 : index
    %105 = vector.load %arg2[%c0_97, %c0_98] : memref<256x32xf32, #tpu.memory_space<vmem>>, vector<256x32xf32>
    %cst_99 = arith.constant dense<0.000000e+00> : vector<18x32xf32>
    %106 = tpu.matmul %104, %105, %cst_99 {dimension_numbers = #tpu.dot_dimension_numbers<[1], [0], [0], [1], [0, 0, 1, 1], [], []>} : vector<18x256xf32>, vector<256x32xf32>, vector<18x32xf32> -> vector<18x32xf32>
    %c0_100 = arith.constant 0 : index
    %c0_101 = arith.constant 0 : index
    %107 = vector.load %arg3[%c0_100, %c0_101] : memref<1x32xf32, #tpu.memory_space<vmem>>, vector<1x32xf32>
    %108 = vector.broadcast %107 : vector<1x32xf32> to vector<18x32xf32>
    %109 = arith.addf %106, %108 : vector<18x32xf32>
    %cst_102 = arith.constant 0.000000e+00 : f32
    %110 = vector.broadcast %cst_102 : f32 to vector<18x32xf32>
    %111 = arith.maximumf %109, %110 : vector<18x32xf32>
    %c8_103 = arith.constant 8 : index
    %c0_104 = arith.constant 0 : index
    %c0_105 = arith.constant 0 : index
    %112 = vector.load %arg4[%c8_103, %c0_104, %c0_105] : memref<16x32x64xf32, #tpu.memory_space<vmem>>, vector<1x32x64xf32>
    %113 = vector.shape_cast %112 : vector<1x32x64xf32> to vector<32x64xf32>
    %cst_106 = arith.constant dense<0.000000e+00> : vector<18x64xf32>
    %114 = tpu.matmul %111, %113, %cst_106 {dimension_numbers = #tpu.dot_dimension_numbers<[1], [0], [0], [1], [0, 0, 1, 1], [], []>} : vector<18x32xf32>, vector<32x64xf32>, vector<18x64xf32> -> vector<18x64xf32>
    %115 = arith.addf %102, %114 : vector<18x64xf32>
    %c9 = arith.constant 9 : index
    %c0_107 = arith.constant 0 : index
    %c0_108 = arith.constant 0 : index
    %116 = vector.load %arg1[%c9, %c0_107, %c0_108] : memref<16x18x256xf32, #tpu.memory_space<vmem>>, vector<1x18x256xf32>
    %117 = vector.shape_cast %116 : vector<1x18x256xf32> to vector<18x256xf32>
    %c0_109 = arith.constant 0 : index
    %c0_110 = arith.constant 0 : index
    %118 = vector.load %arg2[%c0_109, %c0_110] : memref<256x32xf32, #tpu.memory_space<vmem>>, vector<256x32xf32>
    %cst_111 = arith.constant dense<0.000000e+00> : vector<18x32xf32>
    %119 = tpu.matmul %117, %118, %cst_111 {dimension_numbers = #tpu.dot_dimension_numbers<[1], [0], [0], [1], [0, 0, 1, 1], [], []>} : vector<18x256xf32>, vector<256x32xf32>, vector<18x32xf32> -> vector<18x32xf32>
    %c0_112 = arith.constant 0 : index
    %c0_113 = arith.constant 0 : index
    %120 = vector.load %arg3[%c0_112, %c0_113] : memref<1x32xf32, #tpu.memory_space<vmem>>, vector<1x32xf32>
    %121 = vector.broadcast %120 : vector<1x32xf32> to vector<18x32xf32>
    %122 = arith.addf %119, %121 : vector<18x32xf32>
    %cst_114 = arith.constant 0.000000e+00 : f32
    %123 = vector.broadcast %cst_114 : f32 to vector<18x32xf32>
    %124 = arith.maximumf %122, %123 : vector<18x32xf32>
    %c9_115 = arith.constant 9 : index
    %c0_116 = arith.constant 0 : index
    %c0_117 = arith.constant 0 : index
    %125 = vector.load %arg4[%c9_115, %c0_116, %c0_117] : memref<16x32x64xf32, #tpu.memory_space<vmem>>, vector<1x32x64xf32>
    %126 = vector.shape_cast %125 : vector<1x32x64xf32> to vector<32x64xf32>
    %cst_118 = arith.constant dense<0.000000e+00> : vector<18x64xf32>
    %127 = tpu.matmul %124, %126, %cst_118 {dimension_numbers = #tpu.dot_dimension_numbers<[1], [0], [0], [1], [0, 0, 1, 1], [], []>} : vector<18x32xf32>, vector<32x64xf32>, vector<18x64xf32> -> vector<18x64xf32>
    %128 = arith.addf %115, %127 : vector<18x64xf32>
    %c10 = arith.constant 10 : index
    %c0_119 = arith.constant 0 : index
    %c0_120 = arith.constant 0 : index
    %129 = vector.load %arg1[%c10, %c0_119, %c0_120] : memref<16x18x256xf32, #tpu.memory_space<vmem>>, vector<1x18x256xf32>
    %130 = vector.shape_cast %129 : vector<1x18x256xf32> to vector<18x256xf32>
    %c0_121 = arith.constant 0 : index
    %c0_122 = arith.constant 0 : index
    %131 = vector.load %arg2[%c0_121, %c0_122] : memref<256x32xf32, #tpu.memory_space<vmem>>, vector<256x32xf32>
    %cst_123 = arith.constant dense<0.000000e+00> : vector<18x32xf32>
    %132 = tpu.matmul %130, %131, %cst_123 {dimension_numbers = #tpu.dot_dimension_numbers<[1], [0], [0], [1], [0, 0, 1, 1], [], []>} : vector<18x256xf32>, vector<256x32xf32>, vector<18x32xf32> -> vector<18x32xf32>
    %c0_124 = arith.constant 0 : index
    %c0_125 = arith.constant 0 : index
    %133 = vector.load %arg3[%c0_124, %c0_125] : memref<1x32xf32, #tpu.memory_space<vmem>>, vector<1x32xf32>
    %134 = vector.broadcast %133 : vector<1x32xf32> to vector<18x32xf32>
    %135 = arith.addf %132, %134 : vector<18x32xf32>
    %cst_126 = arith.constant 0.000000e+00 : f32
    %136 = vector.broadcast %cst_126 : f32 to vector<18x32xf32>
    %137 = arith.maximumf %135, %136 : vector<18x32xf32>
    %c10_127 = arith.constant 10 : index
    %c0_128 = arith.constant 0 : index
    %c0_129 = arith.constant 0 : index
    %138 = vector.load %arg4[%c10_127, %c0_128, %c0_129] : memref<16x32x64xf32, #tpu.memory_space<vmem>>, vector<1x32x64xf32>
    %139 = vector.shape_cast %138 : vector<1x32x64xf32> to vector<32x64xf32>
    %cst_130 = arith.constant dense<0.000000e+00> : vector<18x64xf32>
    %140 = tpu.matmul %137, %139, %cst_130 {dimension_numbers = #tpu.dot_dimension_numbers<[1], [0], [0], [1], [0, 0, 1, 1], [], []>} : vector<18x32xf32>, vector<32x64xf32>, vector<18x64xf32> -> vector<18x64xf32>
    %141 = arith.addf %128, %140 : vector<18x64xf32>
    %c11 = arith.constant 11 : index
    %c0_131 = arith.constant 0 : index
    %c0_132 = arith.constant 0 : index
    %142 = vector.load %arg1[%c11, %c0_131, %c0_132] : memref<16x18x256xf32, #tpu.memory_space<vmem>>, vector<1x18x256xf32>
    %143 = vector.shape_cast %142 : vector<1x18x256xf32> to vector<18x256xf32>
    %c0_133 = arith.constant 0 : index
    %c0_134 = arith.constant 0 : index
    %144 = vector.load %arg2[%c0_133, %c0_134] : memref<256x32xf32, #tpu.memory_space<vmem>>, vector<256x32xf32>
    %cst_135 = arith.constant dense<0.000000e+00> : vector<18x32xf32>
    %145 = tpu.matmul %143, %144, %cst_135 {dimension_numbers = #tpu.dot_dimension_numbers<[1], [0], [0], [1], [0, 0, 1, 1], [], []>} : vector<18x256xf32>, vector<256x32xf32>, vector<18x32xf32> -> vector<18x32xf32>
    %c0_136 = arith.constant 0 : index
    %c0_137 = arith.constant 0 : index
    %146 = vector.load %arg3[%c0_136, %c0_137] : memref<1x32xf32, #tpu.memory_space<vmem>>, vector<1x32xf32>
    %147 = vector.broadcast %146 : vector<1x32xf32> to vector<18x32xf32>
    %148 = arith.addf %145, %147 : vector<18x32xf32>
    %cst_138 = arith.constant 0.000000e+00 : f32
    %149 = vector.broadcast %cst_138 : f32 to vector<18x32xf32>
    %150 = arith.maximumf %148, %149 : vector<18x32xf32>
    %c11_139 = arith.constant 11 : index
    %c0_140 = arith.constant 0 : index
    %c0_141 = arith.constant 0 : index
    %151 = vector.load %arg4[%c11_139, %c0_140, %c0_141] : memref<16x32x64xf32, #tpu.memory_space<vmem>>, vector<1x32x64xf32>
    %152 = vector.shape_cast %151 : vector<1x32x64xf32> to vector<32x64xf32>
    %cst_142 = arith.constant dense<0.000000e+00> : vector<18x64xf32>
    %153 = tpu.matmul %150, %152, %cst_142 {dimension_numbers = #tpu.dot_dimension_numbers<[1], [0], [0], [1], [0, 0, 1, 1], [], []>} : vector<18x32xf32>, vector<32x64xf32>, vector<18x64xf32> -> vector<18x64xf32>
    %154 = arith.addf %141, %153 : vector<18x64xf32>
    %c12 = arith.constant 12 : index
    %c0_143 = arith.constant 0 : index
    %c0_144 = arith.constant 0 : index
    %155 = vector.load %arg1[%c12, %c0_143, %c0_144] : memref<16x18x256xf32, #tpu.memory_space<vmem>>, vector<1x18x256xf32>
    %156 = vector.shape_cast %155 : vector<1x18x256xf32> to vector<18x256xf32>
    %c0_145 = arith.constant 0 : index
    %c0_146 = arith.constant 0 : index
    %157 = vector.load %arg2[%c0_145, %c0_146] : memref<256x32xf32, #tpu.memory_space<vmem>>, vector<256x32xf32>
    %cst_147 = arith.constant dense<0.000000e+00> : vector<18x32xf32>
    %158 = tpu.matmul %156, %157, %cst_147 {dimension_numbers = #tpu.dot_dimension_numbers<[1], [0], [0], [1], [0, 0, 1, 1], [], []>} : vector<18x256xf32>, vector<256x32xf32>, vector<18x32xf32> -> vector<18x32xf32>
    %c0_148 = arith.constant 0 : index
    %c0_149 = arith.constant 0 : index
    %159 = vector.load %arg3[%c0_148, %c0_149] : memref<1x32xf32, #tpu.memory_space<vmem>>, vector<1x32xf32>
    %160 = vector.broadcast %159 : vector<1x32xf32> to vector<18x32xf32>
    %161 = arith.addf %158, %160 : vector<18x32xf32>
    %cst_150 = arith.constant 0.000000e+00 : f32
    %162 = vector.broadcast %cst_150 : f32 to vector<18x32xf32>
    %163 = arith.maximumf %161, %162 : vector<18x32xf32>
    %c12_151 = arith.constant 12 : index
    %c0_152 = arith.constant 0 : index
    %c0_153 = arith.constant 0 : index
    %164 = vector.load %arg4[%c12_151, %c0_152, %c0_153] : memref<16x32x64xf32, #tpu.memory_space<vmem>>, vector<1x32x64xf32>
    %165 = vector.shape_cast %164 : vector<1x32x64xf32> to vector<32x64xf32>
    %cst_154 = arith.constant dense<0.000000e+00> : vector<18x64xf32>
    %166 = tpu.matmul %163, %165, %cst_154 {dimension_numbers = #tpu.dot_dimension_numbers<[1], [0], [0], [1], [0, 0, 1, 1], [], []>} : vector<18x32xf32>, vector<32x64xf32>, vector<18x64xf32> -> vector<18x64xf32>
    %167 = arith.addf %154, %166 : vector<18x64xf32>
    %c13 = arith.constant 13 : index
    %c0_155 = arith.constant 0 : index
    %c0_156 = arith.constant 0 : index
    %168 = vector.load %arg1[%c13, %c0_155, %c0_156] : memref<16x18x256xf32, #tpu.memory_space<vmem>>, vector<1x18x256xf32>
    %169 = vector.shape_cast %168 : vector<1x18x256xf32> to vector<18x256xf32>
    %c0_157 = arith.constant 0 : index
    %c0_158 = arith.constant 0 : index
    %170 = vector.load %arg2[%c0_157, %c0_158] : memref<256x32xf32, #tpu.memory_space<vmem>>, vector<256x32xf32>
    %cst_159 = arith.constant dense<0.000000e+00> : vector<18x32xf32>
    %171 = tpu.matmul %169, %170, %cst_159 {dimension_numbers = #tpu.dot_dimension_numbers<[1], [0], [0], [1], [0, 0, 1, 1], [], []>} : vector<18x256xf32>, vector<256x32xf32>, vector<18x32xf32> -> vector<18x32xf32>
    %c0_160 = arith.constant 0 : index
    %c0_161 = arith.constant 0 : index
    %172 = vector.load %arg3[%c0_160, %c0_161] : memref<1x32xf32, #tpu.memory_space<vmem>>, vector<1x32xf32>
    %173 = vector.broadcast %172 : vector<1x32xf32> to vector<18x32xf32>
    %174 = arith.addf %171, %173 : vector<18x32xf32>
    %cst_162 = arith.constant 0.000000e+00 : f32
    %175 = vector.broadcast %cst_162 : f32 to vector<18x32xf32>
    %176 = arith.maximumf %174, %175 : vector<18x32xf32>
    %c13_163 = arith.constant 13 : index
    %c0_164 = arith.constant 0 : index
    %c0_165 = arith.constant 0 : index
    %177 = vector.load %arg4[%c13_163, %c0_164, %c0_165] : memref<16x32x64xf32, #tpu.memory_space<vmem>>, vector<1x32x64xf32>
    %178 = vector.shape_cast %177 : vector<1x32x64xf32> to vector<32x64xf32>
    %cst_166 = arith.constant dense<0.000000e+00> : vector<18x64xf32>
    %179 = tpu.matmul %176, %178, %cst_166 {dimension_numbers = #tpu.dot_dimension_numbers<[1], [0], [0], [1], [0, 0, 1, 1], [], []>} : vector<18x32xf32>, vector<32x64xf32>, vector<18x64xf32> -> vector<18x64xf32>
    %180 = arith.addf %167, %179 : vector<18x64xf32>
    %c14 = arith.constant 14 : index
    %c0_167 = arith.constant 0 : index
    %c0_168 = arith.constant 0 : index
    %181 = vector.load %arg1[%c14, %c0_167, %c0_168] : memref<16x18x256xf32, #tpu.memory_space<vmem>>, vector<1x18x256xf32>
    %182 = vector.shape_cast %181 : vector<1x18x256xf32> to vector<18x256xf32>
    %c0_169 = arith.constant 0 : index
    %c0_170 = arith.constant 0 : index
    %183 = vector.load %arg2[%c0_169, %c0_170] : memref<256x32xf32, #tpu.memory_space<vmem>>, vector<256x32xf32>
    %cst_171 = arith.constant dense<0.000000e+00> : vector<18x32xf32>
    %184 = tpu.matmul %182, %183, %cst_171 {dimension_numbers = #tpu.dot_dimension_numbers<[1], [0], [0], [1], [0, 0, 1, 1], [], []>} : vector<18x256xf32>, vector<256x32xf32>, vector<18x32xf32> -> vector<18x32xf32>
    %c0_172 = arith.constant 0 : index
    %c0_173 = arith.constant 0 : index
    %185 = vector.load %arg3[%c0_172, %c0_173] : memref<1x32xf32, #tpu.memory_space<vmem>>, vector<1x32xf32>
    %186 = vector.broadcast %185 : vector<1x32xf32> to vector<18x32xf32>
    %187 = arith.addf %184, %186 : vector<18x32xf32>
    %cst_174 = arith.constant 0.000000e+00 : f32
    %188 = vector.broadcast %cst_174 : f32 to vector<18x32xf32>
    %189 = arith.maximumf %187, %188 : vector<18x32xf32>
    %c14_175 = arith.constant 14 : index
    %c0_176 = arith.constant 0 : index
    %c0_177 = arith.constant 0 : index
    %190 = vector.load %arg4[%c14_175, %c0_176, %c0_177] : memref<16x32x64xf32, #tpu.memory_space<vmem>>, vector<1x32x64xf32>
    %191 = vector.shape_cast %190 : vector<1x32x64xf32> to vector<32x64xf32>
    %cst_178 = arith.constant dense<0.000000e+00> : vector<18x64xf32>
    %192 = tpu.matmul %189, %191, %cst_178 {dimension_numbers = #tpu.dot_dimension_numbers<[1], [0], [0], [1], [0, 0, 1, 1], [], []>} : vector<18x32xf32>, vector<32x64xf32>, vector<18x64xf32> -> vector<18x64xf32>
    %193 = arith.addf %180, %192 : vector<18x64xf32>
    %c15 = arith.constant 15 : index
    %c0_179 = arith.constant 0 : index
    %c0_180 = arith.constant 0 : index
    %194 = vector.load %arg1[%c15, %c0_179, %c0_180] : memref<16x18x256xf32, #tpu.memory_space<vmem>>, vector<1x18x256xf32>
    %195 = vector.shape_cast %194 : vector<1x18x256xf32> to vector<18x256xf32>
    %c0_181 = arith.constant 0 : index
    %c0_182 = arith.constant 0 : index
    %196 = vector.load %arg2[%c0_181, %c0_182] : memref<256x32xf32, #tpu.memory_space<vmem>>, vector<256x32xf32>
    %cst_183 = arith.constant dense<0.000000e+00> : vector<18x32xf32>
    %197 = tpu.matmul %195, %196, %cst_183 {dimension_numbers = #tpu.dot_dimension_numbers<[1], [0], [0], [1], [0, 0, 1, 1], [], []>} : vector<18x256xf32>, vector<256x32xf32>, vector<18x32xf32> -> vector<18x32xf32>
    %c0_184 = arith.constant 0 : index
    %c0_185 = arith.constant 0 : index
    %198 = vector.load %arg3[%c0_184, %c0_185] : memref<1x32xf32, #tpu.memory_space<vmem>>, vector<1x32xf32>
    %199 = vector.broadcast %198 : vector<1x32xf32> to vector<18x32xf32>
    %200 = arith.addf %197, %199 : vector<18x32xf32>
    %cst_186 = arith.constant 0.000000e+00 : f32
    %201 = vector.broadcast %cst_186 : f32 to vector<18x32xf32>
    %202 = arith.maximumf %200, %201 : vector<18x32xf32>
    %c15_187 = arith.constant 15 : index
    %c0_188 = arith.constant 0 : index
    %c0_189 = arith.constant 0 : index
    %203 = vector.load %arg4[%c15_187, %c0_188, %c0_189] : memref<16x32x64xf32, #tpu.memory_space<vmem>>, vector<1x32x64xf32>
    %204 = vector.shape_cast %203 : vector<1x32x64xf32> to vector<32x64xf32>
    %cst_190 = arith.constant dense<0.000000e+00> : vector<18x64xf32>
    %205 = tpu.matmul %202, %204, %cst_190 {dimension_numbers = #tpu.dot_dimension_numbers<[1], [0], [0], [1], [0, 0, 1, 1], [], []>} : vector<18x32xf32>, vector<32x64xf32>, vector<18x64xf32> -> vector<18x64xf32>
    %206 = arith.addf %193, %205 : vector<18x64xf32>
    %c0_191 = arith.constant 0 : index
    %c0_192 = arith.constant 0 : index
    %207 = vector.load %arg5[%c0_191, %c0_192] : memref<1x64xf32, #tpu.memory_space<vmem>>, vector<1x64xf32>
    %208 = vector.broadcast %207 : vector<1x64xf32> to vector<18x64xf32>
    %209 = arith.addf %206, %208 : vector<18x64xf32>
    %cst_193 = arith.constant 0.000000e+00 : f32
    %210 = vector.broadcast %cst_193 : f32 to vector<18x64xf32>
    %211 = arith.maximumf %209, %210 : vector<18x64xf32>
    %212 = vector.extract_strided_slice %211 {offsets = [0, 0], sizes = [2, 64], strides = [1, 1]} : vector<18x64xf32> to vector<2x64xf32>
    %c0_194 = arith.constant 0 : index
    %c0_195 = arith.constant 0 : index
    %c0_196 = arith.constant 0 : index
    %213 = vector.load %arg6[%c0_194, %c0_195, %c0_196] : memref<9x64x64xf32, #tpu.memory_space<vmem>>, vector<1x64x64xf32>
    %214 = vector.shape_cast %213 : vector<1x64x64xf32> to vector<64x64xf32>
    %cst_197 = arith.constant dense<0.000000e+00> : vector<2x64xf32>
    %215 = tpu.matmul %212, %214, %cst_197 {dimension_numbers = #tpu.dot_dimension_numbers<[1], [0], [0], [1], [0, 0, 1, 1], [], []>} : vector<2x64xf32>, vector<64x64xf32>, vector<2x64xf32> -> vector<2x64xf32>
    %216 = vector.extract_strided_slice %211 {offsets = [2, 0], sizes = [2, 64], strides = [1, 1]} : vector<18x64xf32> to vector<2x64xf32>
    %c1_198 = arith.constant 1 : index
    %c0_199 = arith.constant 0 : index
    %c0_200 = arith.constant 0 : index
    %217 = vector.load %arg6[%c1_198, %c0_199, %c0_200] : memref<9x64x64xf32, #tpu.memory_space<vmem>>, vector<1x64x64xf32>
    %218 = vector.shape_cast %217 : vector<1x64x64xf32> to vector<64x64xf32>
    %cst_201 = arith.constant dense<0.000000e+00> : vector<2x64xf32>
    %219 = tpu.matmul %216, %218, %cst_201 {dimension_numbers = #tpu.dot_dimension_numbers<[1], [0], [0], [1], [0, 0, 1, 1], [], []>} : vector<2x64xf32>, vector<64x64xf32>, vector<2x64xf32> -> vector<2x64xf32>
    %220 = arith.addf %215, %219 : vector<2x64xf32>
    %221 = vector.extract_strided_slice %211 {offsets = [4, 0], sizes = [2, 64], strides = [1, 1]} : vector<18x64xf32> to vector<2x64xf32>
    %c2_202 = arith.constant 2 : index
    %c0_203 = arith.constant 0 : index
    %c0_204 = arith.constant 0 : index
    %222 = vector.load %arg6[%c2_202, %c0_203, %c0_204] : memref<9x64x64xf32, #tpu.memory_space<vmem>>, vector<1x64x64xf32>
    %223 = vector.shape_cast %222 : vector<1x64x64xf32> to vector<64x64xf32>
    %cst_205 = arith.constant dense<0.000000e+00> : vector<2x64xf32>
    %224 = tpu.matmul %221, %223, %cst_205 {dimension_numbers = #tpu.dot_dimension_numbers<[1], [0], [0], [1], [0, 0, 1, 1], [], []>} : vector<2x64xf32>, vector<64x64xf32>, vector<2x64xf32> -> vector<2x64xf32>
    %225 = arith.addf %220, %224 : vector<2x64xf32>
    %226 = vector.extract_strided_slice %211 {offsets = [6, 0], sizes = [2, 64], strides = [1, 1]} : vector<18x64xf32> to vector<2x64xf32>
    %c3_206 = arith.constant 3 : index
    %c0_207 = arith.constant 0 : index
    %c0_208 = arith.constant 0 : index
    %227 = vector.load %arg6[%c3_206, %c0_207, %c0_208] : memref<9x64x64xf32, #tpu.memory_space<vmem>>, vector<1x64x64xf32>
    %228 = vector.shape_cast %227 : vector<1x64x64xf32> to vector<64x64xf32>
    %cst_209 = arith.constant dense<0.000000e+00> : vector<2x64xf32>
    %229 = tpu.matmul %226, %228, %cst_209 {dimension_numbers = #tpu.dot_dimension_numbers<[1], [0], [0], [1], [0, 0, 1, 1], [], []>} : vector<2x64xf32>, vector<64x64xf32>, vector<2x64xf32> -> vector<2x64xf32>
    %230 = arith.addf %225, %229 : vector<2x64xf32>
    %231 = vector.extract_strided_slice %211 {offsets = [8, 0], sizes = [2, 64], strides = [1, 1]} : vector<18x64xf32> to vector<2x64xf32>
    %c4_210 = arith.constant 4 : index
    %c0_211 = arith.constant 0 : index
    %c0_212 = arith.constant 0 : index
    %232 = vector.load %arg6[%c4_210, %c0_211, %c0_212] : memref<9x64x64xf32, #tpu.memory_space<vmem>>, vector<1x64x64xf32>
    %233 = vector.shape_cast %232 : vector<1x64x64xf32> to vector<64x64xf32>
    %cst_213 = arith.constant dense<0.000000e+00> : vector<2x64xf32>
    %234 = tpu.matmul %231, %233, %cst_213 {dimension_numbers = #tpu.dot_dimension_numbers<[1], [0], [0], [1], [0, 0, 1, 1], [], []>} : vector<2x64xf32>, vector<64x64xf32>, vector<2x64xf32> -> vector<2x64xf32>
    %235 = arith.addf %230, %234 : vector<2x64xf32>
    %236 = vector.extract_strided_slice %211 {offsets = [10, 0], sizes = [2, 64], strides = [1, 1]} : vector<18x64xf32> to vector<2x64xf32>
    %c5_214 = arith.constant 5 : index
    %c0_215 = arith.constant 0 : index
    %c0_216 = arith.constant 0 : index
    %237 = vector.load %arg6[%c5_214, %c0_215, %c0_216] : memref<9x64x64xf32, #tpu.memory_space<vmem>>, vector<1x64x64xf32>
    %238 = vector.shape_cast %237 : vector<1x64x64xf32> to vector<64x64xf32>
    %cst_217 = arith.constant dense<0.000000e+00> : vector<2x64xf32>
    %239 = tpu.matmul %236, %238, %cst_217 {dimension_numbers = #tpu.dot_dimension_numbers<[1], [0], [0], [1], [0, 0, 1, 1], [], []>} : vector<2x64xf32>, vector<64x64xf32>, vector<2x64xf32> -> vector<2x64xf32>
    %240 = arith.addf %235, %239 : vector<2x64xf32>
    %241 = vector.extract_strided_slice %211 {offsets = [12, 0], sizes = [2, 64], strides = [1, 1]} : vector<18x64xf32> to vector<2x64xf32>
    %c6_218 = arith.constant 6 : index
    %c0_219 = arith.constant 0 : index
    %c0_220 = arith.constant 0 : index
    %242 = vector.load %arg6[%c6_218, %c0_219, %c0_220] : memref<9x64x64xf32, #tpu.memory_space<vmem>>, vector<1x64x64xf32>
    %243 = vector.shape_cast %242 : vector<1x64x64xf32> to vector<64x64xf32>
    %cst_221 = arith.constant dense<0.000000e+00> : vector<2x64xf32>
    %244 = tpu.matmul %241, %243, %cst_221 {dimension_numbers = #tpu.dot_dimension_numbers<[1], [0], [0], [1], [0, 0, 1, 1], [], []>} : vector<2x64xf32>, vector<64x64xf32>, vector<2x64xf32> -> vector<2x64xf32>
    %245 = arith.addf %240, %244 : vector<2x64xf32>
    %246 = vector.extract_strided_slice %211 {offsets = [14, 0], sizes = [2, 64], strides = [1, 1]} : vector<18x64xf32> to vector<2x64xf32>
    %c7_222 = arith.constant 7 : index
    %c0_223 = arith.constant 0 : index
    %c0_224 = arith.constant 0 : index
    %247 = vector.load %arg6[%c7_222, %c0_223, %c0_224] : memref<9x64x64xf32, #tpu.memory_space<vmem>>, vector<1x64x64xf32>
    %248 = vector.shape_cast %247 : vector<1x64x64xf32> to vector<64x64xf32>
    %cst_225 = arith.constant dense<0.000000e+00> : vector<2x64xf32>
    %249 = tpu.matmul %246, %248, %cst_225 {dimension_numbers = #tpu.dot_dimension_numbers<[1], [0], [0], [1], [0, 0, 1, 1], [], []>} : vector<2x64xf32>, vector<64x64xf32>, vector<2x64xf32> -> vector<2x64xf32>
    %250 = arith.addf %245, %249 : vector<2x64xf32>
    %251 = vector.extract_strided_slice %211 {offsets = [16, 0], sizes = [2, 64], strides = [1, 1]} : vector<18x64xf32> to vector<2x64xf32>
    %c8_226 = arith.constant 8 : index
    %c0_227 = arith.constant 0 : index
    %c0_228 = arith.constant 0 : index
    %252 = vector.load %arg6[%c8_226, %c0_227, %c0_228] : memref<9x64x64xf32, #tpu.memory_space<vmem>>, vector<1x64x64xf32>
    %253 = vector.shape_cast %252 : vector<1x64x64xf32> to vector<64x64xf32>
    %cst_229 = arith.constant dense<0.000000e+00> : vector<2x64xf32>
    %254 = tpu.matmul %251, %253, %cst_229 {dimension_numbers = #tpu.dot_dimension_numbers<[1], [0], [0], [1], [0, 0, 1, 1], [], []>} : vector<2x64xf32>, vector<64x64xf32>, vector<2x64xf32> -> vector<2x64xf32>
    %255 = arith.addf %250, %254 : vector<2x64xf32>
    %c0_230 = arith.constant 0 : index
    %c0_231 = arith.constant 0 : index
    %256 = vector.load %arg7[%c0_230, %c0_231] : memref<1x64xf32, #tpu.memory_space<vmem>>, vector<1x64xf32>
    %257 = vector.broadcast %256 : vector<1x64xf32> to vector<2x64xf32>
    %258 = arith.addf %255, %257 : vector<2x64xf32>
    %cst_232 = arith.constant 0.000000e+00 : f32
    %259 = vector.broadcast %cst_232 : f32 to vector<2x64xf32>
    %260 = arith.maximumf %258, %259 : vector<2x64xf32>
    %c0_233 = arith.constant 0 : index
    %c0_234 = arith.constant 0 : index
    %261 = vector.load %arg8[%c0_233, %c0_234] : memref<64x64xf32, #tpu.memory_space<vmem>>, vector<64x64xf32>
    %cst_235 = arith.constant dense<0.000000e+00> : vector<2x64xf32>
    %262 = tpu.matmul %260, %261, %cst_235 {dimension_numbers = #tpu.dot_dimension_numbers<[1], [0], [0], [1], [0, 0, 1, 1], [], []>} : vector<2x64xf32>, vector<64x64xf32>, vector<2x64xf32> -> vector<2x64xf32>
    %c0_236 = arith.constant 0 : index
    %c0_237 = arith.constant 0 : index
    %263 = vector.load %arg9[%c0_236, %c0_237] : memref<1x64xf32, #tpu.memory_space<vmem>>, vector<1x64xf32>
    %264 = vector.broadcast %263 : vector<1x64xf32> to vector<2x64xf32>
    %265 = arith.addf %262, %264 : vector<2x64xf32>
    %cst_238 = arith.constant 0.000000e+00 : f32
    %266 = vector.broadcast %cst_238 : f32 to vector<2x64xf32>
    %267 = arith.maximumf %265, %266 : vector<2x64xf32>
    %c0_239 = arith.constant 0 : index
    %c0_240 = arith.constant 0 : index
    %268 = vector.load %arg10[%c0_239, %c0_240] : memref<64x1xf32, #tpu.memory_space<vmem>>, vector<64x1xf32>
    %cst_241 = arith.constant dense<0.000000e+00> : vector<2x1xf32>
    %269 = tpu.matmul %267, %268, %cst_241 {dimension_numbers = #tpu.dot_dimension_numbers<[1], [0], [0], [1], [0, 0, 1, 1], [], []>} : vector<2x64xf32>, vector<64x1xf32>, vector<2x1xf32> -> vector<2x1xf32>
    %c0_242 = arith.constant 0 : index
    %c0_243 = arith.constant 0 : index
    %270 = vector.load %arg11[%c0_242, %c0_243] : memref<1x1xf32, #tpu.memory_space<vmem>>, vector<1x1xf32>
    %271 = vector.broadcast %270 : vector<1x1xf32> to vector<2x1xf32>
    %272 = arith.addf %269, %271 : vector<2x1xf32>
    %273 = arith.negf %272 : vector<2x1xf32>
    %274 = math.exp %273 : vector<2x1xf32>
    %cst_244 = arith.constant 1.000000e+00 : f32
    %275 = vector.broadcast %cst_244 : f32 to vector<2x1xf32>
    %276 = arith.addf %275, %274 : vector<2x1xf32>
    %277 = arith.divf %275, %276 : vector<2x1xf32>
    %c0_245 = arith.constant 0 : index
    %c0_246 = arith.constant 0 : index
    %278 = vector.load %arg12[%c0_245, %c0_246] : memref<2x1xf32, #tpu.memory_space<vmem>>, vector<2x1xf32>
    tpu.vector_store %arg12[%c0_245, %c0_246], %277 {strides = array<i32>} : memref<2x1xf32, #tpu.memory_space<vmem>>, vector<2x1xf32>,
    return
  }
  func.func @transform_0(%arg0: i32) -> (i32, i32, i32) {
    %c0_i32 = arith.constant 0 : i32
    %c0_i32_0 = arith.constant 0 : i32
    %c0_i32_1 = arith.constant 0 : i32
    %c0_i32_2 = arith.constant 0 : i32
    return %c0_i32, %c0_i32_0, %c0_i32_1 : i32, i32, i32
  }
  func.func @transform_1(%arg0: i32) -> (i32, i32) {
    %c0_i32 = arith.constant 0 : i32
    %c0_i32_0 = arith.constant 0 : i32
    %c0_i32_1 = arith.constant 0 : i32
    return %c0_i32, %c0_i32_0 : i32, i32
  }
  func.func @transform_2(%arg0: i32) -> (i32, i32) {
    %c0_i32 = arith.constant 0 : i32
    %c0_i32_0 = arith.constant 0 : i32
    %c0_i32_1 = arith.constant 0 : i32
    return %c0_i32, %c0_i32_0 : i32, i32
  }
  func.func @transform_3(%arg0: i32) -> (i32, i32, i32) {
    %c0_i32 = arith.constant 0 : i32
    %c0_i32_0 = arith.constant 0 : i32
    %c0_i32_1 = arith.constant 0 : i32
    %c0_i32_2 = arith.constant 0 : i32
    return %c0_i32, %c0_i32_0, %c0_i32_1 : i32, i32, i32
  }
  func.func @transform_4(%arg0: i32) -> (i32, i32) {
    %c0_i32 = arith.constant 0 : i32
    %c0_i32_0 = arith.constant 0 : i32
    %c0_i32_1 = arith.constant 0 : i32
    return %c0_i32, %c0_i32_0 : i32, i32
  }
  func.func @transform_5(%arg0: i32) -> (i32, i32, i32) {
    %c0_i32 = arith.constant 0 : i32
    %c0_i32_0 = arith.constant 0 : i32
    %c0_i32_1 = arith.constant 0 : i32
    %c0_i32_2 = arith.constant 0 : i32
    return %c0_i32, %c0_i32_0, %c0_i32_1 : i32, i32, i32
  }
  func.func @transform_6(%arg0: i32) -> (i32, i32) {
    %c0_i32 = arith.constant 0 : i32
    %c0_i32_0 = arith.constant 0 : i32
    %c0_i32_1 = arith.constant 0 : i32
    return %c0_i32, %c0_i32_0 : i32, i32
  }
  func.func @transform_7(%arg0: i32) -> (i32, i32) {
    %c0_i32 = arith.constant 0 : i32
    %c0_i32_0 = arith.constant 0 : i32
    %c0_i32_1 = arith.constant 0 : i32
    return %c0_i32, %c0_i32_0 : i32, i32
  }
  func.func @transform_8(%arg0: i32) -> (i32, i32) {
    %c0_i32 = arith.constant 0 : i32
    %c0_i32_0 = arith.constant 0 : i32
    %c0_i32_1 = arith.constant 0 : i32
    return %c0_i32, %c0_i32_0 : i32, i32
  }
  func.func @transform_9(%arg0: i32) -> (i32, i32) {
    %c0_i32 = arith.constant 0 : i32
    %c0_i32_0 = arith.constant 0 : i32
    %c0_i32_1 = arith.constant 0 : i32
    return %c0_i32, %c0_i32_0 : i32, i32
  }
  func.func @transform_10(%arg0: i32) -> (i32, i32) {
    %c0_i32 = arith.constant 0 : i32
    %c0_i32_0 = arith.constant 0 : i32
    %c0_i32_1 = arith.constant 0 : i32
    return %c0_i32, %c0_i32_0 : i32, i32
  }
  func.func @transform_11(%arg0: i32) -> (i32, i32) {
    %c0_i32 = arith.constant 0 : i32
    %c0_i32_0 = arith.constant 0 : i32
    %c0_i32_1 = arith.constant 0 : i32
    return %c0_i32, %c0_i32_0 : i32, i32
  }
}

</mosaic_0001>

<llo_original>
// kernel: policy_forward.1
$region0: #{policy_forward.1}
  #allocation0 [shape = 'u32[]', space=smem, size = 0x4, offset = 0x4, fixed_abs, tag = 'smem constant byte address 0x4 - core index']
  #allocation1 [shape = 'u32[144,128]{1,0:T(1,128)}', space=vmem, size = 0x12000, scoped, tag = 'internal scratch']
  #allocation2 [shape = 'f32[1,1]{1,0:T(1,128)S(1)}', space=vmem, size = 0x200, scoped, tag = 'scoped memory for policy_forward.1']
  %s0 = inlined_call_operand.vmem [shape: f32[16,18,256], index: 0, kind: input, shape index: {}]
  %s1 = inlined_call_operand.vmem [shape: f32[256,32], index: 1, kind: input, shape index: {}]
  %s2 = inlined_call_operand.vmem [shape: f32[1,32], index: 2, kind: input, shape index: {}]
  %s3 = inlined_call_operand.vmem [shape: f32[16,32,64], index: 3, kind: input, shape index: {}]
  %s4 = inlined_call_operand.vmem [shape: f32[1,64], index: 4, kind: input, shape index: {}]
  %s5 = inlined_call_operand.vmem [shape: f32[9,64,64], index: 5, kind: input, shape index: {}]
  %s6 = inlined_call_operand.vmem [shape: f32[1,64], index: 6, kind: input, shape index: {}]
  %s7 = inlined_call_operand.vmem [shape: f32[64,64], index: 7, kind: input, shape index: {}]
  %s8 = inlined_call_operand.vmem [shape: f32[1,64], index: 8, kind: input, shape index: {}]
  %s9 = inlined_call_operand.vmem [shape: f32[64,1], index: 9, kind: input, shape index: {}]
  %s10 = inlined_call_operand.<no memory space> [shape: f32[1,1], index: 10, kind: input, shape index: {}]
  %s11 = inlined_call_operand.vmem [shape: f32[2,1], index: 11, kind: output, shape index: {}]
  %s12 = sld [smem:[#allocation0]]
  $region54: #{policy_forward.1} parent=0
    _
  %s14 = ssub.s32 1, %s12
  %s15 = scalar_select 0, %s14, %s12
  %v16 = vstv %s10
  %17 = vst [vmem:[#allocation2] sm:$0x1] %v16
  // Predicated region
  $region2: #{policy_forward.1} parent=0 // pred_check
    _
  $region3: #{policy_forward.1} parent=0 // pred_check_branch
    %19 = sbr.rel (0) target = $region5
  $region4: #{policy_forward.1} parent=0 // pred_region
    _
  $region5: #{policy_forward.1} parent=0 // pred_fallthru
    _
  // Predicated region
  $region6: #{policy_forward.1} parent=0 // pred_check
    _
  $region7: #{policy_forward.1} parent=0 // pred_check_branch
    %21 = sbr.rel (0) target = $region9
  $region8: #{policy_forward.1} parent=0 // pred_region
    _
  $region9: #{policy_forward.1} parent=0 // pred_fallthru
    _
  // Predicated region
  $region10: #{policy_forward.1} parent=0 // pred_check
    _
  $region11: #{policy_forward.1} parent=0 // pred_check_branch
    %23 = sbr.rel (0) target = $region13
  $region12: #{policy_forward.1} parent=0 // pred_region
    _
  $region13: #{policy_forward.1} parent=0 // pred_fallthru
    _
  // Predicated region
  $region14: #{policy_forward.1} parent=0 // pred_check
    _
  $region15: #{policy_forward.1} parent=0 // pred_check_branch
    %25 = sbr.rel (0) target = $region17
  $region16: #{policy_forward.1} parent=0 // pred_region
    _
  $region17: #{policy_forward.1} parent=0 // pred_fallthru
    _
  // Predicated region
  $region18: #{policy_forward.1} parent=0 // pred_check
    _
  $region19: #{policy_forward.1} parent=0 // pred_check_branch
    %27 = sbr.rel (0) target = $region21
  $region20: #{policy_forward.1} parent=0 // pred_region
    _
  $region21: #{policy_forward.1} parent=0 // pred_fallthru
    _
  // Predicated region
  $region22: #{policy_forward.1} parent=0 // pred_check
    _
  $region23: #{policy_forward.1} parent=0 // pred_check_branch
    %29 = sbr.rel (0) target = $region25
  $region24: #{policy_forward.1} parent=0 // pred_region
    _
  $region25: #{policy_forward.1} parent=0 // pred_fallthru
    _
  // Predicated region
  $region26: #{policy_forward.1} parent=0 // pred_check
    _
  $region27: #{policy_forward.1} parent=0 // pred_check_branch
    %31 = sbr.rel (0) target = $region29
  $region28: #{policy_forward.1} parent=0 // pred_region
    _
  $region29: #{policy_forward.1} parent=0 // pred_fallthru
    _
  // Predicated region
  $region30: #{policy_forward.1} parent=0 // pred_check
    _
  $region31: #{policy_forward.1} parent=0 // pred_check_branch
    %33 = sbr.rel (0) target = $region33
  $region32: #{policy_forward.1} parent=0 // pred_region
    _
  $region33: #{policy_forward.1} parent=0 // pred_fallthru
    _
  // Predicated region
  $region34: #{policy_forward.1} parent=0 // pred_check
    _
  $region35: #{policy_forward.1} parent=0 // pred_check_branch
    %35 = sbr.rel (0) target = $region37
  $region36: #{policy_forward.1} parent=0 // pred_region
    _
  $region37: #{policy_forward.1} parent=0 // pred_fallthru
    _
  // Predicated region
  $region38: #{policy_forward.1} parent=0 // pred_check
    _
  $region39: #{policy_forward.1} parent=0 // pred_check_branch
    %37 = sbr.rel (0) target = $region41
  $region40: #{policy_forward.1} parent=0 // pred_region
    _
  $region41: #{policy_forward.1} parent=0 // pred_fallthru
    _
  // Predicated region
  $region42: #{policy_forward.1} parent=0 // pred_check
    _
  $region43: #{policy_forward.1} parent=0 // pred_check_branch
    %39 = sbr.rel (0) target = $region45
  $region44: #{policy_forward.1} parent=0 // pred_region
    _
  $region45: #{policy_forward.1} parent=0 // pred_fallthru
    _
  %v40 = vld [vmem:[%s0] sm:$0xff]
  %v41 = vld [vmem:[%s0 + $0x8] sm:$0xff]
  %v42 = vld [vmem:[%s0 + $0x10] sm:$0xff]
  %v43 = vld [vmem:[%s0 + $0x18] sm:$0xff]
  %v44 = vld [vmem:[%s0 + $0x20] sm:$0x3]
  %v45 = vld [vmem:[%s0 + $0x28] sm:$0x3]
  %v46 = vld [vmem:[%s1] sm:$0xff]
  %v47 = vld [vmem:[%s1 + $0x8] sm:$0xff]
  %v48 = vld [vmem:[%s1 + $0x10] sm:$0xff]
  %v49 = vld [vmem:[%s1 + $0x18] sm:$0xff]
  %v50 = vld [vmem:[%s1 + $0x20] sm:$0xff]
  %v51 = vld [vmem:[%s1 + $0x28] sm:$0xff]
  %v52 = vld [vmem:[%s1 + $0x30] sm:$0xff]
  %v53 = vld [vmem:[%s1 + $0x38] sm:$0xff]
  %v54 = vld [vmem:[%s1 + $0x40] sm:$0xff]
  %v55 = vld [vmem:[%s1 + $0x48] sm:$0xff]
  %v56 = vld [vmem:[%s1 + $0x50] sm:$0xff]
  %v57 = vld [vmem:[%s1 + $0x58] sm:$0xff]
  %v58 = vld [vmem:[%s1 + $0x60] sm:$0xff]
  %v59 = vld [vmem:[%s1 + $0x68] sm:$0xff]
  %v60 = vld [vmem:[%s1 + $0x70] sm:$0xff]
  %v61 = vld [vmem:[%s1 + $0x78] sm:$0xff]
  %v62 = vld [vmem:[%s1 + $0x80] sm:$0xff]
  %v63 = vld [vmem:[%s1 + $0x88] sm:$0xff]
  %v64 = vld [vmem:[%s1 + $0x90] sm:$0xff]
  %v65 = vld [vmem:[%s1 + $0x98] sm:$0xff]
  %v66 = vld [vmem:[%s1 + $0xa0] sm:$0xff]
  %v67 = vld [vmem:[%s1 + $0xa8] sm:$0xff]
  %v68 = vld [vmem:[%s1 + $0xb0] sm:$0xff]
  %v69 = vld [vmem:[%s1 + $0xb8] sm:$0xff]
  %v70 = vld [vmem:[%s1 + $0xc0] sm:$0xff]
  %v71 = vld [vmem:[%s1 + $0xc8] sm:$0xff]
  %v72 = vld [vmem:[%s1 + $0xd0] sm:$0xff]
  %v73 = vld [vmem:[%s1 + $0xd8] sm:$0xff]
  %v74 = vld [vmem:[%s1 + $0xe0] sm:$0xff]
  %v75 = vld [vmem:[%s1 + $0xe8] sm:$0xff]
  %v76 = vld [vmem:[%s1 + $0xf0] sm:$0xff]
  %v77 = vld [vmem:[%s1 + $0xf8] sm:$0xff]
  %v78 = vld [vmem:[%s2] sm:$0x1]
  %v80 = vlaneseq
  %v81 = vshrl.u32 %v80, 7
  %v82 = vsub.s32 0, %v81
  %v83 = vrot.slane %v78, %v82
  %85 = vmatprep.subr.mxu0 0.0
  %86 = vmatpush1.msra.mxu0 %v46
  %87 = vmatprep.subr.mxu0 0.0
  %88 = vmatpush1.msra.mxu0 %v47
  %89 = vmatprep.subr.mxu0 0.0
  %90 = vmatpush1.msra.mxu0 %v48
  %91 = vmatprep.subr.mxu0 0.0
  %92 = vmatpush1.msra.mxu0 %v49
  %93 = vmatprep.subr.mxu0 0.0
  %94 = vmatpush1.msra.mxu0 %v50
  %95 = vmatprep.subr.mxu0 0.0
  %96 = vmatpush1.msra.mxu0 %v51
  %97 = vmatprep.subr.mxu0 0.0
  %98 = vmatpush1.msra.mxu0 %v52
  %99 = vmatprep.subr.mxu0 0.0
  %100 = vmatpush1.msra.mxu0 %v53
  %101 = vmatprep.subr.mxu0 0.0
  %102 = vmatpush1.msra.mxu0 %v54
  %103 = vmatprep.subr.mxu0 0.0
  %104 = vmatpush1.msra.mxu0 %v55
  %105 = vmatprep.subr.mxu0 0.0
  %106 = vmatpush1.msra.mxu0 %v56
  %107 = vmatprep.subr.mxu0 0.0
  %108 = vmatpush1.msra.mxu0 %v57
  %109 = vmatprep.subr.mxu0 0.0
  %110 = vmatpush1.msra.mxu0 %v58
  %111 = vmatprep.subr.mxu0 0.0
  %112 = vmatpush1.msra.mxu0 %v59
  %113 = vmatprep.subr.mxu0 0.0
  %114 = vmatpush1.msra.mxu0 %v60
  %115 = vmatprep.subr.mxu0 0.0
  %116 = vmatpush1.msra.mxu0 %v61
  %117 = vmatprep.subr.mxu0 0.0
  %118 = vmatpush1.msra.mxu0 %v62
  %119 = vmatprep.subr.mxu0 0.0
  %120 = vmatpush1.msra.mxu0 %v63
  %121 = vmatprep.subr.mxu0 0.0
  %122 = vmatpush1.msra.mxu0 %v64
  %123 = vmatprep.subr.mxu0 0.0
  %124 = vmatpush1.msra.mxu0 %v65
  %125 = vmatprep.subr.mxu0 0.0
  %126 = vmatpush1.msra.mxu0 %v66
  %127 = vmatprep.subr.mxu0 0.0
  %128 = vmatpush1.msra.mxu0 %v67
  %129 = vmatprep.subr.mxu0 0.0
  %130 = vmatpush1.msra.mxu0 %v68
  %131 = vmatprep.subr.mxu0 0.0
  %132 = vmatpush1.msra.mxu0 %v69
  %133 = vmatprep.subr.mxu0 0.0
  %134 = vmatpush1.msra.mxu0 %v70
  %135 = vmatprep.subr.mxu0 0.0
  %136 = vmatpush1.msra.mxu0 %v71
  %137 = vmatprep.subr.mxu0 0.0
  %138 = vmatpush1.msra.mxu0 %v72
  %139 = vmatprep.subr.mxu0 0.0
  %140 = vmatpush1.msra.mxu0 %v73
  %141 = vmatprep.subr.mxu0 0.0
  %142 = vmatpush1.msra.mxu0 %v74
  %143 = vmatprep.subr.mxu0 0.0
  %144 = vmatpush1.msra.mxu0 %v75
  %145 = vmatprep.subr.mxu0 0.0
  %146 = vmatpush1.msra.mxu0 %v76
  %147 = vmatprep.subr.mxu0 0.0
  %148 = vmatpush1.msra.mxu0 %v77
  %149 = vmatprep.mubr.f32.mxu0 %v41
  %150 = vmatmul.mubr.f32.gmra.mrb[0].mxu0 %v40
  %v151 = vpop.f32.mrb[0].mxu0
  %v152 = vadd.f32 %v83, %v151
  %v153 = vpop.f32.mrb[0].mxu0
  %154 = vmatprep.mubr.f32.mxu0 %v43
  %155 = vmatmul.mubr.f32.gmra.mrb[0].mxu0 %v42
  %v156 = vpop.f32.mrb[0].mxu0
  %v157 = vadd.f32 %v83, %v156
  %v158 = vpop.f32.mrb[0].mxu0
  %159 = vmatprep.mubr.f32.mxu0 %v45
  %160 = vmatmul.mubr.f32.gmra.mrb[0].mxu0 %v44
  %v161 = vpop.f32.mrb[0].mxu0
  %v162 = vadd.f32 %v83, %v161
  %v163 = vpop.f32.mrb[0].mxu0
  %164 = vdwg.mxu0
  %v165 = vmax.f32 %v152, 0.0
  %v166 = vmax.f32 %v157, 0.0
  %v167 = vmax.f32 %v162, 0.0
  %v168 = vld [vmem:[%s3] sm:$0xff]
  %v169 = vld [vmem:[%s3 + $0x8] sm:$0xff]
  %v170 = vld [vmem:[%s3 + $0x10] sm:$0xff]
  %v171 = vld [vmem:[%s3 + $0x18] sm:$0xff]
  %s172 = scalar_lea.vmem %s0, 48
  %v173 = vld [vmem:[%s172] sm:$0xff]
  %v174 = vld [vmem:[%s172 + $0x8] sm:$0xff]
  %v175 = vld [vmem:[%s172 + $0x10] sm:$0xff]
  %v176 = vld [vmem:[%s172 + $0x18] sm:$0xff]
  %v177 = vld [vmem:[%s172 + $0x20] sm:$0x3]
  %v178 = vld [vmem:[%s172 + $0x28] sm:$0x3]
  %179 = vmatprep.subr.mxu0 0.0
  %180 = vmatpush1.msra.mxu0 %v46
  %181 = vmatprep.subr.mxu0 0.0
  %182 = vmatpush1.msra.mxu0 %v47
  %183 = vmatprep.subr.mxu0 0.0
  %184 = vmatpush1.msra.mxu0 %v48
  %185 = vmatprep.subr.mxu0 0.0
  %186 = vmatpush1.msra.mxu0 %v49
  %187 = vmatprep.subr.mxu0 0.0
  %188 = vmatpush1.msra.mxu0 %v50
  %189 = vmatprep.subr.mxu0 0.0
  %190 = vmatpush1.msra.mxu0 %v51
  %191 = vmatprep.subr.mxu0 0.0
  %192 = vmatpush1.msra.mxu0 %v52
  %193 = vmatprep.subr.mxu0 0.0
  %194 = vmatpush1.msra.mxu0 %v53
  %195 = vmatprep.subr.mxu0 0.0
  %196 = vmatpush1.msra.mxu0 %v54
  %197 = vmatprep.subr.mxu0 0.0
  %198 = vmatpush1.msra.mxu0 %v55
  %199 = vmatprep.subr.mxu0 0.0
  %200 = vmatpush1.msra.mxu0 %v56
  %201 = vmatprep.subr.mxu0 0.0
  %202 = vmatpush1.msra.mxu0 %v57
  %203 = vmatprep.subr.mxu0 0.0
  %204 = vmatpush1.msra.mxu0 %v58
  %205 = vmatprep.subr.mxu0 0.0
  %206 = vmatpush1.msra.mxu0 %v59
  %207 = vmatprep.subr.mxu0 0.0
  %208 = vmatpush1.msra.mxu0 %v60
  %209 = vmatprep.subr.mxu0 0.0
  %210 = vmatpush1.msra.mxu0 %v61
  %211 = vmatprep.subr.mxu0 0.0
  %212 = vmatpush1.msra.mxu0 %v62
  %213 = vmatprep.subr.mxu0 0.0
  %214 = vmatpush1.msra.mxu0 %v63
  %215 = vmatprep.subr.mxu0 0.0
  %216 = vmatpush1.msra.mxu0 %v64
  %217 = vmatprep.subr.mxu0 0.0
  %218 = vmatpush1.msra.mxu0 %v65
  %219 = vmatprep.subr.mxu0 0.0
  %220 = vmatpush1.msra.mxu0 %v66
  %221 = vmatprep.subr.mxu0 0.0
  %222 = vmatpush1.msra.mxu0 %v67
  %223 = vmatprep.subr.mxu0 0.0
  %224 = vmatpush1.msra.mxu0 %v68
  %225 = vmatprep.subr.mxu0 0.0
  %226 = vmatpush1.msra.mxu0 %v69
  %227 = vmatprep.subr.mxu0 0.0
  %228 = vmatpush1.msra.mxu0 %v70
  %229 = vmatprep.subr.mxu0 0.0
  %230 = vmatpush1.msra.mxu0 %v71
  %231 = vmatprep.subr.mxu0 0.0
  %232 = vmatpush1.msra.mxu0 %v72
  %233 = vmatprep.subr.mxu0 0.0
  %234 = vmatpush1.msra.mxu0 %v73
  %235 = vmatprep.subr.mxu0 0.0
  %236 = vmatpush1.msra.mxu0 %v74
  %237 = vmatprep.subr.mxu0 0.0
  %238 = vmatpush1.msra.mxu0 %v75
  %239 = vmatprep.subr.mxu0 0.0
  %240 = vmatpush1.msra.mxu0 %v76
  %241 = vmatprep.subr.mxu0 0.0
  %242 = vmatpush1.msra.mxu0 %v77
  %243 = vmatprep.mubr.f32.mxu0 %v174
  %244 = vmatmul.mubr.f32.gmra.mrb[0].mxu0 %v173
  %v245 = vpop.f32.mrb[0].mxu0
  %v246 = vadd.f32 %v83, %v245
  %v247 = vpop.f32.mrb[0].mxu0
  %248 = vmatprep.mubr.f32.mxu0 %v176
  %249 = vmatmul.mubr.f32.gmra.mrb[0].mxu0 %v175
  %v250 = vpop.f32.mrb[0].mxu0
  %v251 = vadd.f32 %v83, %v250
  %v252 = vpop.f32.mrb[0].mxu0
  %253 = vmatprep.mubr.f32.mxu0 %v178
  %254 = vmatmul.mubr.f32.gmra.mrb[0].mxu0 %v177
  %v255 = vpop.f32.mrb[0].mxu0
  %v256 = vadd.f32 %v83, %v255
  %v257 = vpop.f32.mrb[0].mxu0
  %258 = vdwg.mxu0
  %v259 = vmax.f32 %v246, 0.0
  %v260 = vmax.f32 %v251, 0.0
  %v261 = vmax.f32 %v256, 0.0
  %s262 = scalar_lea.vmem %s3, 32
  %v263 = vld [vmem:[%s262] sm:$0xff]
  %v264 = vld [vmem:[%s262 + $0x8] sm:$0xff]
  %v265 = vld [vmem:[%s262 + $0x10] sm:$0xff]
  %v266 = vld [vmem:[%s262 + $0x18] sm:$0xff]
  %vm267 = vcmask 261120
  %v269 = vsel %vm267, %v259, 0
  %v272 = vsel %vm267, %v260, 0
  %v275 = vsel %vm267, %v261, 0
  %277 = vmatprep.subr.mxu0 0.0
  %278 = vmatpush1.msra.mxu0 %v263
  %279 = vmatprep.subr.mxu0 0.0
  %280 = vmatpush1.msra.mxu0 %v264
  %281 = vmatprep.subr.mxu0 0.0
  %282 = vmatpush1.msra.mxu0 %v265
  %283 = vmatprep.subr.mxu0 0.0
  %284 = vmatpush1.msra.mxu0 %v266
  %285 = vmatprep.subr.mxu0 0.0
  %286 = vmatpush1.msra.mxu0 0.0
  %287 = vmatprep.subr.mxu0 0.0
  %288 = vmatpush1.msra.mxu0 0.0
  %289 = vmatprep.subr.mxu0 0.0
  %290 = vmatpush1.msra.mxu0 0.0
  %291 = vmatprep.subr.mxu0 0.0
  %292 = vmatpush1.msra.mxu0 0.0
  %293 = vmatprep.subr.mxu0 0.0
  %294 = vmatpush1.msra.mxu0 0.0
  %295 = vmatprep.subr.mxu0 0.0
  %296 = vmatpush1.msra.mxu0 0.0
  %297 = vmatprep.subr.mxu0 0.0
  %298 = vmatpush1.msra.mxu0 0.0
  %299 = vmatprep.subr.mxu0 0.0
  %300 = vmatpush1.msra.mxu0 0.0
  %301 = vmatprep.subr.mxu0 0.0
  %302 = vmatpush1.msra.mxu0 0.0
  %303 = vmatprep.subr.mxu0 0.0
  %304 = vmatpush1.msra.mxu0 0.0
  %305 = vmatprep.subr.mxu0 0.0
  %306 = vmatpush1.msra.mxu0 0.0
  %307 = vmatprep.subr.mxu0 0.0
  %308 = vmatpush1.msra.mxu0 0.0
  %309 = vmatprep.subr.mxu0 0.0
  %310 = vmatpush1.msra.mxu0 0.0
  %311 = vmatprep.subr.mxu0 0.0
  %312 = vmatpush1.msra.mxu0 0.0
  %313 = vmatprep.subr.mxu0 0.0
  %314 = vmatpush1.msra.mxu0 0.0
  %315 = vmatprep.subr.mxu0 0.0
  %316 = vmatpush1.msra.mxu0 0.0
  %317 = vmatprep.subr.mxu0 0.0
  %318 = vmatpush1.msra.mxu0 0.0
  %319 = vmatprep.subr.mxu0 0.0
  %320 = vmatpush1.msra.mxu0 0.0
  %321 = vmatprep.subr.mxu0 0.0
  %322 = vmatpush1.msra.mxu0 0.0
  %323 = vmatprep.subr.mxu0 0.0
  %324 = vmatpush1.msra.mxu0 0.0
  %325 = vmatprep.subr.mxu0 0.0
  %326 = vmatpush1.msra.mxu0 0.0
  %327 = vmatprep.subr.mxu0 0.0
  %328 = vmatpush1.msra.mxu0 0.0
  %329 = vmatprep.subr.mxu0 0.0
  %330 = vmatpush1.msra.mxu0 0.0
  %331 = vmatprep.subr.mxu0 0.0
  %332 = vmatpush1.msra.mxu0 0.0
  %333 = vmatprep.subr.mxu0 0.0
  %334 = vmatpush1.msra.mxu0 0.0
  %335 = vmatprep.subr.mxu0 0.0
  %336 = vmatpush1.msra.mxu0 0.0
  %337 = vmatprep.subr.mxu0 0.0
  %338 = vmatpush1.msra.mxu0 0.0
  %339 = vmatprep.subr.mxu0 0.0
  %340 = vmatpush1.msra.mxu0 0.0
  %341 = vmatprep.mubr.f32.mxu0 0.0
  %342 = vmatmul.mubr.f32.gmra.mrb[0].mxu0 %v269
  %v343 = vpop.f32.mrb[0].mxu0
  %v344 = vadd.f32 0.0, %v343
  %v345 = vpop.f32.mrb[0].mxu0
  %346 = vmatprep.mubr.f32.mxu0 0.0
  %347 = vmatmul.mubr.f32.gmra.mrb[0].mxu0 %v272
  %v348 = vpop.f32.mrb[0].mxu0
  %v349 = vadd.f32 0.0, %v348
  %v350 = vpop.f32.mrb[0].mxu0
  %351 = vmatprep.mubr.f32.mxu0 0.0
  %352 = vmatmul.mubr.f32.gmra.mrb[0].mxu0 %v275
  %v353 = vpop.f32.mrb[0].mxu0
  %v354 = vadd.f32 0.0, %v353
  %v355 = vpop.f32.mrb[0].mxu0
  %356 = vdwg.mxu0
  %v358 = vsel %vm267, %v165, 0
  %v361 = vsel %vm267, %v166, 0
  %v364 = vsel %vm267, %v167, 0
  %366 = vmatprep.subr.mxu0 0.0
  %367 = vmatpush1.msra.mxu0 %v168
  %368 = vmatprep.subr.mxu0 0.0
  %369 = vmatpush1.msra.mxu0 %v169
  %370 = vmatprep.subr.mxu0 0.0
  %371 = vmatpush1.msra.mxu0 %v170
  %372 = vmatprep.subr.mxu0 0.0
  %373 = vmatpush1.msra.mxu0 %v171
  %374 = vmatprep.subr.mxu0 0.0
  %375 = vmatpush1.msra.mxu0 0.0
  %376 = vmatprep.subr.mxu0 0.0
  %377 = vmatpush1.msra.mxu0 0.0
  %378 = vmatprep.subr.mxu0 0.0
  %379 = vmatpush1.msra.mxu0 0.0
  %380 = vmatprep.subr.mxu0 0.0
  %381 = vmatpush1.msra.mxu0 0.0
  %382 = vmatprep.subr.mxu0 0.0
  %383 = vmatpush1.msra.mxu0 0.0
  %384 = vmatprep.subr.mxu0 0.0
  %385 = vmatpush1.msra.mxu0 0.0
  %386 = vmatprep.subr.mxu0 0.0
  %387 = vmatpush1.msra.mxu0 0.0
  %388 = vmatprep.subr.mxu0 0.0
  %389 = vmatpush1.msra.mxu0 0.0
  %390 = vmatprep.subr.mxu0 0.0
  %391 = vmatpush1.msra.mxu0 0.0
  %392 = vmatprep.subr.mxu0 0.0
  %393 = vmatpush1.msra.mxu0 0.0
  %394 = vmatprep.subr.mxu0 0.0
  %395 = vmatpush1.msra.mxu0 0.0
  %396 = vmatprep.subr.mxu0 0.0
  %397 = vmatpush1.msra.mxu0 0.0
  %398 = vmatprep.subr.mxu0 0.0
  %399 = vmatpush1.msra.mxu0 0.0
  %400 = vmatprep.subr.mxu0 0.0
  %401 = vmatpush1.msra.mxu0 0.0
  %402 = vmatprep.subr.mxu0 0.0
  %403 = vmatpush1.msra.mxu0 0.0
  %404 = vmatprep.subr.mxu0 0.0
  %405 = vmatpush1.msra.mxu0 0.0
  %406 = vmatprep.subr.mxu0 0.0
  %407 = vmatpush1.msra.mxu0 0.0
  %408 = vmatprep.subr.mxu0 0.0
  %409 = vmatpush1.msra.mxu0 0.0
  %410 = vmatprep.subr.mxu0 0.0
  %411 = vmatpush1.msra.mxu0 0.0
  %412 = vmatprep.subr.mxu0 0.0
  %413 = vmatpush1.msra.mxu0 0.0
  %414 = vmatprep.subr.mxu0 0.0
  %415 = vmatpush1.msra.mxu0 0.0
  %416 = vmatprep.subr.mxu0 0.0
  %417 = vmatpush1.msra.mxu0 0.0
  %418 = vmatprep.subr.mxu0 0.0
  %419 = vmatpush1.msra.mxu0 0.0
  %420 = vmatprep.subr.mxu0 0.0
  %421 = vmatpush1.msra.mxu0 0.0
  %422 = vmatprep.subr.mxu0 0.0
  %423 = vmatpush1.msra.mxu0 0.0
  %424 = vmatprep.subr.mxu0 0.0
  %425 = vmatpush1.msra.mxu0 0.0
  %426 = vmatprep.subr.mxu0 0.0
  %427 = vmatpush1.msra.mxu0 0.0
  %428 = vmatprep.subr.mxu0 0.0
  %429 = vmatpush1.msra.mxu0 0.0
  %430 = vmatprep.mubr.f32.mxu0 0.0
  %431 = vmatmul.mubr.f32.gmra.mrb[0].mxu0 %v358
  %v432 = vpop.f32.mrb[0].mxu0
  %v433 = vadd.f32 %v344, %v432
  %v434 = vpop.f32.mrb[0].mxu0
  %435 = vmatprep.mubr.f32.mxu0 0.0
  %436 = vmatmul.mubr.f32.gmra.mrb[0].mxu0 %v361
  %v437 = vpop.f32.mrb[0].mxu0
  %v438 = vadd.f32 %v349, %v437
  %v439 = vpop.f32.mrb[0].mxu0
  %440 = vmatprep.mubr.f32.mxu0 0.0
  %441 = vmatmul.mubr.f32.gmra.mrb[0].mxu0 %v364
  %v442 = vpop.f32.mrb[0].mxu0
  %v443 = vadd.f32 %v354, %v442
  %v444 = vpop.f32.mrb[0].mxu0
  %445 = vdwg.mxu0
  %s446 = scalar_lea.vmem %s0, 96
  %v447 = vld [vmem:[%s446] sm:$0xff]
  %v448 = vld [vmem:[%s446 + $0x8] sm:$0xff]
  %v449 = vld [vmem:[%s446 + $0x10] sm:$0xff]
  %v450 = vld [vmem:[%s446 + $0x18] sm:$0xff]
  %v451 = vld [vmem:[%s446 + $0x20] sm:$0x3]
  %v452 = vld [vmem:[%s446 + $0x28] sm:$0x3]
  %453 = vmatprep.subr.mxu0 0.0
  %454 = vmatpush1.msra.mxu0 %v46
  %455 = vmatprep.subr.mxu0 0.0
  %456 = vmatpush1.msra.mxu0 %v47
  %457 = vmatprep.subr.mxu0 0.0
  %458 = vmatpush1.msra.mxu0 %v48
  %459 = vmatprep.subr.mxu0 0.0
  %460 = vmatpush1.msra.mxu0 %v49
  %461 = vmatprep.subr.mxu0 0.0
  %462 = vmatpush1.msra.mxu0 %v50
  %463 = vmatprep.subr.mxu0 0.0
  %464 = vmatpush1.msra.mxu0 %v51
  %465 = vmatprep.subr.mxu0 0.0
  %466 = vmatpush1.msra.mxu0 %v52
  %467 = vmatprep.subr.mxu0 0.0
  %468 = vmatpush1.msra.mxu0 %v53
  %469 = vmatprep.subr.mxu0 0.0
  %470 = vmatpush1.msra.mxu0 %v54
  %471 = vmatprep.subr.mxu0 0.0
  %472 = vmatpush1.msra.mxu0 %v55
  %473 = vmatprep.subr.mxu0 0.0
  %474 = vmatpush1.msra.mxu0 %v56
  %475 = vmatprep.subr.mxu0 0.0
  %476 = vmatpush1.msra.mxu0 %v57
  %477 = vmatprep.subr.mxu0 0.0
  %478 = vmatpush1.msra.mxu0 %v58
  %479 = vmatprep.subr.mxu0 0.0
  %480 = vmatpush1.msra.mxu0 %v59
  %481 = vmatprep.subr.mxu0 0.0
  %482 = vmatpush1.msra.mxu0 %v60
  %483 = vmatprep.subr.mxu0 0.0
  %484 = vmatpush1.msra.mxu0 %v61
  %485 = vmatprep.subr.mxu0 0.0
  %486 = vmatpush1.msra.mxu0 %v62
  %487 = vmatprep.subr.mxu0 0.0
  %488 = vmatpush1.msra.mxu0 %v63
  %489 = vmatprep.subr.mxu0 0.0
  %490 = vmatpush1.msra.mxu0 %v64
  %491 = vmatprep.subr.mxu0 0.0
  %492 = vmatpush1.msra.mxu0 %v65
  %493 = vmatprep.subr.mxu0 0.0
  %494 = vmatpush1.msra.mxu0 %v66
  %495 = vmatprep.subr.mxu0 0.0
  %496 = vmatpush1.msra.mxu0 %v67
  %497 = vmatprep.subr.mxu0 0.0
  %498 = vmatpush1.msra.mxu0 %v68
  %499 = vmatprep.subr.mxu0 0.0
  %500 = vmatpush1.msra.mxu0 %v69
  %501 = vmatprep.subr.mxu0 0.0
  %502 = vmatpush1.msra.mxu0 %v70
  %503 = vmatprep.subr.mxu0 0.0
  %504 = vmatpush1.msra.mxu0 %v71
  %505 = vmatprep.subr.mxu0 0.0
  %506 = vmatpush1.msra.mxu0 %v72
  %507 = vmatprep.subr.mxu0 0.0
  %508 = vmatpush1.msra.mxu0 %v73
  %509 = vmatprep.subr.mxu0 0.0
  %510 = vmatpush1.msra.mxu0 %v74
  %511 = vmatprep.subr.mxu0 0.0
  %512 = vmatpush1.msra.mxu0 %v75
  %513 = vmatprep.subr.mxu0 0.0
  %514 = vmatpush1.msra.mxu0 %v76
  %515 = vmatprep.subr.mxu0 0.0
  %516 = vmatpush1.msra.mxu0 %v77
  %517 = vmatprep.mubr.f32.mxu0 %v448
  %518 = vmatmul.mubr.f32.gmra.mrb[0].mxu0 %v447
  %v519 = vpop.f32.mrb[0].mxu0
  %v520 = vadd.f32 %v83, %v519
  %v521 = vpop.f32.mrb[0].mxu0
  %522 = vmatprep.mubr.f32.mxu0 %v450
  %523 = vmatmul.mubr.f32.gmra.mrb[0].mxu0 %v449
  %v524 = vpop.f32.mrb[0].mxu0
  %v525 = vadd.f32 %v83, %v524
  %v526 = vpop.f32.mrb[0].mxu0
  %527 = vmatprep.mubr.f32.mxu0 %v452
  %528 = vmatmul.mubr.f32.gmra.mrb[0].mxu0 %v451
  %v529 = vpop.f32.mrb[0].mxu0
  %v530 = vadd.f32 %v83, %v529
  %v531 = vpop.f32.mrb[0].mxu0
  %532 = vdwg.mxu0
  %v533 = vmax.f32 %v520, 0.0
  %v534 = vmax.f32 %v525, 0.0
  %v535 = vmax.f32 %v530, 0.0
  %s536 = scalar_lea.vmem %s3, 64
  %v537 = vld [vmem:[%s536] sm:$0xff]
  %v538 = vld [vmem:[%s536 + $0x8] sm:$0xff]
  %v539 = vld [vmem:[%s536 + $0x10] sm:$0xff]
  %v540 = vld [vmem:[%s536 + $0x18] sm:$0xff]
  %v542 = vsel %vm267, %v533, 0
  %v545 = vsel %vm267, %v534, 0
  %v548 = vsel %vm267, %v535, 0
  %550 = vmatprep.subr.mxu0 0.0
  %551 = vmatpush1.msra.mxu0 %v537
  %552 = vmatprep.subr.mxu0 0.0
  %553 = vmatpush1.msra.mxu0 %v538
  %554 = vmatprep.subr.mxu0 0.0
  %555 = vmatpush1.msra.mxu0 %v539
  %556 = vmatprep.subr.mxu0 0.0
  %557 = vmatpush1.msra.mxu0 %v540
  %558 = vmatprep.subr.mxu0 0.0
  %559 = vmatpush1.msra.mxu0 0.0
  %560 = vmatprep.subr.mxu0 0.0
  %561 = vmatpush1.msra.mxu0 0.0
  %562 = vmatprep.subr.mxu0 0.0
  %563 = vmatpush1.msra.mxu0 0.0
  %564 = vmatprep.subr.mxu0 0.0
  %565 = vmatpush1.msra.mxu0 0.0
  %566 = vmatprep.subr.mxu0 0.0
  %567 = vmatpush1.msra.mxu0 0.0
  %568 = vmatprep.subr.mxu0 0.0
  %569 = vmatpush1.msra.mxu0 0.0
  %570 = vmatprep.subr.mxu0 0.0
  %571 = vmatpush1.msra.mxu0 0.0
  %572 = vmatprep.subr.mxu0 0.0
  %573 = vmatpush1.msra.mxu0 0.0
  %574 = vmatprep.subr.mxu0 0.0
  %575 = vmatpush1.msra.mxu0 0.0
  %576 = vmatprep.subr.mxu0 0.0
  %577 = vmatpush1.msra.mxu0 0.0
  %578 = vmatprep.subr.mxu0 0.0
  %579 = vmatpush1.msra.mxu0 0.0
  %580 = vmatprep.subr.mxu0 0.0
  %581 = vmatpush1.msra.mxu0 0.0
  %582 = vmatprep.subr.mxu0 0.0
  %583 = vmatpush1.msra.mxu0 0.0
  %584 = vmatprep.subr.mxu0 0.0
  %585 = vmatpush1.msra.mxu0 0.0
  %586 = vmatprep.subr.mxu0 0.0
  %587 = vmatpush1.msra.mxu0 0.0
  %588 = vmatprep.subr.mxu0 0.0
  %589 = vmatpush1.msra.mxu0 0.0
  %590 = vmatprep.subr.mxu0 0.0
  %591 = vmatpush1.msra.mxu0 0.0
  %592 = vmatprep.subr.mxu0 0.0
  %593 = vmatpush1.msra.mxu0 0.0
  %594 = vmatprep.subr.mxu0 0.0
  %595 = vmatpush1.msra.mxu0 0.0
  %596 = vmatprep.subr.mxu0 0.0
  %597 = vmatpush1.msra.mxu0 0.0
  %598 = vmatprep.subr.mxu0 0.0
  %599 = vmatpush1.msra.mxu0 0.0
  %600 = vmatprep.subr.mxu0 0.0
  %601 = vmatpush1.msra.mxu0 0.0
  %602 = vmatprep.subr.mxu0 0.0
  %603 = vmatpush1.msra.mxu0 0.0
  %604 = vmatprep.subr.mxu0 0.0
  %605 = vmatpush1.msra.mxu0 0.0
  %606 = vmatprep.subr.mxu0 0.0
  %607 = vmatpush1.msra.mxu0 0.0
  %608 = vmatprep.subr.mxu0 0.0
  %609 = vmatpush1.msra.mxu0 0.0
  %610 = vmatprep.subr.mxu0 0.0
  %611 = vmatpush1.msra.mxu0 0.0
  %612 = vmatprep.subr.mxu0 0.0
  %613 = vmatpush1.msra.mxu0 0.0
  %614 = vmatprep.mubr.f32.mxu0 0.0
  %615 = vmatmul.mubr.f32.gmra.mrb[0].mxu0 %v542
  %v616 = vpop.f32.mrb[0].mxu0
  %v617 = vadd.f32 0.0, %v616
  %v618 = vpop.f32.mrb[0].mxu0
  %619 = vmatprep.mubr.f32.mxu0 0.0
  %620 = vmatmul.mubr.f32.gmra.mrb[0].mxu0 %v545
  %v621 = vpop.f32.mrb[0].mxu0
  %v622 = vadd.f32 0.0, %v621
  %v623 = vpop.f32.mrb[0].mxu0
  %624 = vmatprep.mubr.f32.mxu0 0.0
  %625 = vmatmul.mubr.f32.gmra.mrb[0].mxu0 %v548
  %v626 = vpop.f32.mrb[0].mxu0
  %v627 = vadd.f32 0.0, %v626
  %v628 = vpop.f32.mrb[0].mxu0
  %629 = vdwg.mxu0
  %v630 = vadd.f32 %v433, %v617
  %v631 = vadd.f32 %v438, %v622
  %v632 = vadd.f32 %v443, %v627
  %s633 = scalar_lea.vmem %s0, 144
  %v634 = vld [vmem:[%s633] sm:$0xff]
  %v635 = vld [vmem:[%s633 + $0x8] sm:$0xff]
  %v636 = vld [vmem:[%s633 + $0x10] sm:$0xff]
  %v637 = vld [vmem:[%s633 + $0x18] sm:$0xff]
  %v638 = vld [vmem:[%s633 + $0x20] sm:$0x3]
  %v639 = vld [vmem:[%s633 + $0x28] sm:$0x3]
  %640 = vmatprep.subr.mxu0 0.0
  %641 = vmatpush1.msra.mxu0 %v46
  %642 = vmatprep.subr.mxu0 0.0
  %643 = vmatpush1.msra.mxu0 %v47
  %644 = vmatprep.subr.mxu0 0.0
  %645 = vmatpush1.msra.mxu0 %v48
  %646 = vmatprep.subr.mxu0 0.0
  %647 = vmatpush1.msra.mxu0 %v49
  %648 = vmatprep.subr.mxu0 0.0
  %649 = vmatpush1.msra.mxu0 %v50
  %650 = vmatprep.subr.mxu0 0.0
  %651 = vmatpush1.msra.mxu0 %v51
  %652 = vmatprep.subr.mxu0 0.0
  %653 = vmatpush1.msra.mxu0 %v52
  %654 = vmatprep.subr.mxu0 0.0
  %655 = vmatpush1.msra.mxu0 %v53
  %656 = vmatprep.subr.mxu0 0.0
  %657 = vmatpush1.msra.mxu0 %v54
  %658 = vmatprep.subr.mxu0 0.0
  %659 = vmatpush1.msra.mxu0 %v55
  %660 = vmatprep.subr.mxu0 0.0
  %661 = vmatpush1.msra.mxu0 %v56
  %662 = vmatprep.subr.mxu0 0.0
  %663 = vmatpush1.msra.mxu0 %v57
  %664 = vmatprep.subr.mxu0 0.0
  %665 = vmatpush1.msra.mxu0 %v58
  %666 = vmatprep.subr.mxu0 0.0
  %667 = vmatpush1.msra.mxu0 %v59
  %668 = vmatprep.subr.mxu0 0.0
  %669 = vmatpush1.msra.mxu0 %v60
  %670 = vmatprep.subr.mxu0 0.0
  %671 = vmatpush1.msra.mxu0 %v61
  %672 = vmatprep.subr.mxu0 0.0
  %673 = vmatpush1.msra.mxu0 %v62
  %674 = vmatprep.subr.mxu0 0.0
  %675 = vmatpush1.msra.mxu0 %v63
  %676 = vmatprep.subr.mxu0 0.0
  %677 = vmatpush1.msra.mxu0 %v64
  %678 = vmatprep.subr.mxu0 0.0
  %679 = vmatpush1.msra.mxu0 %v65
  %680 = vmatprep.subr.mxu0 0.0
  %681 = vmatpush1.msra.mxu0 %v66
  %682 = vmatprep.subr.mxu0 0.0
  %683 = vmatpush1.msra.mxu0 %v67
  %684 = vmatprep.subr.mxu0 0.0
  %685 = vmatpush1.msra.mxu0 %v68
  %686 = vmatprep.subr.mxu0 0.0
  %687 = vmatpush1.msra.mxu0 %v69
  %688 = vmatprep.subr.mxu0 0.0
  %689 = vmatpush1.msra.mxu0 %v70
  %690 = vmatprep.subr.mxu0 0.0
  %691 = vmatpush1.msra.mxu0 %v71
  %692 = vmatprep.subr.mxu0 0.0
  %693 = vmatpush1.msra.mxu0 %v72
  %694 = vmatprep.subr.mxu0 0.0
  %695 = vmatpush1.msra.mxu0 %v73
  %696 = vmatprep.subr.mxu0 0.0
  %697 = vmatpush1.msra.mxu0 %v74
  %698 = vmatprep.subr.mxu0 0.0
  %699 = vmatpush1.msra.mxu0 %v75
  %700 = vmatprep.subr.mxu0 0.0
  %701 = vmatpush1.msra.mxu0 %v76
  %702 = vmatprep.subr.mxu0 0.0
  %703 = vmatpush1.msra.mxu0 %v77
  %704 = vmatprep.mubr.f32.mxu0 %v635
  %705 = vmatmul.mubr.f32.gmra.mrb[0].mxu0 %v634
  %v706 = vpop.f32.mrb[0].mxu0
  %v707 = vadd.f32 %v83, %v706
  %v708 = vpop.f32.mrb[0].mxu0
  %709 = vmatprep.mubr.f32.mxu0 %v637
  %710 = vmatmul.mubr.f32.gmra.mrb[0].mxu0 %v636
  %v711 = vpop.f32.mrb[0].mxu0
  %v712 = vadd.f32 %v83, %v711
  %v713 = vpop.f32.mrb[0].mxu0
  %714 = vmatprep.mubr.f32.mxu0 %v639
  %715 = vmatmul.mubr.f32.gmra.mrb[0].mxu0 %v638
  %v716 = vpop.f32.mrb[0].mxu0
  %v717 = vadd.f32 %v83, %v716
  %v718 = vpop.f32.mrb[0].mxu0
  %719 = vdwg.mxu0
  %v720 = vmax.f32 %v707, 0.0
  %v721 = vmax.f32 %v712, 0.0
  %v722 = vmax.f32 %v717, 0.0
  %s723 = scalar_lea.vmem %s3, 96
  %v724 = vld [vmem:[%s723] sm:$0xff]
  %v725 = vld [vmem:[%s723 + $0x8] sm:$0xff]
  %v726 = vld [vmem:[%s723 + $0x10] sm:$0xff]
  %v727 = vld [vmem:[%s723 + $0x18] sm:$0xff]
  %v729 = vsel %vm267, %v720, 0
  %v732 = vsel %vm267, %v721, 0
  %v735 = vsel %vm267, %v722, 0
  %737 = vmatprep.subr.mxu0 0.0
  %738 = vmatpush1.msra.mxu0 %v724
  %739 = vmatprep.subr.mxu0 0.0
  %740 = vmatpush1.msra.mxu0 %v725
  %741 = vmatprep.subr.mxu0 0.0
  %742 = vmatpush1.msra.mxu0 %v726
  %743 = vmatprep.subr.mxu0 0.0
  %744 = vmatpush1.msra.mxu0 %v727
  %745 = vmatprep.subr.mxu0 0.0
  %746 = vmatpush1.msra.mxu0 0.0
  %747 = vmatprep.subr.mxu0 0.0
  %748 = vmatpush1.msra.mxu0 0.0
  %749 = vmatprep.subr.mxu0 0.0
  %750 = vmatpush1.msra.mxu0 0.0
  %751 = vmatprep.subr.mxu0 0.0
  %752 = vmatpush1.msra.mxu0 0.0
  %753 = vmatprep.subr.mxu0 0.0
  %754 = vmatpush1.msra.mxu0 0.0
  %755 = vmatprep.subr.mxu0 0.0
  %756 = vmatpush1.msra.mxu0 0.0
  %757 = vmatprep.subr.mxu0 0.0
  %758 = vmatpush1.msra.mxu0 0.0
  %759 = vmatprep.subr.mxu0 0.0
  %760 = vmatpush1.msra.mxu0 0.0
  %761 = vmatprep.subr.mxu0 0.0
  %762 = vmatpush1.msra.mxu0 0.0
  %763 = vmatprep.subr.mxu0 0.0
  %764 = vmatpush1.msra.mxu0 0.0
  %765 = vmatprep.subr.mxu0 0.0
  %766 = vmatpush1.msra.mxu0 0.0
  %767 = vmatprep.subr.mxu0 0.0
  %768 = vmatpush1.msra.mxu0 0.0
  %769 = vmatprep.subr.mxu0 0.0
  %770 = vmatpush1.msra.mxu0 0.0
  %771 = vmatprep.subr.mxu0 0.0
  %772 = vmatpush1.msra.mxu0 0.0
  %773 = vmatprep.subr.mxu0 0.0
  %774 = vmatpush1.msra.mxu0 0.0
  %775 = vmatprep.subr.mxu0 0.0
  %776 = vmatpush1.msra.mxu0 0.0
  %777 = vmatprep.subr.mxu0 0.0
  %778 = vmatpush1.msra.mxu0 0.0
  %779 = vmatprep.subr.mxu0 0.0
  %780 = vmatpush1.msra.mxu0 0.0
  %781 = vmatprep.subr.mxu0 0.0
  %782 = vmatpush1.msra.mxu0 0.0
  %783 = vmatprep.subr.mxu0 0.0
  %784 = vmatpush1.msra.mxu0 0.0
  %785 = vmatprep.subr.mxu0 0.0
  %786 = vmatpush1.msra.mxu0 0.0
  %787 = vmatprep.subr.mxu0 0.0
  %788 = vmatpush1.msra.mxu0 0.0
  %789 = vmatprep.subr.mxu0 0.0
  %790 = vmatpush1.msra.mxu0 0.0
  %791 = vmatprep.subr.mxu0 0.0
  %792 = vmatpush1.msra.mxu0 0.0
  %793 = vmatprep.subr.mxu0 0.0
  %794 = vmatpush1.msra.mxu0 0.0
  %795 = vmatprep.subr.mxu0 0.0
  %796 = vmatpush1.msra.mxu0 0.0
  %797 = vmatprep.subr.mxu0 0.0
  %798 = vmatpush1.msra.mxu0 0.0
  %799 = vmatprep.subr.mxu0 0.0
  %800 = vmatpush1.msra.mxu0 0.0
  %801 = vmatprep.mubr.f32.mxu0 0.0
  %802 = vmatmul.mubr.f32.gmra.mrb[0].mxu0 %v729
  %v803 = vpop.f32.mrb[0].mxu0
  %v804 = vadd.f32 0.0, %v803
  %v805 = vpop.f32.mrb[0].mxu0
  %806 = vmatprep.mubr.f32.mxu0 0.0
  %807 = vmatmul.mubr.f32.gmra.mrb[0].mxu0 %v732
  %v808 = vpop.f32.mrb[0].mxu0
  %v809 = vadd.f32 0.0, %v808
  %v810 = vpop.f32.mrb[0].mxu0
  %811 = vmatprep.mubr.f32.mxu0 0.0
  %812 = vmatmul.mubr.f32.gmra.mrb[0].mxu0 %v735
  %v813 = vpop.f32.mrb[0].mxu0
  %v814 = vadd.f32 0.0, %v813
  %v815 = vpop.f32.mrb[0].mxu0
  %816 = vdwg.mxu0
  %v817 = vadd.f32 %v630, %v804
  %v818 = vadd.f32 %v631, %v809
  %v819 = vadd.f32 %v632, %v814
  %s820 = scalar_lea.vmem %s0, 192
  %v821 = vld [vmem:[%s820] sm:$0xff]
  %v822 = vld [vmem:[%s820 + $0x8] sm:$0xff]
  %v823 = vld [vmem:[%s820 + $0x10] sm:$0xff]
  %v824 = vld [vmem:[%s820 + $0x18] sm:$0xff]
  %v825 = vld [vmem:[%s820 + $0x20] sm:$0x3]
  %v826 = vld [vmem:[%s820 + $0x28] sm:$0x3]
  %827 = vmatprep.subr.mxu0 0.0
  %828 = vmatpush1.msra.mxu0 %v46
  %829 = vmatprep.subr.mxu0 0.0
  %830 = vmatpush1.msra.mxu0 %v47
  %831 = vmatprep.subr.mxu0 0.0
  %832 = vmatpush1.msra.mxu0 %v48
  %833 = vmatprep.subr.mxu0 0.0
  %834 = vmatpush1.msra.mxu0 %v49
  %835 = vmatprep.subr.mxu0 0.0
  %836 = vmatpush1.msra.mxu0 %v50
  %837 = vmatprep.subr.mxu0 0.0
  %838 = vmatpush1.msra.mxu0 %v51
  %839 = vmatprep.subr.mxu0 0.0
  %840 = vmatpush1.msra.mxu0 %v52
  %841 = vmatprep.subr.mxu0 0.0
  %842 = vmatpush1.msra.mxu0 %v53
  %843 = vmatprep.subr.mxu0 0.0
  %844 = vmatpush1.msra.mxu0 %v54
  %845 = vmatprep.subr.mxu0 0.0
  %846 = vmatpush1.msra.mxu0 %v55
  %847 = vmatprep.subr.mxu0 0.0
  %848 = vmatpush1.msra.mxu0 %v56
  %849 = vmatprep.subr.mxu0 0.0
  %850 = vmatpush1.msra.mxu0 %v57
  %851 = vmatprep.subr.mxu0 0.0
  %852 = vmatpush1.msra.mxu0 %v58
  %853 = vmatprep.subr.mxu0 0.0
  %854 = vmatpush1.msra.mxu0 %v59
  %855 = vmatprep.subr.mxu0 0.0
  %856 = vmatpush1.msra.mxu0 %v60
  %857 = vmatprep.subr.mxu0 0.0
  %858 = vmatpush1.msra.mxu0 %v61
  %859 = vmatprep.subr.mxu0 0.0
  %860 = vmatpush1.msra.mxu0 %v62
  %861 = vmatprep.subr.mxu0 0.0
  %862 = vmatpush1.msra.mxu0 %v63
  %863 = vmatprep.subr.mxu0 0.0
  %864 = vmatpush1.msra.mxu0 %v64
  %865 = vmatprep.subr.mxu0 0.0
  %866 = vmatpush1.msra.mxu0 %v65
  %867 = vmatprep.subr.mxu0 0.0
  %868 = vmatpush1.msra.mxu0 %v66
  %869 = vmatprep.subr.mxu0 0.0
  %870 = vmatpush1.msra.mxu0 %v67
  %871 = vmatprep.subr.mxu0 0.0
  %872 = vmatpush1.msra.mxu0 %v68
  %873 = vmatprep.subr.mxu0 0.0
  %874 = vmatpush1.msra.mxu0 %v69
  %875 = vmatprep.subr.mxu0 0.0
  %876 = vmatpush1.msra.mxu0 %v70
  %877 = vmatprep.subr.mxu0 0.0
  %878 = vmatpush1.msra.mxu0 %v71
  %879 = vmatprep.subr.mxu0 0.0
  %880 = vmatpush1.msra.mxu0 %v72
  %881 = vmatprep.subr.mxu0 0.0
  %882 = vmatpush1.msra.mxu0 %v73
  %883 = vmatprep.subr.mxu0 0.0
  %884 = vmatpush1.msra.mxu0 %v74
  %885 = vmatprep.subr.mxu0 0.0
  %886 = vmatpush1.msra.mxu0 %v75
  %887 = vmatprep.subr.mxu0 0.0
  %888 = vmatpush1.msra.mxu0 %v76
  %889 = vmatprep.subr.mxu0 0.0
  %890 = vmatpush1.msra.mxu0 %v77
  %891 = vmatprep.mubr.f32.mxu0 %v822
  %892 = vmatmul.mubr.f32.gmra.mrb[0].mxu0 %v821
  %v893 = vpop.f32.mrb[0].mxu0
  %v894 = vadd.f32 %v83, %v893
  %v895 = vpop.f32.mrb[0].mxu0
  %896 = vmatprep.mubr.f32.mxu0 %v824
  %897 = vmatmul.mubr.f32.gmra.mrb[0].mxu0 %v823
  %v898 = vpop.f32.mrb[0].mxu0
  %v899 = vadd.f32 %v83, %v898
  %v900 = vpop.f32.mrb[0].mxu0
  %901 = vmatprep.mubr.f32.mxu0 %v826
  %902 = vmatmul.mubr.f32.gmra.mrb[0].mxu0 %v825
  %v903 = vpop.f32.mrb[0].mxu0
  %v904 = vadd.f32 %v83, %v903
  %v905 = vpop.f32.mrb[0].mxu0
  %906 = vdwg.mxu0
  %v907 = vmax.f32 %v894, 0.0
  %v908 = vmax.f32 %v899, 0.0
  %v909 = vmax.f32 %v904, 0.0
  %s910 = scalar_lea.vmem %s3, 128
  %v911 = vld [vmem:[%s910] sm:$0xff]
  %v912 = vld [vmem:[%s910 + $0x8] sm:$0xff]
  %v913 = vld [vmem:[%s910 + $0x10] sm:$0xff]
  %v914 = vld [vmem:[%s910 + $0x18] sm:$0xff]
  %v916 = vsel %vm267, %v907, 0
  %v919 = vsel %vm267, %v908, 0
  %v922 = vsel %vm267, %v909, 0
  %924 = vmatprep.subr.mxu0 0.0
  %925 = vmatpush1.msra.mxu0 %v911
  %926 = vmatprep.subr.mxu0 0.0
  %927 = vmatpush1.msra.mxu0 %v912
  %928 = vmatprep.subr.mxu0 0.0
  %929 = vmatpush1.msra.mxu0 %v913
  %930 = vmatprep.subr.mxu0 0.0
  %931 = vmatpush1.msra.mxu0 %v914
  %932 = vmatprep.subr.mxu0 0.0
  %933 = vmatpush1.msra.mxu0 0.0
  %934 = vmatprep.subr.mxu0 0.0
  %935 = vmatpush1.msra.mxu0 0.0
  %936 = vmatprep.subr.mxu0 0.0
  %937 = vmatpush1.msra.mxu0 0.0
  %938 = vmatprep.subr.mxu0 0.0
  %939 = vmatpush1.msra.mxu0 0.0
  %940 = vmatprep.subr.mxu0 0.0
  %941 = vmatpush1.msra.mxu0 0.0
  %942 = vmatprep.subr.mxu0 0.0
  %943 = vmatpush1.msra.mxu0 0.0
  %944 = vmatprep.subr.mxu0 0.0
  %945 = vmatpush1.msra.mxu0 0.0
  %946 = vmatprep.subr.mxu0 0.0
  %947 = vmatpush1.msra.mxu0 0.0
  %948 = vmatprep.subr.mxu0 0.0
  %949 = vmatpush1.msra.mxu0 0.0
  %950 = vmatprep.subr.mxu0 0.0
  %951 = vmatpush1.msra.mxu0 0.0
  %952 = vmatprep.subr.mxu0 0.0
  %953 = vmatpush1.msra.mxu0 0.0
  %954 = vmatprep.subr.mxu0 0.0
  %955 = vmatpush1.msra.mxu0 0.0
  %956 = vmatprep.subr.mxu0 0.0
  %957 = vmatpush1.msra.mxu0 0.0
  %958 = vmatprep.subr.mxu0 0.0
  %959 = vmatpush1.msra.mxu0 0.0
  %960 = vmatprep.subr.mxu0 0.0
  %961 = vmatpush1.msra.mxu0 0.0
  %962 = vmatprep.subr.mxu0 0.0
  %963 = vmatpush1.msra.mxu0 0.0
  %964 = vmatprep.subr.mxu0 0.0
  %965 = vmatpush1.msra.mxu0 0.0
  %966 = vmatprep.subr.mxu0 0.0
  %967 = vmatpush1.msra.mxu0 0.0
  %968 = vmatprep.subr.mxu0 0.0
  %969 = vmatpush1.msra.mxu0 0.0
  %970 = vmatprep.subr.mxu0 0.0
  %971 = vmatpush1.msra.mxu0 0.0
  %972 = vmatprep.subr.mxu0 0.0
  %973 = vmatpush1.msra.mxu0 0.0
  %974 = vmatprep.subr.mxu0 0.0
  %975 = vmatpush1.msra.mxu0 0.0
  %976 = vmatprep.subr.mxu0 0.0
  %977 = vmatpush1.msra.mxu0 0.0
  %978 = vmatprep.subr.mxu0 0.0
  %979 = vmatpush1.msra.mxu0 0.0
  %980 = vmatprep.subr.mxu0 0.0
  %981 = vmatpush1.msra.mxu0 0.0
  %982 = vmatprep.subr.mxu0 0.0
  %983 = vmatpush1.msra.mxu0 0.0
  %984 = vmatprep.subr.mxu0 0.0
  %985 = vmatpush1.msra.mxu0 0.0
  %986 = vmatprep.subr.mxu0 0.0
  %987 = vmatpush1.msra.mxu0 0.0
  %988 = vmatprep.mubr.f32.mxu0 0.0
  %989 = vmatmul.mubr.f32.gmra.mrb[0].mxu0 %v916
  %v990 = vpop.f32.mrb[0].mxu0
  %v991 = vadd.f32 0.0, %v990
  %v992 = vpop.f32.mrb[0].mxu0
  %993 = vmatprep.mubr.f32.mxu0 0.0
  %994 = vmatmul.mubr.f32.gmra.mrb[0].mxu0 %v919
  %v995 = vpop.f32.mrb[0].mxu0
  %v996 = vadd.f32 0.0, %v995
  %v997 = vpop.f32.mrb[0].mxu0
  %998 = vmatprep.mubr.f32.mxu0 0.0
  %999 = vmatmul.mubr.f32.gmra.mrb[0].mxu0 %v922
  %v1000 = vpop.f32.mrb[0].mxu0
  %v1001 = vadd.f32 0.0, %v1000
  %v1002 = vpop.f32.mrb[0].mxu0
  %1003 = vdwg.mxu0
  %v1004 = vadd.f32 %v817, %v991
  %v1005 = vadd.f32 %v818, %v996
  %v1006 = vadd.f32 %v819, %v1001
  %s1007 = scalar_lea.vmem %s0, 240
  %v1008 = vld [vmem:[%s1007] sm:$0xff]
  %v1009 = vld [vmem:[%s1007 + $0x8] sm:$0xff]
  %v1010 = vld [vmem:[%s1007 + $0x10] sm:$0xff]
  %v1011 = vld [vmem:[%s1007 + $0x18] sm:$0xff]
  %v1012 = vld [vmem:[%s1007 + $0x20] sm:$0x3]
  %v1013 = vld [vmem:[%s1007 + $0x28] sm:$0x3]
  %1014 = vmatprep.subr.mxu0 0.0
  %1015 = vmatpush1.msra.mxu0 %v46
  %1016 = vmatprep.subr.mxu0 0.0
  %1017 = vmatpush1.msra.mxu0 %v47
  %1018 = vmatprep.subr.mxu0 0.0
  %1019 = vmatpush1.msra.mxu0 %v48
  %1020 = vmatprep.subr.mxu0 0.0
  %1021 = vmatpush1.msra.mxu0 %v49
  %1022 = vmatprep.subr.mxu0 0.0
  %1023 = vmatpush1.msra.mxu0 %v50
  %1024 = vmatprep.subr.mxu0 0.0
  %1025 = vmatpush1.msra.mxu0 %v51
  %1026 = vmatprep.subr.mxu0 0.0
  %1027 = vmatpush1.msra.mxu0 %v52
  %1028 = vmatprep.subr.mxu0 0.0
  %1029 = vmatpush1.msra.mxu0 %v53
  %1030 = vmatprep.subr.mxu0 0.0
  %1031 = vmatpush1.msra.mxu0 %v54
  %1032 = vmatprep.subr.mxu0 0.0
  %1033 = vmatpush1.msra.mxu0 %v55
  %1034 = vmatprep.subr.mxu0 0.0
  %1035 = vmatpush1.msra.mxu0 %v56
  %1036 = vmatprep.subr.mxu0 0.0
  %1037 = vmatpush1.msra.mxu0 %v57
  %1038 = vmatprep.subr.mxu0 0.0
  %1039 = vmatpush1.msra.mxu0 %v58
  %1040 = vmatprep.subr.mxu0 0.0
  %1041 = vmatpush1.msra.mxu0 %v59
  %1042 = vmatprep.subr.mxu0 0.0
  %1043 = vmatpush1.msra.mxu0 %v60
  %1044 = vmatprep.subr.mxu0 0.0
  %1045 = vmatpush1.msra.mxu0 %v61
  %1046 = vmatprep.subr.mxu0 0.0
  %1047 = vmatpush1.msra.mxu0 %v62
  %1048 = vmatprep.subr.mxu0 0.0
  %1049 = vmatpush1.msra.mxu0 %v63
  %1050 = vmatprep.subr.mxu0 0.0
  %1051 = vmatpush1.msra.mxu0 %v64
  %1052 = vmatprep.subr.mxu0 0.0
  %1053 = vmatpush1.msra.mxu0 %v65
  %1054 = vmatprep.subr.mxu0 0.0
  %1055 = vmatpush1.msra.mxu0 %v66
  %1056 = vmatprep.subr.mxu0 0.0
  %1057 = vmatpush1.msra.mxu0 %v67
  %1058 = vmatprep.subr.mxu0 0.0
  %1059 = vmatpush1.msra.mxu0 %v68
  %1060 = vmatprep.subr.mxu0 0.0
  %1061 = vmatpush1.msra.mxu0 %v69
  %1062 = vmatprep.subr.mxu0 0.0
  %1063 = vmatpush1.msra.mxu0 %v70
  %1064 = vmatprep.subr.mxu0 0.0
  %1065 = vmatpush1.msra.mxu0 %v71
  %1066 = vmatprep.subr.mxu0 0.0
  %1067 = vmatpush1.msra.mxu0 %v72
  %1068 = vmatprep.subr.mxu0 0.0
  %1069 = vmatpush1.msra.mxu0 %v73
  %1070 = vmatprep.subr.mxu0 0.0
  %1071 = vmatpush1.msra.mxu0 %v74
  %1072 = vmatprep.subr.mxu0 0.0
  %1073 = vmatpush1.msra.mxu0 %v75
  %1074 = vmatprep.subr.mxu0 0.0
  %1075 = vmatpush1.msra.mxu0 %v76
  %1076 = vmatprep.subr.mxu0 0.0
  %1077 = vmatpush1.msra.mxu0 %v77
  %1078 = vmatprep.mubr.f32.mxu0 %v1009
  %1079 = vmatmul.mubr.f32.gmra.mrb[0].mxu0 %v1008
  %v1080 = vpop.f32.mrb[0].mxu0
  %v1081 = vadd.f32 %v83, %v1080
  %v1082 = vpop.f32.mrb[0].mxu0
  %1083 = vmatprep.mubr.f32.mxu0 %v1011
  %1084 = vmatmul.mubr.f32.gmra.mrb[0].mxu0 %v1010
  %v1085 = vpop.f32.mrb[0].mxu0
  %v1086 = vadd.f32 %v83, %v1085
  %v1087 = vpop.f32.mrb[0].mxu0
  %1088 = vmatprep.mubr.f32.mxu0 %v1013
  %1089 = vmatmul.mubr.f32.gmra.mrb[0].mxu0 %v1012
  %v1090 = vpop.f32.mrb[0].mxu0
  %v1091 = vadd.f32 %v83, %v1090
  %v1092 = vpop.f32.mrb[0].mxu0
  %1093 = vdwg.mxu0
  %v1094 = vmax.f32 %v1081, 0.0
  %v1095 = vmax.f32 %v1086, 0.0
  %v1096 = vmax.f32 %v1091, 0.0
  %s1097 = scalar_lea.vmem %s3, 160
  %v1098 = vld [vmem:[%s1097] sm:$0xff]
  %v1099 = vld [vmem:[%s1097 + $0x8] sm:$0xff]
  %v1100 = vld [vmem:[%s1097 + $0x10] sm:$0xff]
  %v1101 = vld [vmem:[%s1097 + $0x18] sm:$0xff]
  %v1103 = vsel %vm267, %v1094, 0
  %v1106 = vsel %vm267, %v1095, 0
  %v1109 = vsel %vm267, %v1096, 0
  %1111 = vmatprep.subr.mxu0 0.0
  %1112 = vmatpush1.msra.mxu0 %v1098
  %1113 = vmatprep.subr.mxu0 0.0
  %1114 = vmatpush1.msra.mxu0 %v1099
  %1115 = vmatprep.subr.mxu0 0.0
  %1116 = vmatpush1.msra.mxu0 %v1100
  %1117 = vmatprep.subr.mxu0 0.0
  %1118 = vmatpush1.msra.mxu0 %v1101
  %1119 = vmatprep.subr.mxu0 0.0
  %1120 = vmatpush1.msra.mxu0 0.0
  %1121 = vmatprep.subr.mxu0 0.0
  %1122 = vmatpush1.msra.mxu0 0.0
  %1123 = vmatprep.subr.mxu0 0.0
  %1124 = vmatpush1.msra.mxu0 0.0
  %1125 = vmatprep.subr.mxu0 0.0
  %1126 = vmatpush1.msra.mxu0 0.0
  %1127 = vmatprep.subr.mxu0 0.0
  %1128 = vmatpush1.msra.mxu0 0.0
  %1129 = vmatprep.subr.mxu0 0.0
  %1130 = vmatpush1.msra.mxu0 0.0
  %1131 = vmatprep.subr.mxu0 0.0
  %1132 = vmatpush1.msra.mxu0 0.0
  %1133 = vmatprep.subr.mxu0 0.0
  %1134 = vmatpush1.msra.mxu0 0.0
  %1135 = vmatprep.subr.mxu0 0.0
  %1136 = vmatpush1.msra.mxu0 0.0
  %1137 = vmatprep.subr.mxu0 0.0
  %1138 = vmatpush1.msra.mxu0 0.0
  %1139 = vmatprep.subr.mxu0 0.0
  %1140 = vmatpush1.msra.mxu0 0.0
  %1141 = vmatprep.subr.mxu0 0.0
  %1142 = vmatpush1.msra.mxu0 0.0
  %1143 = vmatprep.subr.mxu0 0.0
  %1144 = vmatpush1.msra.mxu0 0.0
  %1145 = vmatprep.subr.mxu0 0.0
  %1146 = vmatpush1.msra.mxu0 0.0
  %1147 = vmatprep.subr.mxu0 0.0
  %1148 = vmatpush1.msra.mxu0 0.0
  %1149 = vmatprep.subr.mxu0 0.0
  %1150 = vmatpush1.msra.mxu0 0.0
  %1151 = vmatprep.subr.mxu0 0.0
  %1152 = vmatpush1.msra.mxu0 0.0
  %1153 = vmatprep.subr.mxu0 0.0
  %1154 = vmatpush1.msra.mxu0 0.0
  %1155 = vmatprep.subr.mxu0 0.0
  %1156 = vmatpush1.msra.mxu0 0.0
  %1157 = vmatprep.subr.mxu0 0.0
  %1158 = vmatpush1.msra.mxu0 0.0
  %1159 = vmatprep.subr.mxu0 0.0
  %1160 = vmatpush1.msra.mxu0 0.0
  %1161 = vmatprep.subr.mxu0 0.0
  %1162 = vmatpush1.msra.mxu0 0.0
  %1163 = vmatprep.subr.mxu0 0.0
  %1164 = vmatpush1.msra.mxu0 0.0
  %1165 = vmatprep.subr.mxu0 0.0
  %1166 = vmatpush1.msra.mxu0 0.0
  %1167 = vmatprep.subr.mxu0 0.0
  %1168 = vmatpush1.msra.mxu0 0.0
  %1169 = vmatprep.subr.mxu0 0.0
  %1170 = vmatpush1.msra.mxu0 0.0
  %1171 = vmatprep.subr.mxu0 0.0
  %1172 = vmatpush1.msra.mxu0 0.0
  %1173 = vmatprep.subr.mxu0 0.0
  %1174 = vmatpush1.msra.mxu0 0.0
  %1175 = vmatprep.mubr.f32.mxu0 0.0
  %1176 = vmatmul.mubr.f32.gmra.mrb[0].mxu0 %v1103
  %v1177 = vpop.f32.mrb[0].mxu0
  %v1178 = vadd.f32 0.0, %v1177
  %v1179 = vpop.f32.mrb[0].mxu0
  %1180 = vmatprep.mubr.f32.mxu0 0.0
  %1181 = vmatmul.mubr.f32.gmra.mrb[0].mxu0 %v1106
  %v1182 = vpop.f32.mrb[0].mxu0
  %v1183 = vadd.f32 0.0, %v1182
  %v1184 = vpop.f32.mrb[0].mxu0
  %1185 = vmatprep.mubr.f32.mxu0 0.0
  %1186 = vmatmul.mubr.f32.gmra.mrb[0].mxu0 %v1109
  %v1187 = vpop.f32.mrb[0].mxu0
  %v1188 = vadd.f32 0.0, %v1187
  %v1189 = vpop.f32.mrb[0].mxu0
  %1190 = vdwg.mxu0
  %v1191 = vadd.f32 %v1004, %v1178
  %v1192 = vadd.f32 %v1005, %v1183
  %v1193 = vadd.f32 %v1006, %v1188
  %s1194 = scalar_lea.vmem %s0, 288
  %v1195 = vld [vmem:[%s1194] sm:$0xff]
  %v1196 = vld [vmem:[%s1194 + $0x8] sm:$0xff]
  %v1197 = vld [vmem:[%s1194 + $0x10] sm:$0xff]
  %v1198 = vld [vmem:[%s1194 + $0x18] sm:$0xff]
  %v1199 = vld [vmem:[%s1194 + $0x20] sm:$0x3]
  %v1200 = vld [vmem:[%s1194 + $0x28] sm:$0x3]
  %1201 = vmatprep.subr.mxu0 0.0
  %1202 = vmatpush1.msra.mxu0 %v46
  %1203 = vmatprep.subr.mxu0 0.0
  %1204 = vmatpush1.msra.mxu0 %v47
  %1205 = vmatprep.subr.mxu0 0.0
  %1206 = vmatpush1.msra.mxu0 %v48
  %1207 = vmatprep.subr.mxu0 0.0
  %1208 = vmatpush1.msra.mxu0 %v49
  %1209 = vmatprep.subr.mxu0 0.0
  %1210 = vmatpush1.msra.mxu0 %v50
  %1211 = vmatprep.subr.mxu0 0.0
  %1212 = vmatpush1.msra.mxu0 %v51
  %1213 = vmatprep.subr.mxu0 0.0
  %1214 = vmatpush1.msra.mxu0 %v52
  %1215 = vmatprep.subr.mxu0 0.0
  %1216 = vmatpush1.msra.mxu0 %v53
  %1217 = vmatprep.subr.mxu0 0.0
  %1218 = vmatpush1.msra.mxu0 %v54
  %1219 = vmatprep.subr.mxu0 0.0
  %1220 = vmatpush1.msra.mxu0 %v55
  %1221 = vmatprep.subr.mxu0 0.0
  %1222 = vmatpush1.msra.mxu0 %v56
  %1223 = vmatprep.subr.mxu0 0.0
  %1224 = vmatpush1.msra.mxu0 %v57
  %1225 = vmatprep.subr.mxu0 0.0
  %1226 = vmatpush1.msra.mxu0 %v58
  %1227 = vmatprep.subr.mxu0 0.0
  %1228 = vmatpush1.msra.mxu0 %v59
  %1229 = vmatprep.subr.mxu0 0.0
  %1230 = vmatpush1.msra.mxu0 %v60
  %1231 = vmatprep.subr.mxu0 0.0
  %1232 = vmatpush1.msra.mxu0 %v61
  %1233 = vmatprep.subr.mxu0 0.0
  %1234 = vmatpush1.msra.mxu0 %v62
  %1235 = vmatprep.subr.mxu0 0.0
  %1236 = vmatpush1.msra.mxu0 %v63
  %1237 = vmatprep.subr.mxu0 0.0
  %1238 = vmatpush1.msra.mxu0 %v64
  %1239 = vmatprep.subr.mxu0 0.0
  %1240 = vmatpush1.msra.mxu0 %v65
  %1241 = vmatprep.subr.mxu0 0.0
  %1242 = vmatpush1.msra.mxu0 %v66
  %1243 = vmatprep.subr.mxu0 0.0
  %1244 = vmatpush1.msra.mxu0 %v67
  %1245 = vmatprep.subr.mxu0 0.0
  %1246 = vmatpush1.msra.mxu0 %v68
  %1247 = vmatprep.subr.mxu0 0.0
  %1248 = vmatpush1.msra.mxu0 %v69
  %1249 = vmatprep.subr.mxu0 0.0
  %1250 = vmatpush1.msra.mxu0 %v70
  %1251 = vmatprep.subr.mxu0 0.0
  %1252 = vmatpush1.msra.mxu0 %v71
  %1253 = vmatprep.subr.mxu0 0.0
  %1254 = vmatpush1.msra.mxu0 %v72
  %1255 = vmatprep.subr.mxu0 0.0
  %1256 = vmatpush1.msra.mxu0 %v73
  %1257 = vmatprep.subr.mxu0 0.0
  %1258 = vmatpush1.msra.mxu0 %v74
  %1259 = vmatprep.subr.mxu0 0.0
  %1260 = vmatpush1.msra.mxu0 %v75
  %1261 = vmatprep.subr.mxu0 0.0
  %1262 = vmatpush1.msra.mxu0 %v76
  %1263 = vmatprep.subr.mxu0 0.0
  %1264 = vmatpush1.msra.mxu0 %v77
  %1265 = vmatprep.mubr.f32.mxu0 %v1196
  %1266 = vmatmul.mubr.f32.gmra.mrb[0].mxu0 %v1195
  %v1267 = vpop.f32.mrb[0].mxu0
  %v1268 = vadd.f32 %v83, %v1267
  %v1269 = vpop.f32.mrb[0].mxu0
  %1270 = vmatprep.mubr.f32.mxu0 %v1198
  %1271 = vmatmul.mubr.f32.gmra.mrb[0].mxu0 %v1197
  %v1272 = vpop.f32.mrb[0].mxu0
  %v1273 = vadd.f32 %v83, %v1272
  %v1274 = vpop.f32.mrb[0].mxu0
  %1275 = vmatprep.mubr.f32.mxu0 %v1200
  %1276 = vmatmul.mubr.f32.gmra.mrb[0].mxu0 %v1199
  %v1277 = vpop.f32.mrb[0].mxu0
  %v1278 = vadd.f32 %v83, %v1277
  %v1279 = vpop.f32.mrb[0].mxu0
  %1280 = vdwg.mxu0
  %v1281 = vmax.f32 %v1268, 0.0
  %v1282 = vmax.f32 %v1273, 0.0
  %v1283 = vmax.f32 %v1278, 0.0
  %s1284 = scalar_lea.vmem %s3, 192
  %v1285 = vld [vmem:[%s1284] sm:$0xff]
  %v1286 = vld [vmem:[%s1284 + $0x8] sm:$0xff]
  %v1287 = vld [vmem:[%s1284 + $0x10] sm:$0xff]
  %v1288 = vld [vmem:[%s1284 + $0x18] sm:$0xff]
  %v1290 = vsel %vm267, %v1281, 0
  %v1293 = vsel %vm267, %v1282, 0
  %v1296 = vsel %vm267, %v1283, 0
  %1298 = vmatprep.subr.mxu0 0.0
  %1299 = vmatpush1.msra.mxu0 %v1285
  %1300 = vmatprep.subr.mxu0 0.0
  %1301 = vmatpush1.msra.mxu0 %v1286
  %1302 = vmatprep.subr.mxu0 0.0
  %1303 = vmatpush1.msra.mxu0 %v1287
  %1304 = vmatprep.subr.mxu0 0.0
  %1305 = vmatpush1.msra.mxu0 %v1288
  %1306 = vmatprep.subr.mxu0 0.0
  %1307 = vmatpush1.msra.mxu0 0.0
  %1308 = vmatprep.subr.mxu0 0.0
  %1309 = vmatpush1.msra.mxu0 0.0
  %1310 = vmatprep.subr.mxu0 0.0
  %1311 = vmatpush1.msra.mxu0 0.0
  %1312 = vmatprep.subr.mxu0 0.0
  %1313 = vmatpush1.msra.mxu0 0.0
  %1314 = vmatprep.subr.mxu0 0.0
  %1315 = vmatpush1.msra.mxu0 0.0
  %1316 = vmatprep.subr.mxu0 0.0
  %1317 = vmatpush1.msra.mxu0 0.0
  %1318 = vmatprep.subr.mxu0 0.0
  %1319 = vmatpush1.msra.mxu0 0.0
  %1320 = vmatprep.subr.mxu0 0.0
  %1321 = vmatpush1.msra.mxu0 0.0
  %1322 = vmatprep.subr.mxu0 0.0
  %1323 = vmatpush1.msra.mxu0 0.0
  %1324 = vmatprep.subr.mxu0 0.0
  %1325 = vmatpush1.msra.mxu0 0.0
  %1326 = vmatprep.subr.mxu0 0.0
  %1327 = vmatpush1.msra.mxu0 0.0
  %1328 = vmatprep.subr.mxu0 0.0
  %1329 = vmatpush1.msra.mxu0 0.0
  %1330 = vmatprep.subr.mxu0 0.0
  %1331 = vmatpush1.msra.mxu0 0.0
  %1332 = vmatprep.subr.mxu0 0.0
  %1333 = vmatpush1.msra.mxu0 0.0
  %1334 = vmatprep.subr.mxu0 0.0
  %1335 = vmatpush1.msra.mxu0 0.0
  %1336 = vmatprep.subr.mxu0 0.0
  %1337 = vmatpush1.msra.mxu0 0.0
  %1338 = vmatprep.subr.mxu0 0.0
  %1339 = vmatpush1.msra.mxu0 0.0
  %1340 = vmatprep.subr.mxu0 0.0
  %1341 = vmatpush1.msra.mxu0 0.0
  %1342 = vmatprep.subr.mxu0 0.0
  %1343 = vmatpush1.msra.mxu0 0.0
  %1344 = vmatprep.subr.mxu0 0.0
  %1345 = vmatpush1.msra.mxu0 0.0
  %1346 = vmatprep.subr.mxu0 0.0
  %1347 = vmatpush1.msra.mxu0 0.0
  %1348 = vmatprep.subr.mxu0 0.0
  %1349 = vmatpush1.msra.mxu0 0.0
  %1350 = vmatprep.subr.mxu0 0.0
  %1351 = vmatpush1.msra.mxu0 0.0
  %1352 = vmatprep.subr.mxu0 0.0
  %1353 = vmatpush1.msra.mxu0 0.0
  %1354 = vmatprep.subr.mxu0 0.0
  %1355 = vmatpush1.msra.mxu0 0.0
  %1356 = vmatprep.subr.mxu0 0.0
  %1357 = vmatpush1.msra.mxu0 0.0
  %1358 = vmatprep.subr.mxu0 0.0
  %1359 = vmatpush1.msra.mxu0 0.0
  %1360 = vmatprep.subr.mxu0 0.0
  %1361 = vmatpush1.msra.mxu0 0.0
  %1362 = vmatprep.mubr.f32.mxu0 0.0
  %1363 = vmatmul.mubr.f32.gmra.mrb[0].mxu0 %v1290
  %v1364 = vpop.f32.mrb[0].mxu0
  %v1365 = vadd.f32 0.0, %v1364
  %v1366 = vpop.f32.mrb[0].mxu0
  %1367 = vmatprep.mubr.f32.mxu0 0.0
  %1368 = vmatmul.mubr.f32.gmra.mrb[0].mxu0 %v1293
  %v1369 = vpop.f32.mrb[0].mxu0
  %v1370 = vadd.f32 0.0, %v1369
  %v1371 = vpop.f32.mrb[0].mxu0
  %1372 = vmatprep.mubr.f32.mxu0 0.0
  %1373 = vmatmul.mubr.f32.gmra.mrb[0].mxu0 %v1296
  %v1374 = vpop.f32.mrb[0].mxu0
  %v1375 = vadd.f32 0.0, %v1374
  %v1376 = vpop.f32.mrb[0].mxu0
  %1377 = vdwg.mxu0
  %v1378 = vadd.f32 %v1191, %v1365
  %v1379 = vadd.f32 %v1192, %v1370
  %v1380 = vadd.f32 %v1193, %v1375
  %s1381 = scalar_lea.vmem %s0, 336
  %v1382 = vld [vmem:[%s1381] sm:$0xff]
  %v1383 = vld [vmem:[%s1381 + $0x8] sm:$0xff]
  %v1384 = vld [vmem:[%s1381 + $0x10] sm:$0xff]
  %v1385 = vld [vmem:[%s1381 + $0x18] sm:$0xff]
  %v1386 = vld [vmem:[%s1381 + $0x20] sm:$0x3]
  %v1387 = vld [vmem:[%s1381 + $0x28] sm:$0x3]
  %1388 = vmatprep.subr.mxu0 0.0
  %1389 = vmatpush1.msra.mxu0 %v46
  %1390 = vmatprep.subr.mxu0 0.0
  %1391 = vmatpush1.msra.mxu0 %v47
  %1392 = vmatprep.subr.mxu0 0.0
  %1393 = vmatpush1.msra.mxu0 %v48
  %1394 = vmatprep.subr.mxu0 0.0
  %1395 = vmatpush1.msra.mxu0 %v49
  %1396 = vmatprep.subr.mxu0 0.0
  %1397 = vmatpush1.msra.mxu0 %v50
  %1398 = vmatprep.subr.mxu0 0.0
  %1399 = vmatpush1.msra.mxu0 %v51
  %1400 = vmatprep.subr.mxu0 0.0
  %1401 = vmatpush1.msra.mxu0 %v52
  %1402 = vmatprep.subr.mxu0 0.0
  %1403 = vmatpush1.msra.mxu0 %v53
  %1404 = vmatprep.subr.mxu0 0.0
  %1405 = vmatpush1.msra.mxu0 %v54
  %1406 = vmatprep.subr.mxu0 0.0
  %1407 = vmatpush1.msra.mxu0 %v55
  %1408 = vmatprep.subr.mxu0 0.0
  %1409 = vmatpush1.msra.mxu0 %v56
  %1410 = vmatprep.subr.mxu0 0.0
  %1411 = vmatpush1.msra.mxu0 %v57
  %1412 = vmatprep.subr.mxu0 0.0
  %1413 = vmatpush1.msra.mxu0 %v58
  %1414 = vmatprep.subr.mxu0 0.0
  %1415 = vmatpush1.msra.mxu0 %v59
  %1416 = vmatprep.subr.mxu0 0.0
  %1417 = vmatpush1.msra.mxu0 %v60
  %1418 = vmatprep.subr.mxu0 0.0
  %1419 = vmatpush1.msra.mxu0 %v61
  %1420 = vmatprep.subr.mxu0 0.0
  %1421 = vmatpush1.msra.mxu0 %v62
  %1422 = vmatprep.subr.mxu0 0.0
  %1423 = vmatpush1.msra.mxu0 %v63
  %1424 = vmatprep.subr.mxu0 0.0
  %1425 = vmatpush1.msra.mxu0 %v64
  %1426 = vmatprep.subr.mxu0 0.0
  %1427 = vmatpush1.msra.mxu0 %v65
  %1428 = vmatprep.subr.mxu0 0.0
  %1429 = vmatpush1.msra.mxu0 %v66
  %1430 = vmatprep.subr.mxu0 0.0
  %1431 = vmatpush1.msra.mxu0 %v67
  %1432 = vmatprep.subr.mxu0 0.0
  %1433 = vmatpush1.msra.mxu0 %v68
  %1434 = vmatprep.subr.mxu0 0.0
  %1435 = vmatpush1.msra.mxu0 %v69
  %1436 = vmatprep.subr.mxu0 0.0
  %1437 = vmatpush1.msra.mxu0 %v70
  %1438 = vmatprep.subr.mxu0 0.0
  %1439 = vmatpush1.msra.mxu0 %v71
  %1440 = vmatprep.subr.mxu0 0.0
  %1441 = vmatpush1.msra.mxu0 %v72
  %1442 = vmatprep.subr.mxu0 0.0
  %1443 = vmatpush1.msra.mxu0 %v73
  %1444 = vmatprep.subr.mxu0 0.0
  %1445 = vmatpush1.msra.mxu0 %v74
  %1446 = vmatprep.subr.mxu0 0.0
  %1447 = vmatpush1.msra.mxu0 %v75
  %1448 = vmatprep.subr.mxu0 0.0
  %1449 = vmatpush1.msra.mxu0 %v76
  %1450 = vmatprep.subr.mxu0 0.0
  %1451 = vmatpush1.msra.mxu0 %v77
  %1452 = vmatprep.mubr.f32.mxu0 %v1383
  %1453 = vmatmul.mubr.f32.gmra.mrb[0].mxu0 %v1382
  %v1454 = vpop.f32.mrb[0].mxu0
  %v1455 = vadd.f32 %v83, %v1454
  %v1456 = vpop.f32.mrb[0].mxu0
  %1457 = vmatprep.mubr.f32.mxu0 %v1385
  %1458 = vmatmul.mubr.f32.gmra.mrb[0].mxu0 %v1384
  %v1459 = vpop.f32.mrb[0].mxu0
  %v1460 = vadd.f32 %v83, %v1459
  %v1461 = vpop.f32.mrb[0].mxu0
  %1462 = vmatprep.mubr.f32.mxu0 %v1387
  %1463 = vmatmul.mubr.f32.gmra.mrb[0].mxu0 %v1386
  %v1464 = vpop.f32.mrb[0].mxu0
  %v1465 = vadd.f32 %v83, %v1464
  %v1466 = vpop.f32.mrb[0].mxu0
  %1467 = vdwg.mxu0
  %v1468 = vmax.f32 %v1455, 0.0
  %v1469 = vmax.f32 %v1460, 0.0
  %v1470 = vmax.f32 %v1465, 0.0
  %s1471 = scalar_lea.vmem %s3, 224
  %v1472 = vld [vmem:[%s1471] sm:$0xff]
  %v1473 = vld [vmem:[%s1471 + $0x8] sm:$0xff]
  %v1474 = vld [vmem:[%s1471 + $0x10] sm:$0xff]
  %v1475 = vld [vmem:[%s1471 + $0x18] sm:$0xff]
  %v1477 = vsel %vm267, %v1468, 0
  %v1480 = vsel %vm267, %v1469, 0
  %v1483 = vsel %vm267, %v1470, 0
  %1485 = vmatprep.subr.mxu0 0.0
  %1486 = vmatpush1.msra.mxu0 %v1472
  %1487 = vmatprep.subr.mxu0 0.0
  %1488 = vmatpush1.msra.mxu0 %v1473
  %1489 = vmatprep.subr.mxu0 0.0
  %1490 = vmatpush1.msra.mxu0 %v1474
  %1491 = vmatprep.subr.mxu0 0.0
  %1492 = vmatpush1.msra.mxu0 %v1475
  %1493 = vmatprep.subr.mxu0 0.0
  %1494 = vmatpush1.msra.mxu0 0.0
  %1495 = vmatprep.subr.mxu0 0.0
  %1496 = vmatpush1.msra.mxu0 0.0
  %1497 = vmatprep.subr.mxu0 0.0
  %1498 = vmatpush1.msra.mxu0 0.0
  %1499 = vmatprep.subr.mxu0 0.0
  %1500 = vmatpush1.msra.mxu0 0.0
  %1501 = vmatprep.subr.mxu0 0.0
  %1502 = vmatpush1.msra.mxu0 0.0
  %1503 = vmatprep.subr.mxu0 0.0
  %1504 = vmatpush1.msra.mxu0 0.0
  %1505 = vmatprep.subr.mxu0 0.0
  %1506 = vmatpush1.msra.mxu0 0.0
  %1507 = vmatprep.subr.mxu0 0.0
  %1508 = vmatpush1.msra.mxu0 0.0
  %1509 = vmatprep.subr.mxu0 0.0
  %1510 = vmatpush1.msra.mxu0 0.0
  %1511 = vmatprep.subr.mxu0 0.0
  %1512 = vmatpush1.msra.mxu0 0.0
  %1513 = vmatprep.subr.mxu0 0.0
  %1514 = vmatpush1.msra.mxu0 0.0
  %1515 = vmatprep.subr.mxu0 0.0
  %1516 = vmatpush1.msra.mxu0 0.0
  %1517 = vmatprep.subr.mxu0 0.0
  %1518 = vmatpush1.msra.mxu0 0.0
  %1519 = vmatprep.subr.mxu0 0.0
  %1520 = vmatpush1.msra.mxu0 0.0
  %1521 = vmatprep.subr.mxu0 0.0
  %1522 = vmatpush1.msra.mxu0 0.0
  %1523 = vmatprep.subr.mxu0 0.0
  %1524 = vmatpush1.msra.mxu0 0.0
  %1525 = vmatprep.subr.mxu0 0.0
  %1526 = vmatpush1.msra.mxu0 0.0
  %1527 = vmatprep.subr.mxu0 0.0
  %1528 = vmatpush1.msra.mxu0 0.0
  %1529 = vmatprep.subr.mxu0 0.0
  %1530 = vmatpush1.msra.mxu0 0.0
  %1531 = vmatprep.subr.mxu0 0.0
  %1532 = vmatpush1.msra.mxu0 0.0
  %1533 = vmatprep.subr.mxu0 0.0
  %1534 = vmatpush1.msra.mxu0 0.0
  %1535 = vmatprep.subr.mxu0 0.0
  %1536 = vmatpush1.msra.mxu0 0.0
  %1537 = vmatprep.subr.mxu0 0.0
  %1538 = vmatpush1.msra.mxu0 0.0
  %1539 = vmatprep.subr.mxu0 0.0
  %1540 = vmatpush1.msra.mxu0 0.0
  %1541 = vmatprep.subr.mxu0 0.0
  %1542 = vmatpush1.msra.mxu0 0.0
  %1543 = vmatprep.subr.mxu0 0.0
  %1544 = vmatpush1.msra.mxu0 0.0
  %1545 = vmatprep.subr.mxu0 0.0
  %1546 = vmatpush1.msra.mxu0 0.0
  %1547 = vmatprep.subr.mxu0 0.0
  %1548 = vmatpush1.msra.mxu0 0.0
  %1549 = vmatprep.mubr.f32.mxu0 0.0
  %1550 = vmatmul.mubr.f32.gmra.mrb[0].mxu0 %v1477
  %v1551 = vpop.f32.mrb[0].mxu0
  %v1552 = vadd.f32 0.0, %v1551
  %v1553 = vpop.f32.mrb[0].mxu0
  %1554 = vmatprep.mubr.f32.mxu0 0.0
  %1555 = vmatmul.mubr.f32.gmra.mrb[0].mxu0 %v1480
  %v1556 = vpop.f32.mrb[0].mxu0
  %v1557 = vadd.f32 0.0, %v1556
  %v1558 = vpop.f32.mrb[0].mxu0
  %1559 = vmatprep.mubr.f32.mxu0 0.0
  %1560 = vmatmul.mubr.f32.gmra.mrb[0].mxu0 %v1483
  %v1561 = vpop.f32.mrb[0].mxu0
  %v1562 = vadd.f32 0.0, %v1561
  %v1563 = vpop.f32.mrb[0].mxu0
  %1564 = vdwg.mxu0
  %v1565 = vadd.f32 %v1378, %v1552
  %v1566 = vadd.f32 %v1379, %v1557
  %v1567 = vadd.f32 %v1380, %v1562
  %s1568 = scalar_lea.vmem %s0, 384
  %v1569 = vld [vmem:[%s1568] sm:$0xff]
  %v1570 = vld [vmem:[%s1568 + $0x8] sm:$0xff]
  %v1571 = vld [vmem:[%s1568 + $0x10] sm:$0xff]
  %v1572 = vld [vmem:[%s1568 + $0x18] sm:$0xff]
  %v1573 = vld [vmem:[%s1568 + $0x20] sm:$0x3]
  %v1574 = vld [vmem:[%s1568 + $0x28] sm:$0x3]
  %1575 = vmatprep.subr.mxu0 0.0
  %1576 = vmatpush1.msra.mxu0 %v46
  %1577 = vmatprep.subr.mxu0 0.0
  %1578 = vmatpush1.msra.mxu0 %v47
  %1579 = vmatprep.subr.mxu0 0.0
  %1580 = vmatpush1.msra.mxu0 %v48
  %1581 = vmatprep.subr.mxu0 0.0
  %1582 = vmatpush1.msra.mxu0 %v49
  %1583 = vmatprep.subr.mxu0 0.0
  %1584 = vmatpush1.msra.mxu0 %v50
  %1585 = vmatprep.subr.mxu0 0.0
  %1586 = vmatpush1.msra.mxu0 %v51
  %1587 = vmatprep.subr.mxu0 0.0
  %1588 = vmatpush1.msra.mxu0 %v52
  %1589 = vmatprep.subr.mxu0 0.0
  %1590 = vmatpush1.msra.mxu0 %v53
  %1591 = vmatprep.subr.mxu0 0.0
  %1592 = vmatpush1.msra.mxu0 %v54
  %1593 = vmatprep.subr.mxu0 0.0
  %1594 = vmatpush1.msra.mxu0 %v55
  %1595 = vmatprep.subr.mxu0 0.0
  %1596 = vmatpush1.msra.mxu0 %v56
  %1597 = vmatprep.subr.mxu0 0.0
  %1598 = vmatpush1.msra.mxu0 %v57
  %1599 = vmatprep.subr.mxu0 0.0
  %1600 = vmatpush1.msra.mxu0 %v58
  %1601 = vmatprep.subr.mxu0 0.0
  %1602 = vmatpush1.msra.mxu0 %v59
  %1603 = vmatprep.subr.mxu0 0.0
  %1604 = vmatpush1.msra.mxu0 %v60
  %1605 = vmatprep.subr.mxu0 0.0
  %1606 = vmatpush1.msra.mxu0 %v61
  %1607 = vmatprep.subr.mxu0 0.0
  %1608 = vmatpush1.msra.mxu0 %v62
  %1609 = vmatprep.subr.mxu0 0.0
  %1610 = vmatpush1.msra.mxu0 %v63
  %1611 = vmatprep.subr.mxu0 0.0
  %1612 = vmatpush1.msra.mxu0 %v64
  %1613 = vmatprep.subr.mxu0 0.0
  %1614 = vmatpush1.msra.mxu0 %v65
  %1615 = vmatprep.subr.mxu0 0.0
  %1616 = vmatpush1.msra.mxu0 %v66
  %1617 = vmatprep.subr.mxu0 0.0
  %1618 = vmatpush1.msra.mxu0 %v67
  %1619 = vmatprep.subr.mxu0 0.0
  %1620 = vmatpush1.msra.mxu0 %v68
  %1621 = vmatprep.subr.mxu0 0.0
  %1622 = vmatpush1.msra.mxu0 %v69
  %1623 = vmatprep.subr.mxu0 0.0
  %1624 = vmatpush1.msra.mxu0 %v70
  %1625 = vmatprep.subr.mxu0 0.0
  %1626 = vmatpush1.msra.mxu0 %v71
  %1627 = vmatprep.subr.mxu0 0.0
  %1628 = vmatpush1.msra.mxu0 %v72
  %1629 = vmatprep.subr.mxu0 0.0
  %1630 = vmatpush1.msra.mxu0 %v73
  %1631 = vmatprep.subr.mxu0 0.0
  %1632 = vmatpush1.msra.mxu0 %v74
  %1633 = vmatprep.subr.mxu0 0.0
  %1634 = vmatpush1.msra.mxu0 %v75
  %1635 = vmatprep.subr.mxu0 0.0
  %1636 = vmatpush1.msra.mxu0 %v76
  %1637 = vmatprep.subr.mxu0 0.0
  %1638 = vmatpush1.msra.mxu0 %v77
  %1639 = vmatprep.mubr.f32.mxu0 %v1570
  %1640 = vmatmul.mubr.f32.gmra.mrb[0].mxu0 %v1569
  %v1641 = vpop.f32.mrb[0].mxu0
  %v1642 = vadd.f32 %v83, %v1641
  %v1643 = vpop.f32.mrb[0].mxu0
  %1644 = vmatprep.mubr.f32.mxu0 %v1572
  %1645 = vmatmul.mubr.f32.gmra.mrb[0].mxu0 %v1571
  %v1646 = vpop.f32.mrb[0].mxu0
  %v1647 = vadd.f32 %v83, %v1646
  %v1648 = vpop.f32.mrb[0].mxu0
  %1649 = vmatprep.mubr.f32.mxu0 %v1574
  %1650 = vmatmul.mubr.f32.gmra.mrb[0].mxu0 %v1573
  %v1651 = vpop.f32.mrb[0].mxu0
  %v1652 = vadd.f32 %v83, %v1651
  %v1653 = vpop.f32.mrb[0].mxu0
  %1654 = vdwg.mxu0
  %v1655 = vmax.f32 %v1642, 0.0
  %v1656 = vmax.f32 %v1647, 0.0
  %v1657 = vmax.f32 %v1652, 0.0
  %s1658 = scalar_lea.vmem %s3, 256
  %v1659 = vld [vmem:[%s1658] sm:$0xff]
  %v1660 = vld [vmem:[%s1658 + $0x8] sm:$0xff]
  %v1661 = vld [vmem:[%s1658 + $0x10] sm:$0xff]
  %v1662 = vld [vmem:[%s1658 + $0x18] sm:$0xff]
  %v1664 = vsel %vm267, %v1655, 0
  %v1667 = vsel %vm267, %v1656, 0
  %v1670 = vsel %vm267, %v1657, 0
  %1672 = vmatprep.subr.mxu0 0.0
  %1673 = vmatpush1.msra.mxu0 %v1659
  %1674 = vmatprep.subr.mxu0 0.0
  %1675 = vmatpush1.msra.mxu0 %v1660
  %1676 = vmatprep.subr.mxu0 0.0
  %1677 = vmatpush1.msra.mxu0 %v1661
  %1678 = vmatprep.subr.mxu0 0.0
  %1679 = vmatpush1.msra.mxu0 %v1662
  %1680 = vmatprep.subr.mxu0 0.0
  %1681 = vmatpush1.msra.mxu0 0.0
  %1682 = vmatprep.subr.mxu0 0.0
  %1683 = vmatpush1.msra.mxu0 0.0
  %1684 = vmatprep.subr.mxu0 0.0
  %1685 = vmatpush1.msra.mxu0 0.0
  %1686 = vmatprep.subr.mxu0 0.0
  %1687 = vmatpush1.msra.mxu0 0.0
  %1688 = vmatprep.subr.mxu0 0.0
  %1689 = vmatpush1.msra.mxu0 0.0
  %1690 = vmatprep.subr.mxu0 0.0
  %1691 = vmatpush1.msra.mxu0 0.0
  %1692 = vmatprep.subr.mxu0 0.0
  %1693 = vmatpush1.msra.mxu0 0.0
  %1694 = vmatprep.subr.mxu0 0.0
  %1695 = vmatpush1.msra.mxu0 0.0
  %1696 = vmatprep.subr.mxu0 0.0
  %1697 = vmatpush1.msra.mxu0 0.0
  %1698 = vmatprep.subr.mxu0 0.0
  %1699 = vmatpush1.msra.mxu0 0.0
  %1700 = vmatprep.subr.mxu0 0.0
  %1701 = vmatpush1.msra.mxu0 0.0
  %1702 = vmatprep.subr.mxu0 0.0
  %1703 = vmatpush1.msra.mxu0 0.0
  %1704 = vmatprep.subr.mxu0 0.0
  %1705 = vmatpush1.msra.mxu0 0.0
  %1706 = vmatprep.subr.mxu0 0.0
  %1707 = vmatpush1.msra.mxu0 0.0
  %1708 = vmatprep.subr.mxu0 0.0
  %1709 = vmatpush1.msra.mxu0 0.0
  %1710 = vmatprep.subr.mxu0 0.0
  %1711 = vmatpush1.msra.mxu0 0.0
  %1712 = vmatprep.subr.mxu0 0.0
  %1713 = vmatpush1.msra.mxu0 0.0
  %1714 = vmatprep.subr.mxu0 0.0
  %1715 = vmatpush1.msra.mxu0 0.0
  %1716 = vmatprep.subr.mxu0 0.0
  %1717 = vmatpush1.msra.mxu0 0.0
  %1718 = vmatprep.subr.mxu0 0.0
  %1719 = vmatpush1.msra.mxu0 0.0
  %1720 = vmatprep.subr.mxu0 0.0
  %1721 = vmatpush1.msra.mxu0 0.0
  %1722 = vmatprep.subr.mxu0 0.0
  %1723 = vmatpush1.msra.mxu0 0.0
  %1724 = vmatprep.subr.mxu0 0.0
  %1725 = vmatpush1.msra.mxu0 0.0
  %1726 = vmatprep.subr.mxu0 0.0
  %1727 = vmatpush1.msra.mxu0 0.0
  %1728 = vmatprep.subr.mxu0 0.0
  %1729 = vmatpush1.msra.mxu0 0.0
  %1730 = vmatprep.subr.mxu0 0.0
  %1731 = vmatpush1.msra.mxu0 0.0
  %1732 = vmatprep.subr.mxu0 0.0
  %1733 = vmatpush1.msra.mxu0 0.0
  %1734 = vmatprep.subr.mxu0 0.0
  %1735 = vmatpush1.msra.mxu0 0.0
  %1736 = vmatprep.mubr.f32.mxu0 0.0
  %1737 = vmatmul.mubr.f32.gmra.mrb[0].mxu0 %v1664
  %v1738 = vpop.f32.mrb[0].mxu0
  %v1739 = vadd.f32 0.0, %v1738
  %v1740 = vpop.f32.mrb[0].mxu0
  %1741 = vmatprep.mubr.f32.mxu0 0.0
  %1742 = vmatmul.mubr.f32.gmra.mrb[0].mxu0 %v1667
  %v1743 = vpop.f32.mrb[0].mxu0
  %v1744 = vadd.f32 0.0, %v1743
  %v1745 = vpop.f32.mrb[0].mxu0
  %1746 = vmatprep.mubr.f32.mxu0 0.0
  %1747 = vmatmul.mubr.f32.gmra.mrb[0].mxu0 %v1670
  %v1748 = vpop.f32.mrb[0].mxu0
  %v1749 = vadd.f32 0.0, %v1748
  %v1750 = vpop.f32.mrb[0].mxu0
  %1751 = vdwg.mxu0
  %v1752 = vadd.f32 %v1565, %v1739
  %v1753 = vadd.f32 %v1566, %v1744
  %v1754 = vadd.f32 %v1567, %v1749
  %s1755 = scalar_lea.vmem %s0, 432
  %v1756 = vld [vmem:[%s1755] sm:$0xff]
  %v1757 = vld [vmem:[%s1755 + $0x8] sm:$0xff]
  %v1758 = vld [vmem:[%s1755 + $0x10] sm:$0xff]
  %v1759 = vld [vmem:[%s1755 + $0x18] sm:$0xff]
  %v1760 = vld [vmem:[%s1755 + $0x20] sm:$0x3]
  %v1761 = vld [vmem:[%s1755 + $0x28] sm:$0x3]
  %1762 = vmatprep.subr.mxu0 0.0
  %1763 = vmatpush1.msra.mxu0 %v46
  %1764 = vmatprep.subr.mxu0 0.0
  %1765 = vmatpush1.msra.mxu0 %v47
  %1766 = vmatprep.subr.mxu0 0.0
  %1767 = vmatpush1.msra.mxu0 %v48
  %1768 = vmatprep.subr.mxu0 0.0
  %1769 = vmatpush1.msra.mxu0 %v49
  %1770 = vmatprep.subr.mxu0 0.0
  %1771 = vmatpush1.msra.mxu0 %v50
  %1772 = vmatprep.subr.mxu0 0.0
  %1773 = vmatpush1.msra.mxu0 %v51
  %1774 = vmatprep.subr.mxu0 0.0
  %1775 = vmatpush1.msra.mxu0 %v52
  %1776 = vmatprep.subr.mxu0 0.0
  %1777 = vmatpush1.msra.mxu0 %v53
  %1778 = vmatprep.subr.mxu0 0.0
  %1779 = vmatpush1.msra.mxu0 %v54
  %1780 = vmatprep.subr.mxu0 0.0
  %1781 = vmatpush1.msra.mxu0 %v55
  %1782 = vmatprep.subr.mxu0 0.0
  %1783 = vmatpush1.msra.mxu0 %v56
  %1784 = vmatprep.subr.mxu0 0.0
  %1785 = vmatpush1.msra.mxu0 %v57
  %1786 = vmatprep.subr.mxu0 0.0
  %1787 = vmatpush1.msra.mxu0 %v58
  %1788 = vmatprep.subr.mxu0 0.0
  %1789 = vmatpush1.msra.mxu0 %v59
  %1790 = vmatprep.subr.mxu0 0.0
  %1791 = vmatpush1.msra.mxu0 %v60
  %1792 = vmatprep.subr.mxu0 0.0
  %1793 = vmatpush1.msra.mxu0 %v61
  %1794 = vmatprep.subr.mxu0 0.0
  %1795 = vmatpush1.msra.mxu0 %v62
  %1796 = vmatprep.subr.mxu0 0.0
  %1797 = vmatpush1.msra.mxu0 %v63
  %1798 = vmatprep.subr.mxu0 0.0
  %1799 = vmatpush1.msra.mxu0 %v64
  %1800 = vmatprep.subr.mxu0 0.0
  %1801 = vmatpush1.msra.mxu0 %v65
  %1802 = vmatprep.subr.mxu0 0.0
  %1803 = vmatpush1.msra.mxu0 %v66
  %1804 = vmatprep.subr.mxu0 0.0
  %1805 = vmatpush1.msra.mxu0 %v67
  %1806 = vmatprep.subr.mxu0 0.0
  %1807 = vmatpush1.msra.mxu0 %v68
  %1808 = vmatprep.subr.mxu0 0.0
  %1809 = vmatpush1.msra.mxu0 %v69
  %1810 = vmatprep.subr.mxu0 0.0
  %1811 = vmatpush1.msra.mxu0 %v70
  %1812 = vmatprep.subr.mxu0 0.0
  %1813 = vmatpush1.msra.mxu0 %v71
  %1814 = vmatprep.subr.mxu0 0.0
  %1815 = vmatpush1.msra.mxu0 %v72
  %1816 = vmatprep.subr.mxu0 0.0
  %1817 = vmatpush1.msra.mxu0 %v73
  %1818 = vmatprep.subr.mxu0 0.0
  %1819 = vmatpush1.msra.mxu0 %v74
  %1820 = vmatprep.subr.mxu0 0.0
  %1821 = vmatpush1.msra.mxu0 %v75
  %1822 = vmatprep.subr.mxu0 0.0
  %1823 = vmatpush1.msra.mxu0 %v76
  %1824 = vmatprep.subr.mxu0 0.0
  %1825 = vmatpush1.msra.mxu0 %v77
  %1826 = vmatprep.mubr.f32.mxu0 %v1757
  %1827 = vmatmul.mubr.f32.gmra.mrb[0].mxu0 %v1756
  %v1828 = vpop.f32.mrb[0].mxu0
  %v1829 = vadd.f32 %v83, %v1828
  %v1830 = vpop.f32.mrb[0].mxu0
  %1831 = vmatprep.mubr.f32.mxu0 %v1759
  %1832 = vmatmul.mubr.f32.gmra.mrb[0].mxu0 %v1758
  %v1833 = vpop.f32.mrb[0].mxu0
  %v1834 = vadd.f32 %v83, %v1833
  %v1835 = vpop.f32.mrb[0].mxu0
  %1836 = vmatprep.mubr.f32.mxu0 %v1761
  %1837 = vmatmul.mubr.f32.gmra.mrb[0].mxu0 %v1760
  %v1838 = vpop.f32.mrb[0].mxu0
  %v1839 = vadd.f32 %v83, %v1838
  %v1840 = vpop.f32.mrb[0].mxu0
  %1841 = vdwg.mxu0
  %v1842 = vmax.f32 %v1829, 0.0
  %v1843 = vmax.f32 %v1834, 0.0
  %v1844 = vmax.f32 %v1839, 0.0
  %s1845 = scalar_lea.vmem %s3, 288
  %v1846 = vld [vmem:[%s1845] sm:$0xff]
  %v1847 = vld [vmem:[%s1845 + $0x8] sm:$0xff]
  %v1848 = vld [vmem:[%s1845 + $0x10] sm:$0xff]
  %v1849 = vld [vmem:[%s1845 + $0x18] sm:$0xff]
  %v1851 = vsel %vm267, %v1842, 0
  %v1854 = vsel %vm267, %v1843, 0
  %v1857 = vsel %vm267, %v1844, 0
  %1859 = vmatprep.subr.mxu0 0.0
  %1860 = vmatpush1.msra.mxu0 %v1846
  %1861 = vmatprep.subr.mxu0 0.0
  %1862 = vmatpush1.msra.mxu0 %v1847
  %1863 = vmatprep.subr.mxu0 0.0
  %1864 = vmatpush1.msra.mxu0 %v1848
  %1865 = vmatprep.subr.mxu0 0.0
  %1866 = vmatpush1.msra.mxu0 %v1849
  %1867 = vmatprep.subr.mxu0 0.0
  %1868 = vmatpush1.msra.mxu0 0.0
  %1869 = vmatprep.subr.mxu0 0.0
  %1870 = vmatpush1.msra.mxu0 0.0
  %1871 = vmatprep.subr.mxu0 0.0
  %1872 = vmatpush1.msra.mxu0 0.0
  %1873 = vmatprep.subr.mxu0 0.0
  %1874 = vmatpush1.msra.mxu0 0.0
  %1875 = vmatprep.subr.mxu0 0.0
  %1876 = vmatpush1.msra.mxu0 0.0
  %1877 = vmatprep.subr.mxu0 0.0
  %1878 = vmatpush1.msra.mxu0 0.0
  %1879 = vmatprep.subr.mxu0 0.0
  %1880 = vmatpush1.msra.mxu0 0.0
  %1881 = vmatprep.subr.mxu0 0.0
  %1882 = vmatpush1.msra.mxu0 0.0
  %1883 = vmatprep.subr.mxu0 0.0
  %1884 = vmatpush1.msra.mxu0 0.0
  %1885 = vmatprep.subr.mxu0 0.0
  %1886 = vmatpush1.msra.mxu0 0.0
  %1887 = vmatprep.subr.mxu0 0.0
  %1888 = vmatpush1.msra.mxu0 0.0
  %1889 = vmatprep.subr.mxu0 0.0
  %1890 = vmatpush1.msra.mxu0 0.0
  %1891 = vmatprep.subr.mxu0 0.0
  %1892 = vmatpush1.msra.mxu0 0.0
  %1893 = vmatprep.subr.mxu0 0.0
  %1894 = vmatpush1.msra.mxu0 0.0
  %1895 = vmatprep.subr.mxu0 0.0
  %1896 = vmatpush1.msra.mxu0 0.0
  %1897 = vmatprep.subr.mxu0 0.0
  %1898 = vmatpush1.msra.mxu0 0.0
  %1899 = vmatprep.subr.mxu0 0.0
  %1900 = vmatpush1.msra.mxu0 0.0
  %1901 = vmatprep.subr.mxu0 0.0
  %1902 = vmatpush1.msra.mxu0 0.0
  %1903 = vmatprep.subr.mxu0 0.0
  %1904 = vmatpush1.msra.mxu0 0.0
  %1905 = vmatprep.subr.mxu0 0.0
  %1906 = vmatpush1.msra.mxu0 0.0
  %1907 = vmatprep.subr.mxu0 0.0
  %1908 = vmatpush1.msra.mxu0 0.0
  %1909 = vmatprep.subr.mxu0 0.0
  %1910 = vmatpush1.msra.mxu0 0.0
  %1911 = vmatprep.subr.mxu0 0.0
  %1912 = vmatpush1.msra.mxu0 0.0
  %1913 = vmatprep.subr.mxu0 0.0
  %1914 = vmatpush1.msra.mxu0 0.0
  %1915 = vmatprep.subr.mxu0 0.0
  %1916 = vmatpush1.msra.mxu0 0.0
  %1917 = vmatprep.subr.mxu0 0.0
  %1918 = vmatpush1.msra.mxu0 0.0
  %1919 = vmatprep.subr.mxu0 0.0
  %1920 = vmatpush1.msra.mxu0 0.0
  %1921 = vmatprep.subr.mxu0 0.0
  %1922 = vmatpush1.msra.mxu0 0.0
  %1923 = vmatprep.mubr.f32.mxu0 0.0
  %1924 = vmatmul.mubr.f32.gmra.mrb[0].mxu0 %v1851
  %v1925 = vpop.f32.mrb[0].mxu0
  %v1926 = vadd.f32 0.0, %v1925
  %v1927 = vpop.f32.mrb[0].mxu0
  %1928 = vmatprep.mubr.f32.mxu0 0.0
  %1929 = vmatmul.mubr.f32.gmra.mrb[0].mxu0 %v1854
  %v1930 = vpop.f32.mrb[0].mxu0
  %v1931 = vadd.f32 0.0, %v1930
  %v1932 = vpop.f32.mrb[0].mxu0
  %1933 = vmatprep.mubr.f32.mxu0 0.0
  %1934 = vmatmul.mubr.f32.gmra.mrb[0].mxu0 %v1857
  %v1935 = vpop.f32.mrb[0].mxu0
  %v1936 = vadd.f32 0.0, %v1935
  %v1937 = vpop.f32.mrb[0].mxu0
  %1938 = vdwg.mxu0
  %v1939 = vadd.f32 %v1752, %v1926
  %v1940 = vadd.f32 %v1753, %v1931
  %v1941 = vadd.f32 %v1754, %v1936
  %s1942 = scalar_lea.vmem %s0, 480
  %v1943 = vld [vmem:[%s1942] sm:$0xff]
  %v1944 = vld [vmem:[%s1942 + $0x8] sm:$0xff]
  %v1945 = vld [vmem:[%s1942 + $0x10] sm:$0xff]
  %v1946 = vld [vmem:[%s1942 + $0x18] sm:$0xff]
  %v1947 = vld [vmem:[%s1942 + $0x20] sm:$0x3]
  %v1948 = vld [vmem:[%s1942 + $0x28] sm:$0x3]
  %1949 = vmatprep.subr.mxu0 0.0
  %1950 = vmatpush1.msra.mxu0 %v46
  %1951 = vmatprep.subr.mxu0 0.0
  %1952 = vmatpush1.msra.mxu0 %v47
  %1953 = vmatprep.subr.mxu0 0.0
  %1954 = vmatpush1.msra.mxu0 %v48
  %1955 = vmatprep.subr.mxu0 0.0
  %1956 = vmatpush1.msra.mxu0 %v49
  %1957 = vmatprep.subr.mxu0 0.0
  %1958 = vmatpush1.msra.mxu0 %v50
  %1959 = vmatprep.subr.mxu0 0.0
  %1960 = vmatpush1.msra.mxu0 %v51
  %1961 = vmatprep.subr.mxu0 0.0
  %1962 = vmatpush1.msra.mxu0 %v52
  %1963 = vmatprep.subr.mxu0 0.0
  %1964 = vmatpush1.msra.mxu0 %v53
  %1965 = vmatprep.subr.mxu0 0.0
  %1966 = vmatpush1.msra.mxu0 %v54
  %1967 = vmatprep.subr.mxu0 0.0
  %1968 = vmatpush1.msra.mxu0 %v55
  %1969 = vmatprep.subr.mxu0 0.0
  %1970 = vmatpush1.msra.mxu0 %v56
  %1971 = vmatprep.subr.mxu0 0.0
  %1972 = vmatpush1.msra.mxu0 %v57
  %1973 = vmatprep.subr.mxu0 0.0
  %1974 = vmatpush1.msra.mxu0 %v58
  %1975 = vmatprep.subr.mxu0 0.0
  %1976 = vmatpush1.msra.mxu0 %v59
  %1977 = vmatprep.subr.mxu0 0.0
  %1978 = vmatpush1.msra.mxu0 %v60
  %1979 = vmatprep.subr.mxu0 0.0
  %1980 = vmatpush1.msra.mxu0 %v61
  %1981 = vmatprep.subr.mxu0 0.0
  %1982 = vmatpush1.msra.mxu0 %v62
  %1983 = vmatprep.subr.mxu0 0.0
  %1984 = vmatpush1.msra.mxu0 %v63
  %1985 = vmatprep.subr.mxu0 0.0
  %1986 = vmatpush1.msra.mxu0 %v64
  %1987 = vmatprep.subr.mxu0 0.0
  %1988 = vmatpush1.msra.mxu0 %v65
  %1989 = vmatprep.subr.mxu0 0.0
  %1990 = vmatpush1.msra.mxu0 %v66
  %1991 = vmatprep.subr.mxu0 0.0
  %1992 = vmatpush1.msra.mxu0 %v67
  %1993 = vmatprep.subr.mxu0 0.0
  %1994 = vmatpush1.msra.mxu0 %v68
  %1995 = vmatprep.subr.mxu0 0.0
  %1996 = vmatpush1.msra.mxu0 %v69
  %1997 = vmatprep.subr.mxu0 0.0
  %1998 = vmatpush1.msra.mxu0 %v70
  %1999 = vmatprep.subr.mxu0 0.0
  %2000 = vmatpush1.msra.mxu0 %v71
  %2001 = vmatprep.subr.mxu0 0.0
  %2002 = vmatpush1.msra.mxu0 %v72
  %2003 = vmatprep.subr.mxu0 0.0
  %2004 = vmatpush1.msra.mxu0 %v73
  %2005 = vmatprep.subr.mxu0 0.0
  %2006 = vmatpush1.msra.mxu0 %v74
  %2007 = vmatprep.subr.mxu0 0.0
  %2008 = vmatpush1.msra.mxu0 %v75
  %2009 = vmatprep.subr.mxu0 0.0
  %2010 = vmatpush1.msra.mxu0 %v76
  %2011 = vmatprep.subr.mxu0 0.0
  %2012 = vmatpush1.msra.mxu0 %v77
  %2013 = vmatprep.mubr.f32.mxu0 %v1944
  %2014 = vmatmul.mubr.f32.gmra.mrb[0].mxu0 %v1943
  %v2015 = vpop.f32.mrb[0].mxu0
  %v2016 = vadd.f32 %v83, %v2015
  %v2017 = vpop.f32.mrb[0].mxu0
  %2018 = vmatprep.mubr.f32.mxu0 %v1946
  %2019 = vmatmul.mubr.f32.gmra.mrb[0].mxu0 %v1945
  %v2020 = vpop.f32.mrb[0].mxu0
  %v2021 = vadd.f32 %v83, %v2020
  %v2022 = vpop.f32.mrb[0].mxu0
  %2023 = vmatprep.mubr.f32.mxu0 %v1948
  %2024 = vmatmul.mubr.f32.gmra.mrb[0].mxu0 %v1947
  %v2025 = vpop.f32.mrb[0].mxu0
  %v2026 = vadd.f32 %v83, %v2025
  %v2027 = vpop.f32.mrb[0].mxu0
  %2028 = vdwg.mxu0
  %v2029 = vmax.f32 %v2016, 0.0
  %v2030 = vmax.f32 %v2021, 0.0
  %v2031 = vmax.f32 %v2026, 0.0
  %s2032 = scalar_lea.vmem %s3, 320
  %v2033 = vld [vmem:[%s2032] sm:$0xff]
  %v2034 = vld [vmem:[%s2032 + $0x8] sm:$0xff]
  %v2035 = vld [vmem:[%s2032 + $0x10] sm:$0xff]
  %v2036 = vld [vmem:[%s2032 + $0x18] sm:$0xff]
  %v2038 = vsel %vm267, %v2029, 0
  %v2041 = vsel %vm267, %v2030, 0
  %v2044 = vsel %vm267, %v2031, 0
  %2046 = vmatprep.subr.mxu0 0.0
  %2047 = vmatpush1.msra.mxu0 %v2033
  %2048 = vmatprep.subr.mxu0 0.0
  %2049 = vmatpush1.msra.mxu0 %v2034
  %2050 = vmatprep.subr.mxu0 0.0
  %2051 = vmatpush1.msra.mxu0 %v2035
  %2052 = vmatprep.subr.mxu0 0.0
  %2053 = vmatpush1.msra.mxu0 %v2036
  %2054 = vmatprep.subr.mxu0 0.0
  %2055 = vmatpush1.msra.mxu0 0.0
  %2056 = vmatprep.subr.mxu0 0.0
  %2057 = vmatpush1.msra.mxu0 0.0
  %2058 = vmatprep.subr.mxu0 0.0
  %2059 = vmatpush1.msra.mxu0 0.0
  %2060 = vmatprep.subr.mxu0 0.0
  %2061 = vmatpush1.msra.mxu0 0.0
  %2062 = vmatprep.subr.mxu0 0.0
  %2063 = vmatpush1.msra.mxu0 0.0
  %2064 = vmatprep.subr.mxu0 0.0
  %2065 = vmatpush1.msra.mxu0 0.0
  %2066 = vmatprep.subr.mxu0 0.0
  %2067 = vmatpush1.msra.mxu0 0.0
  %2068 = vmatprep.subr.mxu0 0.0
  %2069 = vmatpush1.msra.mxu0 0.0
  %2070 = vmatprep.subr.mxu0 0.0
  %2071 = vmatpush1.msra.mxu0 0.0
  %2072 = vmatprep.subr.mxu0 0.0
  %2073 = vmatpush1.msra.mxu0 0.0
  %2074 = vmatprep.subr.mxu0 0.0
  %2075 = vmatpush1.msra.mxu0 0.0
  %2076 = vmatprep.subr.mxu0 0.0
  %2077 = vmatpush1.msra.mxu0 0.0
  %2078 = vmatprep.subr.mxu0 0.0
  %2079 = vmatpush1.msra.mxu0 0.0
  %2080 = vmatprep.subr.mxu0 0.0
  %2081 = vmatpush1.msra.mxu0 0.0
  %2082 = vmatprep.subr.mxu0 0.0
  %2083 = vmatpush1.msra.mxu0 0.0
  %2084 = vmatprep.subr.mxu0 0.0
  %2085 = vmatpush1.msra.mxu0 0.0
  %2086 = vmatprep.subr.mxu0 0.0
  %2087 = vmatpush1.msra.mxu0 0.0
  %2088 = vmatprep.subr.mxu0 0.0
  %2089 = vmatpush1.msra.mxu0 0.0
  %2090 = vmatprep.subr.mxu0 0.0
  %2091 = vmatpush1.msra.mxu0 0.0
  %2092 = vmatprep.subr.mxu0 0.0
  %2093 = vmatpush1.msra.mxu0 0.0
  %2094 = vmatprep.subr.mxu0 0.0
  %2095 = vmatpush1.msra.mxu0 0.0
  %2096 = vmatprep.subr.mxu0 0.0
  %2097 = vmatpush1.msra.mxu0 0.0
  %2098 = vmatprep.subr.mxu0 0.0
  %2099 = vmatpush1.msra.mxu0 0.0
  %2100 = vmatprep.subr.mxu0 0.0
  %2101 = vmatpush1.msra.mxu0 0.0
  %2102 = vmatprep.subr.mxu0 0.0
  %2103 = vmatpush1.msra.mxu0 0.0
  %2104 = vmatprep.subr.mxu0 0.0
  %2105 = vmatpush1.msra.mxu0 0.0
  %2106 = vmatprep.subr.mxu0 0.0
  %2107 = vmatpush1.msra.mxu0 0.0
  %2108 = vmatprep.subr.mxu0 0.0
  %2109 = vmatpush1.msra.mxu0 0.0
  %2110 = vmatprep.mubr.f32.mxu0 0.0
  %2111 = vmatmul.mubr.f32.gmra.mrb[0].mxu0 %v2038
  %v2112 = vpop.f32.mrb[0].mxu0
  %v2113 = vadd.f32 0.0, %v2112
  %v2114 = vpop.f32.mrb[0].mxu0
  %2115 = vmatprep.mubr.f32.mxu0 0.0
  %2116 = vmatmul.mubr.f32.gmra.mrb[0].mxu0 %v2041
  %v2117 = vpop.f32.mrb[0].mxu0
  %v2118 = vadd.f32 0.0, %v2117
  %v2119 = vpop.f32.mrb[0].mxu0
  %2120 = vmatprep.mubr.f32.mxu0 0.0
  %2121 = vmatmul.mubr.f32.gmra.mrb[0].mxu0 %v2044
  %v2122 = vpop.f32.mrb[0].mxu0
  %v2123 = vadd.f32 0.0, %v2122
  %v2124 = vpop.f32.mrb[0].mxu0
  %2125 = vdwg.mxu0
  %v2126 = vadd.f32 %v1939, %v2113
  %v2127 = vadd.f32 %v1940, %v2118
  %v2128 = vadd.f32 %v1941, %v2123
  %s2129 = scalar_lea.vmem %s0, 528
  %v2130 = vld [vmem:[%s2129] sm:$0xff]
  %v2131 = vld [vmem:[%s2129 + $0x8] sm:$0xff]
  %v2132 = vld [vmem:[%s2129 + $0x10] sm:$0xff]
  %v2133 = vld [vmem:[%s2129 + $0x18] sm:$0xff]
  %v2134 = vld [vmem:[%s2129 + $0x20] sm:$0x3]
  %v2135 = vld [vmem:[%s2129 + $0x28] sm:$0x3]
  %2136 = vmatprep.subr.mxu0 0.0
  %2137 = vmatpush1.msra.mxu0 %v46
  %2138 = vmatprep.subr.mxu0 0.0
  %2139 = vmatpush1.msra.mxu0 %v47
  %2140 = vmatprep.subr.mxu0 0.0
  %2141 = vmatpush1.msra.mxu0 %v48
  %2142 = vmatprep.subr.mxu0 0.0
  %2143 = vmatpush1.msra.mxu0 %v49
  %2144 = vmatprep.subr.mxu0 0.0
  %2145 = vmatpush1.msra.mxu0 %v50
  %2146 = vmatprep.subr.mxu0 0.0
  %2147 = vmatpush1.msra.mxu0 %v51
  %2148 = vmatprep.subr.mxu0 0.0
  %2149 = vmatpush1.msra.mxu0 %v52
  %2150 = vmatprep.subr.mxu0 0.0
  %2151 = vmatpush1.msra.mxu0 %v53
  %2152 = vmatprep.subr.mxu0 0.0
  %2153 = vmatpush1.msra.mxu0 %v54
  %2154 = vmatprep.subr.mxu0 0.0
  %2155 = vmatpush1.msra.mxu0 %v55
  %2156 = vmatprep.subr.mxu0 0.0
  %2157 = vmatpush1.msra.mxu0 %v56
  %2158 = vmatprep.subr.mxu0 0.0
  %2159 = vmatpush1.msra.mxu0 %v57
  %2160 = vmatprep.subr.mxu0 0.0
  %2161 = vmatpush1.msra.mxu0 %v58
  %2162 = vmatprep.subr.mxu0 0.0
  %2163 = vmatpush1.msra.mxu0 %v59
  %2164 = vmatprep.subr.mxu0 0.0
  %2165 = vmatpush1.msra.mxu0 %v60
  %2166 = vmatprep.subr.mxu0 0.0
  %2167 = vmatpush1.msra.mxu0 %v61
  %2168 = vmatprep.subr.mxu0 0.0
  %2169 = vmatpush1.msra.mxu0 %v62
  %2170 = vmatprep.subr.mxu0 0.0
  %2171 = vmatpush1.msra.mxu0 %v63
  %2172 = vmatprep.subr.mxu0 0.0
  %2173 = vmatpush1.msra.mxu0 %v64
  %2174 = vmatprep.subr.mxu0 0.0
  %2175 = vmatpush1.msra.mxu0 %v65
  %2176 = vmatprep.subr.mxu0 0.0
  %2177 = vmatpush1.msra.mxu0 %v66
  %2178 = vmatprep.subr.mxu0 0.0
  %2179 = vmatpush1.msra.mxu0 %v67
  %2180 = vmatprep.subr.mxu0 0.0
  %2181 = vmatpush1.msra.mxu0 %v68
  %2182 = vmatprep.subr.mxu0 0.0
  %2183 = vmatpush1.msra.mxu0 %v69
  %2184 = vmatprep.subr.mxu0 0.0
  %2185 = vmatpush1.msra.mxu0 %v70
  %2186 = vmatprep.subr.mxu0 0.0
  %2187 = vmatpush1.msra.mxu0 %v71
  %2188 = vmatprep.subr.mxu0 0.0
  %2189 = vmatpush1.msra.mxu0 %v72
  %2190 = vmatprep.subr.mxu0 0.0
  %2191 = vmatpush1.msra.mxu0 %v73
  %2192 = vmatprep.subr.mxu0 0.0
  %2193 = vmatpush1.msra.mxu0 %v74
  %2194 = vmatprep.subr.mxu0 0.0
  %2195 = vmatpush1.msra.mxu0 %v75
  %2196 = vmatprep.subr.mxu0 0.0
  %2197 = vmatpush1.msra.mxu0 %v76
  %2198 = vmatprep.subr.mxu0 0.0
  %2199 = vmatpush1.msra.mxu0 %v77
  %2200 = vmatprep.mubr.f32.mxu0 %v2131
  %2201 = vmatmul.mubr.f32.gmra.mrb[0].mxu0 %v2130
  %v2202 = vpop.f32.mrb[0].mxu0
  %v2203 = vadd.f32 %v83, %v2202
  %v2204 = vpop.f32.mrb[0].mxu0
  %2205 = vmatprep.mubr.f32.mxu0 %v2133
  %2206 = vmatmul.mubr.f32.gmra.mrb[0].mxu0 %v2132
  %v2207 = vpop.f32.mrb[0].mxu0
  %v2208 = vadd.f32 %v83, %v2207
  %v2209 = vpop.f32.mrb[0].mxu0
  %2210 = vmatprep.mubr.f32.mxu0 %v2135
  %2211 = vmatmul.mubr.f32.gmra.mrb[0].mxu0 %v2134
  %v2212 = vpop.f32.mrb[0].mxu0
  %v2213 = vadd.f32 %v83, %v2212
  %v2214 = vpop.f32.mrb[0].mxu0
  %2215 = vdwg.mxu0
  %v2216 = vmax.f32 %v2203, 0.0
  %v2217 = vmax.f32 %v2208, 0.0
  %v2218 = vmax.f32 %v2213, 0.0
  %s2219 = scalar_lea.vmem %s3, 352
  %v2220 = vld [vmem:[%s2219] sm:$0xff]
  %v2221 = vld [vmem:[%s2219 + $0x8] sm:$0xff]
  %v2222 = vld [vmem:[%s2219 + $0x10] sm:$0xff]
  %v2223 = vld [vmem:[%s2219 + $0x18] sm:$0xff]
  %v2225 = vsel %vm267, %v2216, 0
  %v2228 = vsel %vm267, %v2217, 0
  %v2231 = vsel %vm267, %v2218, 0
  %2233 = vmatprep.subr.mxu0 0.0
  %2234 = vmatpush1.msra.mxu0 %v2220
  %2235 = vmatprep.subr.mxu0 0.0
  %2236 = vmatpush1.msra.mxu0 %v2221
  %2237 = vmatprep.subr.mxu0 0.0
  %2238 = vmatpush1.msra.mxu0 %v2222
  %2239 = vmatprep.subr.mxu0 0.0
  %2240 = vmatpush1.msra.mxu0 %v2223
  %2241 = vmatprep.subr.mxu0 0.0
  %2242 = vmatpush1.msra.mxu0 0.0
  %2243 = vmatprep.subr.mxu0 0.0
  %2244 = vmatpush1.msra.mxu0 0.0
  %2245 = vmatprep.subr.mxu0 0.0
  %2246 = vmatpush1.msra.mxu0 0.0
  %2247 = vmatprep.subr.mxu0 0.0
  %2248 = vmatpush1.msra.mxu0 0.0
  %2249 = vmatprep.subr.mxu0 0.0
  %2250 = vmatpush1.msra.mxu0 0.0
  %2251 = vmatprep.subr.mxu0 0.0
  %2252 = vmatpush1.msra.mxu0 0.0
  %2253 = vmatprep.subr.mxu0 0.0
  %2254 = vmatpush1.msra.mxu0 0.0
  %2255 = vmatprep.subr.mxu0 0.0
  %2256 = vmatpush1.msra.mxu0 0.0
  %2257 = vmatprep.subr.mxu0 0.0
  %2258 = vmatpush1.msra.mxu0 0.0
  %2259 = vmatprep.subr.mxu0 0.0
  %2260 = vmatpush1.msra.mxu0 0.0
  %2261 = vmatprep.subr.mxu0 0.0
  %2262 = vmatpush1.msra.mxu0 0.0
  %2263 = vmatprep.subr.mxu0 0.0
  %2264 = vmatpush1.msra.mxu0 0.0
  %2265 = vmatprep.subr.mxu0 0.0
  %2266 = vmatpush1.msra.mxu0 0.0
  %2267 = vmatprep.subr.mxu0 0.0
  %2268 = vmatpush1.msra.mxu0 0.0
  %2269 = vmatprep.subr.mxu0 0.0
  %2270 = vmatpush1.msra.mxu0 0.0
  %2271 = vmatprep.subr.mxu0 0.0
  %2272 = vmatpush1.msra.mxu0 0.0
  %2273 = vmatprep.subr.mxu0 0.0
  %2274 = vmatpush1.msra.mxu0 0.0
  %2275 = vmatprep.subr.mxu0 0.0
  %2276 = vmatpush1.msra.mxu0 0.0
  %2277 = vmatprep.subr.mxu0 0.0
  %2278 = vmatpush1.msra.mxu0 0.0
  %2279 = vmatprep.subr.mxu0 0.0
  %2280 = vmatpush1.msra.mxu0 0.0
  %2281 = vmatprep.subr.mxu0 0.0
  %2282 = vmatpush1.msra.mxu0 0.0
  %2283 = vmatprep.subr.mxu0 0.0
  %2284 = vmatpush1.msra.mxu0 0.0
  %2285 = vmatprep.subr.mxu0 0.0
  %2286 = vmatpush1.msra.mxu0 0.0
  %2287 = vmatprep.subr.mxu0 0.0
  %2288 = vmatpush1.msra.mxu0 0.0
  %2289 = vmatprep.subr.mxu0 0.0
  %2290 = vmatpush1.msra.mxu0 0.0
  %2291 = vmatprep.subr.mxu0 0.0
  %2292 = vmatpush1.msra.mxu0 0.0
  %2293 = vmatprep.subr.mxu0 0.0
  %2294 = vmatpush1.msra.mxu0 0.0
  %2295 = vmatprep.subr.mxu0 0.0
  %2296 = vmatpush1.msra.mxu0 0.0
  %2297 = vmatprep.mubr.f32.mxu0 0.0
  %2298 = vmatmul.mubr.f32.gmra.mrb[0].mxu0 %v2225
  %v2299 = vpop.f32.mrb[0].mxu0
  %v2300 = vadd.f32 0.0, %v2299
  %v2301 = vpop.f32.mrb[0].mxu0
  %2302 = vmatprep.mubr.f32.mxu0 0.0
  %2303 = vmatmul.mubr.f32.gmra.mrb[0].mxu0 %v2228
  %v2304 = vpop.f32.mrb[0].mxu0
  %v2305 = vadd.f32 0.0, %v2304
  %v2306 = vpop.f32.mrb[0].mxu0
  %2307 = vmatprep.mubr.f32.mxu0 0.0
  %2308 = vmatmul.mubr.f32.gmra.mrb[0].mxu0 %v2231
  %v2309 = vpop.f32.mrb[0].mxu0
  %v2310 = vadd.f32 0.0, %v2309
  %v2311 = vpop.f32.mrb[0].mxu0
  %2312 = vdwg.mxu0
  %v2313 = vadd.f32 %v2126, %v2300
  %v2314 = vadd.f32 %v2127, %v2305
  %v2315 = vadd.f32 %v2128, %v2310
  %s2316 = scalar_lea.vmem %s0, 576
  %v2317 = vld [vmem:[%s2316] sm:$0xff]
  %v2318 = vld [vmem:[%s2316 + $0x8] sm:$0xff]
  %v2319 = vld [vmem:[%s2316 + $0x10] sm:$0xff]
  %v2320 = vld [vmem:[%s2316 + $0x18] sm:$0xff]
  %v2321 = vld [vmem:[%s2316 + $0x20] sm:$0x3]
  %v2322 = vld [vmem:[%s2316 + $0x28] sm:$0x3]
  %2323 = vmatprep.subr.mxu0 0.0
  %2324 = vmatpush1.msra.mxu0 %v46
  %2325 = vmatprep.subr.mxu0 0.0
  %2326 = vmatpush1.msra.mxu0 %v47
  %2327 = vmatprep.subr.mxu0 0.0
  %2328 = vmatpush1.msra.mxu0 %v48
  %2329 = vmatprep.subr.mxu0 0.0
  %2330 = vmatpush1.msra.mxu0 %v49
  %2331 = vmatprep.subr.mxu0 0.0
  %2332 = vmatpush1.msra.mxu0 %v50
  %2333 = vmatprep.subr.mxu0 0.0
  %2334 = vmatpush1.msra.mxu0 %v51
  %2335 = vmatprep.subr.mxu0 0.0
  %2336 = vmatpush1.msra.mxu0 %v52
  %2337 = vmatprep.subr.mxu0 0.0
  %2338 = vmatpush1.msra.mxu0 %v53
  %2339 = vmatprep.subr.mxu0 0.0
  %2340 = vmatpush1.msra.mxu0 %v54
  %2341 = vmatprep.subr.mxu0 0.0
  %2342 = vmatpush1.msra.mxu0 %v55
  %2343 = vmatprep.subr.mxu0 0.0
  %2344 = vmatpush1.msra.mxu0 %v56
  %2345 = vmatprep.subr.mxu0 0.0
  %2346 = vmatpush1.msra.mxu0 %v57
  %2347 = vmatprep.subr.mxu0 0.0
  %2348 = vmatpush1.msra.mxu0 %v58
  %2349 = vmatprep.subr.mxu0 0.0
  %2350 = vmatpush1.msra.mxu0 %v59
  %2351 = vmatprep.subr.mxu0 0.0
  %2352 = vmatpush1.msra.mxu0 %v60
  %2353 = vmatprep.subr.mxu0 0.0
  %2354 = vmatpush1.msra.mxu0 %v61
  %2355 = vmatprep.subr.mxu0 0.0
  %2356 = vmatpush1.msra.mxu0 %v62
  %2357 = vmatprep.subr.mxu0 0.0
  %2358 = vmatpush1.msra.mxu0 %v63
  %2359 = vmatprep.subr.mxu0 0.0
  %2360 = vmatpush1.msra.mxu0 %v64
  %2361 = vmatprep.subr.mxu0 0.0
  %2362 = vmatpush1.msra.mxu0 %v65
  %2363 = vmatprep.subr.mxu0 0.0
  %2364 = vmatpush1.msra.mxu0 %v66
  %2365 = vmatprep.subr.mxu0 0.0
  %2366 = vmatpush1.msra.mxu0 %v67
  %2367 = vmatprep.subr.mxu0 0.0
  %2368 = vmatpush1.msra.mxu0 %v68
  %2369 = vmatprep.subr.mxu0 0.0
  %2370 = vmatpush1.msra.mxu0 %v69
  %2371 = vmatprep.subr.mxu0 0.0
  %2372 = vmatpush1.msra.mxu0 %v70
  %2373 = vmatprep.subr.mxu0 0.0
  %2374 = vmatpush1.msra.mxu0 %v71
  %2375 = vmatprep.subr.mxu0 0.0
  %2376 = vmatpush1.msra.mxu0 %v72
  %2377 = vmatprep.subr.mxu0 0.0
  %2378 = vmatpush1.msra.mxu0 %v73
  %2379 = vmatprep.subr.mxu0 0.0
  %2380 = vmatpush1.msra.mxu0 %v74
  %2381 = vmatprep.subr.mxu0 0.0
  %2382 = vmatpush1.msra.mxu0 %v75
  %2383 = vmatprep.subr.mxu0 0.0
  %2384 = vmatpush1.msra.mxu0 %v76
  %2385 = vmatprep.subr.mxu0 0.0
  %2386 = vmatpush1.msra.mxu0 %v77
  %2387 = vmatprep.mubr.f32.mxu0 %v2318
  %2388 = vmatmul.mubr.f32.gmra.mrb[0].mxu0 %v2317
  %v2389 = vpop.f32.mrb[0].mxu0
  %v2390 = vadd.f32 %v83, %v2389
  %v2391 = vpop.f32.mrb[0].mxu0
  %2392 = vmatprep.mubr.f32.mxu0 %v2320
  %2393 = vmatmul.mubr.f32.gmra.mrb[0].mxu0 %v2319
  %v2394 = vpop.f32.mrb[0].mxu0
  %v2395 = vadd.f32 %v83, %v2394
  %v2396 = vpop.f32.mrb[0].mxu0
  %2397 = vmatprep.mubr.f32.mxu0 %v2322
  %2398 = vmatmul.mubr.f32.gmra.mrb[0].mxu0 %v2321
  %v2399 = vpop.f32.mrb[0].mxu0
  %v2400 = vadd.f32 %v83, %v2399
  %v2401 = vpop.f32.mrb[0].mxu0
  %2402 = vdwg.mxu0
  %v2403 = vmax.f32 %v2390, 0.0
  %v2404 = vmax.f32 %v2395, 0.0
  %v2405 = vmax.f32 %v2400, 0.0
  %s2406 = scalar_lea.vmem %s3, 384
  %v2407 = vld [vmem:[%s2406] sm:$0xff]
  %v2408 = vld [vmem:[%s2406 + $0x8] sm:$0xff]
  %v2409 = vld [vmem:[%s2406 + $0x10] sm:$0xff]
  %v2410 = vld [vmem:[%s2406 + $0x18] sm:$0xff]
  %v2412 = vsel %vm267, %v2403, 0
  %v2415 = vsel %vm267, %v2404, 0
  %v2418 = vsel %vm267, %v2405, 0
  %2420 = vmatprep.subr.mxu0 0.0
  %2421 = vmatpush1.msra.mxu0 %v2407
  %2422 = vmatprep.subr.mxu0 0.0
  %2423 = vmatpush1.msra.mxu0 %v2408
  %2424 = vmatprep.subr.mxu0 0.0
  %2425 = vmatpush1.msra.mxu0 %v2409
  %2426 = vmatprep.subr.mxu0 0.0
  %2427 = vmatpush1.msra.mxu0 %v2410
  %2428 = vmatprep.subr.mxu0 0.0
  %2429 = vmatpush1.msra.mxu0 0.0
  %2430 = vmatprep.subr.mxu0 0.0
  %2431 = vmatpush1.msra.mxu0 0.0
  %2432 = vmatprep.subr.mxu0 0.0
  %2433 = vmatpush1.msra.mxu0 0.0
  %2434 = vmatprep.subr.mxu0 0.0
  %2435 = vmatpush1.msra.mxu0 0.0
  %2436 = vmatprep.subr.mxu0 0.0
  %2437 = vmatpush1.msra.mxu0 0.0
  %2438 = vmatprep.subr.mxu0 0.0
  %2439 = vmatpush1.msra.mxu0 0.0
  %2440 = vmatprep.subr.mxu0 0.0
  %2441 = vmatpush1.msra.mxu0 0.0
  %2442 = vmatprep.subr.mxu0 0.0
  %2443 = vmatpush1.msra.mxu0 0.0
  %2444 = vmatprep.subr.mxu0 0.0
  %2445 = vmatpush1.msra.mxu0 0.0
  %2446 = vmatprep.subr.mxu0 0.0
  %2447 = vmatpush1.msra.mxu0 0.0
  %2448 = vmatprep.subr.mxu0 0.0
  %2449 = vmatpush1.msra.mxu0 0.0
  %2450 = vmatprep.subr.mxu0 0.0
  %2451 = vmatpush1.msra.mxu0 0.0
  %2452 = vmatprep.subr.mxu0 0.0
  %2453 = vmatpush1.msra.mxu0 0.0
  %2454 = vmatprep.subr.mxu0 0.0
  %2455 = vmatpush1.msra.mxu0 0.0
  %2456 = vmatprep.subr.mxu0 0.0
  %2457 = vmatpush1.msra.mxu0 0.0
  %2458 = vmatprep.subr.mxu0 0.0
  %2459 = vmatpush1.msra.mxu0 0.0
  %2460 = vmatprep.subr.mxu0 0.0
  %2461 = vmatpush1.msra.mxu0 0.0
  %2462 = vmatprep.subr.mxu0 0.0
  %2463 = vmatpush1.msra.mxu0 0.0
  %2464 = vmatprep.subr.mxu0 0.0
  %2465 = vmatpush1.msra.mxu0 0.0
  %2466 = vmatprep.subr.mxu0 0.0
  %2467 = vmatpush1.msra.mxu0 0.0
  %2468 = vmatprep.subr.mxu0 0.0
  %2469 = vmatpush1.msra.mxu0 0.0
  %2470 = vmatprep.subr.mxu0 0.0
  %2471 = vmatpush1.msra.mxu0 0.0
  %2472 = vmatprep.subr.mxu0 0.0
  %2473 = vmatpush1.msra.mxu0 0.0
  %2474 = vmatprep.subr.mxu0 0.0
  %2475 = vmatpush1.msra.mxu0 0.0
  %2476 = vmatprep.subr.mxu0 0.0
  %2477 = vmatpush1.msra.mxu0 0.0
  %2478 = vmatprep.subr.mxu0 0.0
  %2479 = vmatpush1.msra.mxu0 0.0
  %2480 = vmatprep.subr.mxu0 0.0
  %2481 = vmatpush1.msra.mxu0 0.0
  %2482 = vmatprep.subr.mxu0 0.0
  %2483 = vmatpush1.msra.mxu0 0.0
  %2484 = vmatprep.mubr.f32.mxu0 0.0
  %2485 = vmatmul.mubr.f32.gmra.mrb[0].mxu0 %v2412
  %v2486 = vpop.f32.mrb[0].mxu0
  %v2487 = vadd.f32 0.0, %v2486
  %v2488 = vpop.f32.mrb[0].mxu0
  %2489 = vmatprep.mubr.f32.mxu0 0.0
  %2490 = vmatmul.mubr.f32.gmra.mrb[0].mxu0 %v2415
  %v2491 = vpop.f32.mrb[0].mxu0
  %v2492 = vadd.f32 0.0, %v2491
  %v2493 = vpop.f32.mrb[0].mxu0
  %2494 = vmatprep.mubr.f32.mxu0 0.0
  %2495 = vmatmul.mubr.f32.gmra.mrb[0].mxu0 %v2418
  %v2496 = vpop.f32.mrb[0].mxu0
  %v2497 = vadd.f32 0.0, %v2496
  %v2498 = vpop.f32.mrb[0].mxu0
  %2499 = vdwg.mxu0
  %v2500 = vadd.f32 %v2313, %v2487
  %v2501 = vadd.f32 %v2314, %v2492
  %v2502 = vadd.f32 %v2315, %v2497
  %s2503 = scalar_lea.vmem %s0, 624
  %v2504 = vld [vmem:[%s2503] sm:$0xff]
  %v2505 = vld [vmem:[%s2503 + $0x8] sm:$0xff]
  %v2506 = vld [vmem:[%s2503 + $0x10] sm:$0xff]
  %v2507 = vld [vmem:[%s2503 + $0x18] sm:$0xff]
  %v2508 = vld [vmem:[%s2503 + $0x20] sm:$0x3]
  %v2509 = vld [vmem:[%s2503 + $0x28] sm:$0x3]
  %2510 = vmatprep.subr.mxu0 0.0
  %2511 = vmatpush1.msra.mxu0 %v46
  %2512 = vmatprep.subr.mxu0 0.0
  %2513 = vmatpush1.msra.mxu0 %v47
  %2514 = vmatprep.subr.mxu0 0.0
  %2515 = vmatpush1.msra.mxu0 %v48
  %2516 = vmatprep.subr.mxu0 0.0
  %2517 = vmatpush1.msra.mxu0 %v49
  %2518 = vmatprep.subr.mxu0 0.0
  %2519 = vmatpush1.msra.mxu0 %v50
  %2520 = vmatprep.subr.mxu0 0.0
  %2521 = vmatpush1.msra.mxu0 %v51
  %2522 = vmatprep.subr.mxu0 0.0
  %2523 = vmatpush1.msra.mxu0 %v52
  %2524 = vmatprep.subr.mxu0 0.0
  %2525 = vmatpush1.msra.mxu0 %v53
  %2526 = vmatprep.subr.mxu0 0.0
  %2527 = vmatpush1.msra.mxu0 %v54
  %2528 = vmatprep.subr.mxu0 0.0
  %2529 = vmatpush1.msra.mxu0 %v55
  %2530 = vmatprep.subr.mxu0 0.0
  %2531 = vmatpush1.msra.mxu0 %v56
  %2532 = vmatprep.subr.mxu0 0.0
  %2533 = vmatpush1.msra.mxu0 %v57
  %2534 = vmatprep.subr.mxu0 0.0
  %2535 = vmatpush1.msra.mxu0 %v58
  %2536 = vmatprep.subr.mxu0 0.0
  %2537 = vmatpush1.msra.mxu0 %v59
  %2538 = vmatprep.subr.mxu0 0.0
  %2539 = vmatpush1.msra.mxu0 %v60
  %2540 = vmatprep.subr.mxu0 0.0
  %2541 = vmatpush1.msra.mxu0 %v61
  %2542 = vmatprep.subr.mxu0 0.0
  %2543 = vmatpush1.msra.mxu0 %v62
  %2544 = vmatprep.subr.mxu0 0.0
  %2545 = vmatpush1.msra.mxu0 %v63
  %2546 = vmatprep.subr.mxu0 0.0
  %2547 = vmatpush1.msra.mxu0 %v64
  %2548 = vmatprep.subr.mxu0 0.0
  %2549 = vmatpush1.msra.mxu0 %v65
  %2550 = vmatprep.subr.mxu0 0.0
  %2551 = vmatpush1.msra.mxu0 %v66
  %2552 = vmatprep.subr.mxu0 0.0
  %2553 = vmatpush1.msra.mxu0 %v67
  %2554 = vmatprep.subr.mxu0 0.0
  %2555 = vmatpush1.msra.mxu0 %v68
  %2556 = vmatprep.subr.mxu0 0.0
  %2557 = vmatpush1.msra.mxu0 %v69
  %2558 = vmatprep.subr.mxu0 0.0
  %2559 = vmatpush1.msra.mxu0 %v70
  %2560 = vmatprep.subr.mxu0 0.0
  %2561 = vmatpush1.msra.mxu0 %v71
  %2562 = vmatprep.subr.mxu0 0.0
  %2563 = vmatpush1.msra.mxu0 %v72
  %2564 = vmatprep.subr.mxu0 0.0
  %2565 = vmatpush1.msra.mxu0 %v73
  %2566 = vmatprep.subr.mxu0 0.0
  %2567 = vmatpush1.msra.mxu0 %v74
  %2568 = vmatprep.subr.mxu0 0.0
  %2569 = vmatpush1.msra.mxu0 %v75
  %2570 = vmatprep.subr.mxu0 0.0
  %2571 = vmatpush1.msra.mxu0 %v76
  %2572 = vmatprep.subr.mxu0 0.0
  %2573 = vmatpush1.msra.mxu0 %v77
  %2574 = vmatprep.mubr.f32.mxu0 %v2505
  %2575 = vmatmul.mubr.f32.gmra.mrb[0].mxu0 %v2504
  %v2576 = vpop.f32.mrb[0].mxu0
  %v2577 = vadd.f32 %v83, %v2576
  %v2578 = vpop.f32.mrb[0].mxu0
  %2579 = vmatprep.mubr.f32.mxu0 %v2507
  %2580 = vmatmul.mubr.f32.gmra.mrb[0].mxu0 %v2506
  %v2581 = vpop.f32.mrb[0].mxu0
  %v2582 = vadd.f32 %v83, %v2581
  %v2583 = vpop.f32.mrb[0].mxu0
  %2584 = vmatprep.mubr.f32.mxu0 %v2509
  %2585 = vmatmul.mubr.f32.gmra.mrb[0].mxu0 %v2508
  %v2586 = vpop.f32.mrb[0].mxu0
  %v2587 = vadd.f32 %v83, %v2586
  %v2588 = vpop.f32.mrb[0].mxu0
  %2589 = vdwg.mxu0
  %v2590 = vmax.f32 %v2577, 0.0
  %v2591 = vmax.f32 %v2582, 0.0
  %v2592 = vmax.f32 %v2587, 0.0
  %s2593 = scalar_lea.vmem %s3, 416
  %v2594 = vld [vmem:[%s2593] sm:$0xff]
  %v2595 = vld [vmem:[%s2593 + $0x8] sm:$0xff]
  %v2596 = vld [vmem:[%s2593 + $0x10] sm:$0xff]
  %v2597 = vld [vmem:[%s2593 + $0x18] sm:$0xff]
  %v2599 = vsel %vm267, %v2590, 0
  %v2602 = vsel %vm267, %v2591, 0
  %v2605 = vsel %vm267, %v2592, 0
  %2607 = vmatprep.subr.mxu0 0.0
  %2608 = vmatpush1.msra.mxu0 %v2594
  %2609 = vmatprep.subr.mxu0 0.0
  %2610 = vmatpush1.msra.mxu0 %v2595
  %2611 = vmatprep.subr.mxu0 0.0
  %2612 = vmatpush1.msra.mxu0 %v2596
  %2613 = vmatprep.subr.mxu0 0.0
  %2614 = vmatpush1.msra.mxu0 %v2597
  %2615 = vmatprep.subr.mxu0 0.0
  %2616 = vmatpush1.msra.mxu0 0.0
  %2617 = vmatprep.subr.mxu0 0.0
  %2618 = vmatpush1.msra.mxu0 0.0
  %2619 = vmatprep.subr.mxu0 0.0
  %2620 = vmatpush1.msra.mxu0 0.0
  %2621 = vmatprep.subr.mxu0 0.0
  %2622 = vmatpush1.msra.mxu0 0.0
  %2623 = vmatprep.subr.mxu0 0.0
  %2624 = vmatpush1.msra.mxu0 0.0
  %2625 = vmatprep.subr.mxu0 0.0
  %2626 = vmatpush1.msra.mxu0 0.0
  %2627 = vmatprep.subr.mxu0 0.0
  %2628 = vmatpush1.msra.mxu0 0.0
  %2629 = vmatprep.subr.mxu0 0.0
  %2630 = vmatpush1.msra.mxu0 0.0
  %2631 = vmatprep.subr.mxu0 0.0
  %2632 = vmatpush1.msra.mxu0 0.0
  %2633 = vmatprep.subr.mxu0 0.0
  %2634 = vmatpush1.msra.mxu0 0.0
  %2635 = vmatprep.subr.mxu0 0.0
  %2636 = vmatpush1.msra.mxu0 0.0
  %2637 = vmatprep.subr.mxu0 0.0
  %2638 = vmatpush1.msra.mxu0 0.0
  %2639 = vmatprep.subr.mxu0 0.0
  %2640 = vmatpush1.msra.mxu0 0.0
  %2641 = vmatprep.subr.mxu0 0.0
  %2642 = vmatpush1.msra.mxu0 0.0
  %2643 = vmatprep.subr.mxu0 0.0
  %2644 = vmatpush1.msra.mxu0 0.0
  %2645 = vmatprep.subr.mxu0 0.0
  %2646 = vmatpush1.msra.mxu0 0.0
  %2647 = vmatprep.subr.mxu0 0.0
  %2648 = vmatpush1.msra.mxu0 0.0
  %2649 = vmatprep.subr.mxu0 0.0
  %2650 = vmatpush1.msra.mxu0 0.0
  %2651 = vmatprep.subr.mxu0 0.0
  %2652 = vmatpush1.msra.mxu0 0.0
  %2653 = vmatprep.subr.mxu0 0.0
  %2654 = vmatpush1.msra.mxu0 0.0
  %2655 = vmatprep.subr.mxu0 0.0
  %2656 = vmatpush1.msra.mxu0 0.0
  %2657 = vmatprep.subr.mxu0 0.0
  %2658 = vmatpush1.msra.mxu0 0.0
  %2659 = vmatprep.subr.mxu0 0.0
  %2660 = vmatpush1.msra.mxu0 0.0
  %2661 = vmatprep.subr.mxu0 0.0
  %2662 = vmatpush1.msra.mxu0 0.0
  %2663 = vmatprep.subr.mxu0 0.0
  %2664 = vmatpush1.msra.mxu0 0.0
  %2665 = vmatprep.subr.mxu0 0.0
  %2666 = vmatpush1.msra.mxu0 0.0
  %2667 = vmatprep.subr.mxu0 0.0
  %2668 = vmatpush1.msra.mxu0 0.0
  %2669 = vmatprep.subr.mxu0 0.0
  %2670 = vmatpush1.msra.mxu0 0.0
  %2671 = vmatprep.mubr.f32.mxu0 0.0
  %2672 = vmatmul.mubr.f32.gmra.mrb[0].mxu0 %v2599
  %v2673 = vpop.f32.mrb[0].mxu0
  %v2674 = vadd.f32 0.0, %v2673
  %v2675 = vpop.f32.mrb[0].mxu0
  %2676 = vmatprep.mubr.f32.mxu0 0.0
  %2677 = vmatmul.mubr.f32.gmra.mrb[0].mxu0 %v2602
  %v2678 = vpop.f32.mrb[0].mxu0
  %v2679 = vadd.f32 0.0, %v2678
  %v2680 = vpop.f32.mrb[0].mxu0
  %2681 = vmatprep.mubr.f32.mxu0 0.0
  %2682 = vmatmul.mubr.f32.gmra.mrb[0].mxu0 %v2605
  %v2683 = vpop.f32.mrb[0].mxu0
  %v2684 = vadd.f32 0.0, %v2683
  %v2685 = vpop.f32.mrb[0].mxu0
  %2686 = vdwg.mxu0
  %v2687 = vadd.f32 %v2500, %v2674
  %v2688 = vadd.f32 %v2501, %v2679
  %v2689 = vadd.f32 %v2502, %v2684
  %s2690 = scalar_lea.vmem %s0, 672
  %v2691 = vld [vmem:[%s2690] sm:$0xff]
  %v2692 = vld [vmem:[%s2690 + $0x8] sm:$0xff]
  %v2693 = vld [vmem:[%s2690 + $0x10] sm:$0xff]
  %v2694 = vld [vmem:[%s2690 + $0x18] sm:$0xff]
  %v2695 = vld [vmem:[%s2690 + $0x20] sm:$0x3]
  %v2696 = vld [vmem:[%s2690 + $0x28] sm:$0x3]
  %2697 = vmatprep.subr.mxu0 0.0
  %2698 = vmatpush1.msra.mxu0 %v46
  %2699 = vmatprep.subr.mxu0 0.0
  %2700 = vmatpush1.msra.mxu0 %v47
  %2701 = vmatprep.subr.mxu0 0.0
  %2702 = vmatpush1.msra.mxu0 %v48
  %2703 = vmatprep.subr.mxu0 0.0
  %2704 = vmatpush1.msra.mxu0 %v49
  %2705 = vmatprep.subr.mxu0 0.0
  %2706 = vmatpush1.msra.mxu0 %v50
  %2707 = vmatprep.subr.mxu0 0.0
  %2708 = vmatpush1.msra.mxu0 %v51
  %2709 = vmatprep.subr.mxu0 0.0
  %2710 = vmatpush1.msra.mxu0 %v52
  %2711 = vmatprep.subr.mxu0 0.0
  %2712 = vmatpush1.msra.mxu0 %v53
  %2713 = vmatprep.subr.mxu0 0.0
  %2714 = vmatpush1.msra.mxu0 %v54
  %2715 = vmatprep.subr.mxu0 0.0
  %2716 = vmatpush1.msra.mxu0 %v55
  %2717 = vmatprep.subr.mxu0 0.0
  %2718 = vmatpush1.msra.mxu0 %v56
  %2719 = vmatprep.subr.mxu0 0.0
  %2720 = vmatpush1.msra.mxu0 %v57
  %2721 = vmatprep.subr.mxu0 0.0
  %2722 = vmatpush1.msra.mxu0 %v58
  %2723 = vmatprep.subr.mxu0 0.0
  %2724 = vmatpush1.msra.mxu0 %v59
  %2725 = vmatprep.subr.mxu0 0.0
  %2726 = vmatpush1.msra.mxu0 %v60
  %2727 = vmatprep.subr.mxu0 0.0
  %2728 = vmatpush1.msra.mxu0 %v61
  %2729 = vmatprep.subr.mxu0 0.0
  %2730 = vmatpush1.msra.mxu0 %v62
  %2731 = vmatprep.subr.mxu0 0.0
  %2732 = vmatpush1.msra.mxu0 %v63
  %2733 = vmatprep.subr.mxu0 0.0
  %2734 = vmatpush1.msra.mxu0 %v64
  %2735 = vmatprep.subr.mxu0 0.0
  %2736 = vmatpush1.msra.mxu0 %v65
  %2737 = vmatprep.subr.mxu0 0.0
  %2738 = vmatpush1.msra.mxu0 %v66
  %2739 = vmatprep.subr.mxu0 0.0
  %2740 = vmatpush1.msra.mxu0 %v67
  %2741 = vmatprep.subr.mxu0 0.0
  %2742 = vmatpush1.msra.mxu0 %v68
  %2743 = vmatprep.subr.mxu0 0.0
  %2744 = vmatpush1.msra.mxu0 %v69
  %2745 = vmatprep.subr.mxu0 0.0
  %2746 = vmatpush1.msra.mxu0 %v70
  %2747 = vmatprep.subr.mxu0 0.0
  %2748 = vmatpush1.msra.mxu0 %v71
  %2749 = vmatprep.subr.mxu0 0.0
  %2750 = vmatpush1.msra.mxu0 %v72
  %2751 = vmatprep.subr.mxu0 0.0
  %2752 = vmatpush1.msra.mxu0 %v73
  %2753 = vmatprep.subr.mxu0 0.0
  %2754 = vmatpush1.msra.mxu0 %v74
  %2755 = vmatprep.subr.mxu0 0.0
  %2756 = vmatpush1.msra.mxu0 %v75
  %2757 = vmatprep.subr.mxu0 0.0
  %2758 = vmatpush1.msra.mxu0 %v76
  %2759 = vmatprep.subr.mxu0 0.0
  %2760 = vmatpush1.msra.mxu0 %v77
  %2761 = vmatprep.mubr.f32.mxu0 %v2692
  %2762 = vmatmul.mubr.f32.gmra.mrb[0].mxu0 %v2691
  %v2763 = vpop.f32.mrb[0].mxu0
  %v2764 = vadd.f32 %v83, %v2763
  %v2765 = vpop.f32.mrb[0].mxu0
  %2766 = vmatprep.mubr.f32.mxu0 %v2694
  %2767 = vmatmul.mubr.f32.gmra.mrb[0].mxu0 %v2693
  %v2768 = vpop.f32.mrb[0].mxu0
  %v2769 = vadd.f32 %v83, %v2768
  %v2770 = vpop.f32.mrb[0].mxu0
  %2771 = vmatprep.mubr.f32.mxu0 %v2696
  %2772 = vmatmul.mubr.f32.gmra.mrb[0].mxu0 %v2695
  %v2773 = vpop.f32.mrb[0].mxu0
  %v2774 = vadd.f32 %v83, %v2773
  %v2775 = vpop.f32.mrb[0].mxu0
  %2776 = vdwg.mxu0
  %v2777 = vmax.f32 %v2764, 0.0
  %v2778 = vmax.f32 %v2769, 0.0
  %v2779 = vmax.f32 %v2774, 0.0
  %s2780 = scalar_lea.vmem %s3, 448
  %v2781 = vld [vmem:[%s2780] sm:$0xff]
  %v2782 = vld [vmem:[%s2780 + $0x8] sm:$0xff]
  %v2783 = vld [vmem:[%s2780 + $0x10] sm:$0xff]
  %v2784 = vld [vmem:[%s2780 + $0x18] sm:$0xff]
  %v2786 = vsel %vm267, %v2777, 0
  %v2789 = vsel %vm267, %v2778, 0
  %v2792 = vsel %vm267, %v2779, 0
  %2794 = vmatprep.subr.mxu0 0.0
  %2795 = vmatpush1.msra.mxu0 %v2781
  %2796 = vmatprep.subr.mxu0 0.0
  %2797 = vmatpush1.msra.mxu0 %v2782
  %2798 = vmatprep.subr.mxu0 0.0
  %2799 = vmatpush1.msra.mxu0 %v2783
  %2800 = vmatprep.subr.mxu0 0.0
  %2801 = vmatpush1.msra.mxu0 %v2784
  %2802 = vmatprep.subr.mxu0 0.0
  %2803 = vmatpush1.msra.mxu0 0.0
  %2804 = vmatprep.subr.mxu0 0.0
  %2805 = vmatpush1.msra.mxu0 0.0
  %2806 = vmatprep.subr.mxu0 0.0
  %2807 = vmatpush1.msra.mxu0 0.0
  %2808 = vmatprep.subr.mxu0 0.0
  %2809 = vmatpush1.msra.mxu0 0.0
  %2810 = vmatprep.subr.mxu0 0.0
  %2811 = vmatpush1.msra.mxu0 0.0
  %2812 = vmatprep.subr.mxu0 0.0
  %2813 = vmatpush1.msra.mxu0 0.0
  %2814 = vmatprep.subr.mxu0 0.0
  %2815 = vmatpush1.msra.mxu0 0.0
  %2816 = vmatprep.subr.mxu0 0.0
  %2817 = vmatpush1.msra.mxu0 0.0
  %2818 = vmatprep.subr.mxu0 0.0
  %2819 = vmatpush1.msra.mxu0 0.0
  %2820 = vmatprep.subr.mxu0 0.0
  %2821 = vmatpush1.msra.mxu0 0.0
  %2822 = vmatprep.subr.mxu0 0.0
  %2823 = vmatpush1.msra.mxu0 0.0
  %2824 = vmatprep.subr.mxu0 0.0
  %2825 = vmatpush1.msra.mxu0 0.0
  %2826 = vmatprep.subr.mxu0 0.0
  %2827 = vmatpush1.msra.mxu0 0.0
  %2828 = vmatprep.subr.mxu0 0.0
  %2829 = vmatpush1.msra.mxu0 0.0
  %2830 = vmatprep.subr.mxu0 0.0
  %2831 = vmatpush1.msra.mxu0 0.0
  %2832 = vmatprep.subr.mxu0 0.0
  %2833 = vmatpush1.msra.mxu0 0.0
  %2834 = vmatprep.subr.mxu0 0.0
  %2835 = vmatpush1.msra.mxu0 0.0
  %2836 = vmatprep.subr.mxu0 0.0
  %2837 = vmatpush1.msra.mxu0 0.0
  %2838 = vmatprep.subr.mxu0 0.0
  %2839 = vmatpush1.msra.mxu0 0.0
  %2840 = vmatprep.subr.mxu0 0.0
  %2841 = vmatpush1.msra.mxu0 0.0
  %2842 = vmatprep.subr.mxu0 0.0
  %2843 = vmatpush1.msra.mxu0 0.0
  %2844 = vmatprep.subr.mxu0 0.0
  %2845 = vmatpush1.msra.mxu0 0.0
  %2846 = vmatprep.subr.mxu0 0.0
  %2847 = vmatpush1.msra.mxu0 0.0
  %2848 = vmatprep.subr.mxu0 0.0
  %2849 = vmatpush1.msra.mxu0 0.0
  %2850 = vmatprep.subr.mxu0 0.0
  %2851 = vmatpush1.msra.mxu0 0.0
  %2852 = vmatprep.subr.mxu0 0.0
  %2853 = vmatpush1.msra.mxu0 0.0
  %2854 = vmatprep.subr.mxu0 0.0
  %2855 = vmatpush1.msra.mxu0 0.0
  %2856 = vmatprep.subr.mxu0 0.0
  %2857 = vmatpush1.msra.mxu0 0.0
  %2858 = vmatprep.mubr.f32.mxu0 0.0
  %2859 = vmatmul.mubr.f32.gmra.mrb[0].mxu0 %v2786
  %v2860 = vpop.f32.mrb[0].mxu0
  %v2861 = vadd.f32 0.0, %v2860
  %v2862 = vpop.f32.mrb[0].mxu0
  %2863 = vmatprep.mubr.f32.mxu0 0.0
  %2864 = vmatmul.mubr.f32.gmra.mrb[0].mxu0 %v2789
  %v2865 = vpop.f32.mrb[0].mxu0
  %v2866 = vadd.f32 0.0, %v2865
  %v2867 = vpop.f32.mrb[0].mxu0
  %2868 = vmatprep.mubr.f32.mxu0 0.0
  %2869 = vmatmul.mubr.f32.gmra.mrb[0].mxu0 %v2792
  %v2870 = vpop.f32.mrb[0].mxu0
  %v2871 = vadd.f32 0.0, %v2870
  %v2872 = vpop.f32.mrb[0].mxu0
  %2873 = vdwg.mxu0
  %v2874 = vadd.f32 %v2687, %v2861
  %v2875 = vadd.f32 %v2688, %v2866
  %v2876 = vadd.f32 %v2689, %v2871
  %s2877 = scalar_lea.vmem %s0, 720
  %v2878 = vld [vmem:[%s2877] sm:$0xff]
  %v2879 = vld [vmem:[%s2877 + $0x8] sm:$0xff]
  %v2880 = vld [vmem:[%s2877 + $0x10] sm:$0xff]
  %v2881 = vld [vmem:[%s2877 + $0x18] sm:$0xff]
  %v2882 = vld [vmem:[%s2877 + $0x20] sm:$0x3]
  %v2883 = vld [vmem:[%s2877 + $0x28] sm:$0x3]
  %2884 = vmatprep.subr.mxu0 0.0
  %2885 = vmatpush1.msra.mxu0 %v46
  %2886 = vmatprep.subr.mxu0 0.0
  %2887 = vmatpush1.msra.mxu0 %v47
  %2888 = vmatprep.subr.mxu0 0.0
  %2889 = vmatpush1.msra.mxu0 %v48
  %2890 = vmatprep.subr.mxu0 0.0
  %2891 = vmatpush1.msra.mxu0 %v49
  %2892 = vmatprep.subr.mxu0 0.0
  %2893 = vmatpush1.msra.mxu0 %v50
  %2894 = vmatprep.subr.mxu0 0.0
  %2895 = vmatpush1.msra.mxu0 %v51
  %2896 = vmatprep.subr.mxu0 0.0
  %2897 = vmatpush1.msra.mxu0 %v52
  %2898 = vmatprep.subr.mxu0 0.0
  %2899 = vmatpush1.msra.mxu0 %v53
  %2900 = vmatprep.subr.mxu0 0.0
  %2901 = vmatpush1.msra.mxu0 %v54
  %2902 = vmatprep.subr.mxu0 0.0
  %2903 = vmatpush1.msra.mxu0 %v55
  %2904 = vmatprep.subr.mxu0 0.0
  %2905 = vmatpush1.msra.mxu0 %v56
  %2906 = vmatprep.subr.mxu0 0.0
  %2907 = vmatpush1.msra.mxu0 %v57
  %2908 = vmatprep.subr.mxu0 0.0
  %2909 = vmatpush1.msra.mxu0 %v58
  %2910 = vmatprep.subr.mxu0 0.0
  %2911 = vmatpush1.msra.mxu0 %v59
  %2912 = vmatprep.subr.mxu0 0.0
  %2913 = vmatpush1.msra.mxu0 %v60
  %2914 = vmatprep.subr.mxu0 0.0
  %2915 = vmatpush1.msra.mxu0 %v61
  %2916 = vmatprep.subr.mxu0 0.0
  %2917 = vmatpush1.msra.mxu0 %v62
  %2918 = vmatprep.subr.mxu0 0.0
  %2919 = vmatpush1.msra.mxu0 %v63
  %2920 = vmatprep.subr.mxu0 0.0
  %2921 = vmatpush1.msra.mxu0 %v64
  %2922 = vmatprep.subr.mxu0 0.0
  %2923 = vmatpush1.msra.mxu0 %v65
  %2924 = vmatprep.subr.mxu0 0.0
  %2925 = vmatpush1.msra.mxu0 %v66
  %2926 = vmatprep.subr.mxu0 0.0
  %2927 = vmatpush1.msra.mxu0 %v67
  %2928 = vmatprep.subr.mxu0 0.0
  %2929 = vmatpush1.msra.mxu0 %v68
  %2930 = vmatprep.subr.mxu0 0.0
  %2931 = vmatpush1.msra.mxu0 %v69
  %2932 = vmatprep.subr.mxu0 0.0
  %2933 = vmatpush1.msra.mxu0 %v70
  %2934 = vmatprep.subr.mxu0 0.0
  %2935 = vmatpush1.msra.mxu0 %v71
  %2936 = vmatprep.subr.mxu0 0.0
  %2937 = vmatpush1.msra.mxu0 %v72
  %2938 = vmatprep.subr.mxu0 0.0
  %2939 = vmatpush1.msra.mxu0 %v73
  %2940 = vmatprep.subr.mxu0 0.0
  %2941 = vmatpush1.msra.mxu0 %v74
  %2942 = vmatprep.subr.mxu0 0.0
  %2943 = vmatpush1.msra.mxu0 %v75
  %2944 = vmatprep.subr.mxu0 0.0
  %2945 = vmatpush1.msra.mxu0 %v76
  %2946 = vmatprep.subr.mxu0 0.0
  %2947 = vmatpush1.msra.mxu0 %v77
  %2948 = vmatprep.mubr.f32.mxu0 %v2879
  %2949 = vmatmul.mubr.f32.gmra.mrb[0].mxu0 %v2878
  %v2950 = vpop.f32.mrb[0].mxu0
  %v2951 = vadd.f32 %v83, %v2950
  %v2952 = vpop.f32.mrb[0].mxu0
  %2953 = vmatprep.mubr.f32.mxu0 %v2881
  %2954 = vmatmul.mubr.f32.gmra.mrb[0].mxu0 %v2880
  %v2955 = vpop.f32.mrb[0].mxu0
  %v2956 = vadd.f32 %v83, %v2955
  %v2957 = vpop.f32.mrb[0].mxu0
  %2958 = vmatprep.mubr.f32.mxu0 %v2883
  %2959 = vmatmul.mubr.f32.gmra.mrb[0].mxu0 %v2882
  %v2960 = vpop.f32.mrb[0].mxu0
  %v2961 = vadd.f32 %v83, %v2960
  %v2962 = vpop.f32.mrb[0].mxu0
  %2963 = vdwg.mxu0
  %v2964 = vmax.f32 %v2951, 0.0
  %v2965 = vmax.f32 %v2956, 0.0
  %v2966 = vmax.f32 %v2961, 0.0
  %s2967 = scalar_lea.vmem %s3, 480
  %v2968 = vld [vmem:[%s2967] sm:$0xff]
  %v2969 = vld [vmem:[%s2967 + $0x8] sm:$0xff]
  %v2970 = vld [vmem:[%s2967 + $0x10] sm:$0xff]
  %v2971 = vld [vmem:[%s2967 + $0x18] sm:$0xff]
  %v2973 = vsel %vm267, %v2964, 0
  %v2976 = vsel %vm267, %v2965, 0
  %v2979 = vsel %vm267, %v2966, 0
  %2981 = vmatprep.subr.mxu0 0.0
  %2982 = vmatpush1.msra.mxu0 %v2968
  %2983 = vmatprep.subr.mxu0 0.0
  %2984 = vmatpush1.msra.mxu0 %v2969
  %2985 = vmatprep.subr.mxu0 0.0
  %2986 = vmatpush1.msra.mxu0 %v2970
  %2987 = vmatprep.subr.mxu0 0.0
  %2988 = vmatpush1.msra.mxu0 %v2971
  %2989 = vmatprep.subr.mxu0 0.0
  %2990 = vmatpush1.msra.mxu0 0.0
  %2991 = vmatprep.subr.mxu0 0.0
  %2992 = vmatpush1.msra.mxu0 0.0
  %2993 = vmatprep.subr.mxu0 0.0
  %2994 = vmatpush1.msra.mxu0 0.0
  %2995 = vmatprep.subr.mxu0 0.0
  %2996 = vmatpush1.msra.mxu0 0.0
  %2997 = vmatprep.subr.mxu0 0.0
  %2998 = vmatpush1.msra.mxu0 0.0
  %2999 = vmatprep.subr.mxu0 0.0
  %3000 = vmatpush1.msra.mxu0 0.0
  %3001 = vmatprep.subr.mxu0 0.0
  %3002 = vmatpush1.msra.mxu0 0.0
  %3003 = vmatprep.subr.mxu0 0.0
  %3004 = vmatpush1.msra.mxu0 0.0
  %3005 = vmatprep.subr.mxu0 0.0
  %3006 = vmatpush1.msra.mxu0 0.0
  %3007 = vmatprep.subr.mxu0 0.0
  %3008 = vmatpush1.msra.mxu0 0.0
  %3009 = vmatprep.subr.mxu0 0.0
  %3010 = vmatpush1.msra.mxu0 0.0
  %3011 = vmatprep.subr.mxu0 0.0
  %3012 = vmatpush1.msra.mxu0 0.0
  %3013 = vmatprep.subr.mxu0 0.0
  %3014 = vmatpush1.msra.mxu0 0.0
  %3015 = vmatprep.subr.mxu0 0.0
  %3016 = vmatpush1.msra.mxu0 0.0
  %3017 = vmatprep.subr.mxu0 0.0
  %3018 = vmatpush1.msra.mxu0 0.0
  %3019 = vmatprep.subr.mxu0 0.0
  %3020 = vmatpush1.msra.mxu0 0.0
  %3021 = vmatprep.subr.mxu0 0.0
  %3022 = vmatpush1.msra.mxu0 0.0
  %3023 = vmatprep.subr.mxu0 0.0
  %3024 = vmatpush1.msra.mxu0 0.0
  %3025 = vmatprep.subr.mxu0 0.0
  %3026 = vmatpush1.msra.mxu0 0.0
  %3027 = vmatprep.subr.mxu0 0.0
  %3028 = vmatpush1.msra.mxu0 0.0
  %3029 = vmatprep.subr.mxu0 0.0
  %3030 = vmatpush1.msra.mxu0 0.0
  %3031 = vmatprep.subr.mxu0 0.0
  %3032 = vmatpush1.msra.mxu0 0.0
  %3033 = vmatprep.subr.mxu0 0.0
  %3034 = vmatpush1.msra.mxu0 0.0
  %3035 = vmatprep.subr.mxu0 0.0
  %3036 = vmatpush1.msra.mxu0 0.0
  %3037 = vmatprep.subr.mxu0 0.0
  %3038 = vmatpush1.msra.mxu0 0.0
  %3039 = vmatprep.subr.mxu0 0.0
  %3040 = vmatpush1.msra.mxu0 0.0
  %3041 = vmatprep.subr.mxu0 0.0
  %3042 = vmatpush1.msra.mxu0 0.0
  %3043 = vmatprep.subr.mxu0 0.0
  %3044 = vmatpush1.msra.mxu0 0.0
  %3045 = vmatprep.mubr.f32.mxu0 0.0
  %3046 = vmatmul.mubr.f32.gmra.mrb[0].mxu0 %v2973
  %v3047 = vpop.f32.mrb[0].mxu0
  %v3048 = vadd.f32 0.0, %v3047
  %v3049 = vpop.f32.mrb[0].mxu0
  %3050 = vmatprep.mubr.f32.mxu0 0.0
  %3051 = vmatmul.mubr.f32.gmra.mrb[0].mxu0 %v2976
  %v3052 = vpop.f32.mrb[0].mxu0
  %v3053 = vadd.f32 0.0, %v3052
  %v3054 = vpop.f32.mrb[0].mxu0
  %3055 = vmatprep.mubr.f32.mxu0 0.0
  %3056 = vmatmul.mubr.f32.gmra.mrb[0].mxu0 %v2979
  %v3057 = vpop.f32.mrb[0].mxu0
  %v3058 = vadd.f32 0.0, %v3057
  %v3059 = vpop.f32.mrb[0].mxu0
  %3060 = vdwg.mxu0
  %v3061 = vadd.f32 %v2874, %v3048
  %v3062 = vadd.f32 %v2875, %v3053
  %v3063 = vadd.f32 %v2876, %v3058
  %v3064 = vld [vmem:[%s4] sm:$0x1]
  %v3066 = vlaneseq
  %v3067 = vshrl.u32 %v3066, 7
  %v3068 = vsub.s32 0, %v3067
  %v3069 = vrot.slane %v3064, %v3068
  %v3071 = vadd.f32 %v3061, %v3069
  %v3072 = vadd.f32 %v3062, %v3069
  %v3073 = vadd.f32 %v3063, %v3069
  %v3074 = vmax.f32 %v3071, 0.0
  %v3075 = vmax.f32 %v3072, 0.0
  %v3076 = vmax.f32 %v3073, 0.0
  %v3077 = vld [vmem:[%s5] sm:$0xff]
  %v3078 = vld [vmem:[%s5 + $0x8] sm:$0xff]
  %v3079 = vld [vmem:[%s5 + $0x10] sm:$0xff]
  %v3080 = vld [vmem:[%s5 + $0x18] sm:$0xff]
  %v3081 = vld [vmem:[%s5 + $0x20] sm:$0xff]
  %v3082 = vld [vmem:[%s5 + $0x28] sm:$0xff]
  %v3083 = vld [vmem:[%s5 + $0x30] sm:$0xff]
  %v3084 = vld [vmem:[%s5 + $0x38] sm:$0xff]
  %s3085 = scalar_lea.vmem %s5, 64
  %v3086 = vld [vmem:[%s3085] sm:$0xff]
  %v3087 = vld [vmem:[%s3085 + $0x8] sm:$0xff]
  %v3088 = vld [vmem:[%s3085 + $0x10] sm:$0xff]
  %v3089 = vld [vmem:[%s3085 + $0x18] sm:$0xff]
  %v3090 = vld [vmem:[%s3085 + $0x20] sm:$0xff]
  %v3091 = vld [vmem:[%s3085 + $0x28] sm:$0xff]
  %v3092 = vld [vmem:[%s3085 + $0x30] sm:$0xff]
  %v3093 = vld [vmem:[%s3085 + $0x38] sm:$0xff]
  %v3095 = vrot.slane %v3074, 2
  %vm3096 = vcmask 523264
  %v3097 = vsel %vm3096, %v3095, 0
  %3099 = vmatprep.subr.mxu0 0.0
  %3100 = vmatpush1.msra.mxu0 %v3086
  %3101 = vmatprep.subr.mxu0 0.0
  %3102 = vmatpush1.msra.mxu0 %v3087
  %3103 = vmatprep.subr.mxu0 0.0
  %3104 = vmatpush1.msra.mxu0 %v3088
  %3105 = vmatprep.subr.mxu0 0.0
  %3106 = vmatpush1.msra.mxu0 %v3089
  %3107 = vmatprep.subr.mxu0 0.0
  %3108 = vmatpush1.msra.mxu0 %v3090
  %3109 = vmatprep.subr.mxu0 0.0
  %3110 = vmatpush1.msra.mxu0 %v3091
  %3111 = vmatprep.subr.mxu0 0.0
  %3112 = vmatpush1.msra.mxu0 %v3092
  %3113 = vmatprep.subr.mxu0 0.0
  %3114 = vmatpush1.msra.mxu0 %v3093
  %3115 = vmatprep.subr.mxu0 0.0
  %3116 = vmatpush1.msra.mxu0 0.0
  %3117 = vmatprep.subr.mxu0 0.0
  %3118 = vmatpush1.msra.mxu0 0.0
  %3119 = vmatprep.subr.mxu0 0.0
  %3120 = vmatpush1.msra.mxu0 0.0
  %3121 = vmatprep.subr.mxu0 0.0
  %3122 = vmatpush1.msra.mxu0 0.0
  %3123 = vmatprep.subr.mxu0 0.0
  %3124 = vmatpush1.msra.mxu0 0.0
  %3125 = vmatprep.subr.mxu0 0.0
  %3126 = vmatpush1.msra.mxu0 0.0
  %3127 = vmatprep.subr.mxu0 0.0
  %3128 = vmatpush1.msra.mxu0 0.0
  %3129 = vmatprep.subr.mxu0 0.0
  %3130 = vmatpush1.msra.mxu0 0.0
  %3131 = vmatprep.subr.mxu0 0.0
  %3132 = vmatpush1.msra.mxu0 0.0
  %3133 = vmatprep.subr.mxu0 0.0
  %3134 = vmatpush1.msra.mxu0 0.0
  %3135 = vmatprep.subr.mxu0 0.0
  %3136 = vmatpush1.msra.mxu0 0.0
  %3137 = vmatprep.subr.mxu0 0.0
  %3138 = vmatpush1.msra.mxu0 0.0
  %3139 = vmatprep.subr.mxu0 0.0
  %3140 = vmatpush1.msra.mxu0 0.0
  %3141 = vmatprep.subr.mxu0 0.0
  %3142 = vmatpush1.msra.mxu0 0.0
  %3143 = vmatprep.subr.mxu0 0.0
  %3144 = vmatpush1.msra.mxu0 0.0
  %3145 = vmatprep.subr.mxu0 0.0
  %3146 = vmatpush1.msra.mxu0 0.0
  %3147 = vmatprep.subr.mxu0 0.0
  %3148 = vmatpush1.msra.mxu0 0.0
  %3149 = vmatprep.subr.mxu0 0.0
  %3150 = vmatpush1.msra.mxu0 0.0
  %3151 = vmatprep.subr.mxu0 0.0
  %3152 = vmatpush1.msra.mxu0 0.0
  %3153 = vmatprep.subr.mxu0 0.0
  %3154 = vmatpush1.msra.mxu0 0.0
  %3155 = vmatprep.subr.mxu0 0.0
  %3156 = vmatpush1.msra.mxu0 0.0
  %3157 = vmatprep.subr.mxu0 0.0
  %3158 = vmatpush1.msra.mxu0 0.0
  %3159 = vmatprep.subr.mxu0 0.0
  %3160 = vmatpush1.msra.mxu0 0.0
  %3161 = vmatprep.subr.mxu0 0.0
  %3162 = vmatpush1.msra.mxu0 0.0
  %3163 = vmatprep.mubr.f32.mxu0 0.0
  %3164 = vmatmul.mubr.f32.gmra.mrb[0].mxu0 %v3097
  %v3165 = vpop.f32.mrb[0].mxu0
  %v3166 = vadd.f32 0.0, %v3165
  %v3167 = vpop.f32.mrb[0].mxu0
  %3168 = vdwg.mxu0
  %v3169 = vsel %vm3096, %v3074, 0
  %3171 = vmatprep.subr.mxu0 0.0
  %3172 = vmatpush1.msra.mxu0 %v3077
  %3173 = vmatprep.subr.mxu0 0.0
  %3174 = vmatpush1.msra.mxu0 %v3078
  %3175 = vmatprep.subr.mxu0 0.0
  %3176 = vmatpush1.msra.mxu0 %v3079
  %3177 = vmatprep.subr.mxu0 0.0
  %3178 = vmatpush1.msra.mxu0 %v3080
  %3179 = vmatprep.subr.mxu0 0.0
  %3180 = vmatpush1.msra.mxu0 %v3081
  %3181 = vmatprep.subr.mxu0 0.0
  %3182 = vmatpush1.msra.mxu0 %v3082
  %3183 = vmatprep.subr.mxu0 0.0
  %3184 = vmatpush1.msra.mxu0 %v3083
  %3185 = vmatprep.subr.mxu0 0.0
  %3186 = vmatpush1.msra.mxu0 %v3084
  %3187 = vmatprep.subr.mxu0 0.0
  %3188 = vmatpush1.msra.mxu0 0.0
  %3189 = vmatprep.subr.mxu0 0.0
  %3190 = vmatpush1.msra.mxu0 0.0
  %3191 = vmatprep.subr.mxu0 0.0
  %3192 = vmatpush1.msra.mxu0 0.0
  %3193 = vmatprep.subr.mxu0 0.0
  %3194 = vmatpush1.msra.mxu0 0.0
  %3195 = vmatprep.subr.mxu0 0.0
  %3196 = vmatpush1.msra.mxu0 0.0
  %3197 = vmatprep.subr.mxu0 0.0
  %3198 = vmatpush1.msra.mxu0 0.0
  %3199 = vmatprep.subr.mxu0 0.0
  %3200 = vmatpush1.msra.mxu0 0.0
  %3201 = vmatprep.subr.mxu0 0.0
  %3202 = vmatpush1.msra.mxu0 0.0
  %3203 = vmatprep.subr.mxu0 0.0
  %3204 = vmatpush1.msra.mxu0 0.0
  %3205 = vmatprep.subr.mxu0 0.0
  %3206 = vmatpush1.msra.mxu0 0.0
  %3207 = vmatprep.subr.mxu0 0.0
  %3208 = vmatpush1.msra.mxu0 0.0
  %3209 = vmatprep.subr.mxu0 0.0
  %3210 = vmatpush1.msra.mxu0 0.0
  %3211 = vmatprep.subr.mxu0 0.0
  %3212 = vmatpush1.msra.mxu0 0.0
  %3213 = vmatprep.subr.mxu0 0.0
  %3214 = vmatpush1.msra.mxu0 0.0
  %3215 = vmatprep.subr.mxu0 0.0
  %3216 = vmatpush1.msra.mxu0 0.0
  %3217 = vmatprep.subr.mxu0 0.0
  %3218 = vmatpush1.msra.mxu0 0.0
  %3219 = vmatprep.subr.mxu0 0.0
  %3220 = vmatpush1.msra.mxu0 0.0
  %3221 = vmatprep.subr.mxu0 0.0
  %3222 = vmatpush1.msra.mxu0 0.0
  %3223 = vmatprep.subr.mxu0 0.0
  %3224 = vmatpush1.msra.mxu0 0.0
  %3225 = vmatprep.subr.mxu0 0.0
  %3226 = vmatpush1.msra.mxu0 0.0
  %3227 = vmatprep.subr.mxu0 0.0
  %3228 = vmatpush1.msra.mxu0 0.0
  %3229 = vmatprep.subr.mxu0 0.0
  %3230 = vmatpush1.msra.mxu0 0.0
  %3231 = vmatprep.subr.mxu0 0.0
  %3232 = vmatpush1.msra.mxu0 0.0
  %3233 = vmatprep.subr.mxu0 0.0
  %3234 = vmatpush1.msra.mxu0 0.0
  %3235 = vmatprep.mubr.f32.mxu0 0.0
  %3236 = vmatmul.mubr.f32.gmra.mrb[0].mxu0 %v3169
  %v3237 = vpop.f32.mrb[0].mxu0
  %v3238 = vadd.f32 %v3166, %v3237
  %v3239 = vpop.f32.mrb[0].mxu0
  %3240 = vdwg.mxu0
  %s3241 = scalar_lea.vmem %s5, 128
  %v3242 = vld [vmem:[%s3241] sm:$0xff]
  %v3243 = vld [vmem:[%s3241 + $0x8] sm:$0xff]
  %v3244 = vld [vmem:[%s3241 + $0x10] sm:$0xff]
  %v3245 = vld [vmem:[%s3241 + $0x18] sm:$0xff]
  %v3246 = vld [vmem:[%s3241 + $0x20] sm:$0xff]
  %v3247 = vld [vmem:[%s3241 + $0x28] sm:$0xff]
  %v3248 = vld [vmem:[%s3241 + $0x30] sm:$0xff]
  %v3249 = vld [vmem:[%s3241 + $0x38] sm:$0xff]
  %v3250 = vrot.slane %v3074, 4
  %v3251 = vsel %vm3096, %v3250, 0
  %3253 = vmatprep.subr.mxu0 0.0
  %3254 = vmatpush1.msra.mxu0 %v3242
  %3255 = vmatprep.subr.mxu0 0.0
  %3256 = vmatpush1.msra.mxu0 %v3243
  %3257 = vmatprep.subr.mxu0 0.0
  %3258 = vmatpush1.msra.mxu0 %v3244
  %3259 = vmatprep.subr.mxu0 0.0
  %3260 = vmatpush1.msra.mxu0 %v3245
  %3261 = vmatprep.subr.mxu0 0.0
  %3262 = vmatpush1.msra.mxu0 %v3246
  %3263 = vmatprep.subr.mxu0 0.0
  %3264 = vmatpush1.msra.mxu0 %v3247
  %3265 = vmatprep.subr.mxu0 0.0
  %3266 = vmatpush1.msra.mxu0 %v3248
  %3267 = vmatprep.subr.mxu0 0.0
  %3268 = vmatpush1.msra.mxu0 %v3249
  %3269 = vmatprep.subr.mxu0 0.0
  %3270 = vmatpush1.msra.mxu0 0.0
  %3271 = vmatprep.subr.mxu0 0.0
  %3272 = vmatpush1.msra.mxu0 0.0
  %3273 = vmatprep.subr.mxu0 0.0
  %3274 = vmatpush1.msra.mxu0 0.0
  %3275 = vmatprep.subr.mxu0 0.0
  %3276 = vmatpush1.msra.mxu0 0.0
  %3277 = vmatprep.subr.mxu0 0.0
  %3278 = vmatpush1.msra.mxu0 0.0
  %3279 = vmatprep.subr.mxu0 0.0
  %3280 = vmatpush1.msra.mxu0 0.0
  %3281 = vmatprep.subr.mxu0 0.0
  %3282 = vmatpush1.msra.mxu0 0.0
  %3283 = vmatprep.subr.mxu0 0.0
  %3284 = vmatpush1.msra.mxu0 0.0
  %3285 = vmatprep.subr.mxu0 0.0
  %3286 = vmatpush1.msra.mxu0 0.0
  %3287 = vmatprep.subr.mxu0 0.0
  %3288 = vmatpush1.msra.mxu0 0.0
  %3289 = vmatprep.subr.mxu0 0.0
  %3290 = vmatpush1.msra.mxu0 0.0
  %3291 = vmatprep.subr.mxu0 0.0
  %3292 = vmatpush1.msra.mxu0 0.0
  %3293 = vmatprep.subr.mxu0 0.0
  %3294 = vmatpush1.msra.mxu0 0.0
  %3295 = vmatprep.subr.mxu0 0.0
  %3296 = vmatpush1.msra.mxu0 0.0
  %3297 = vmatprep.subr.mxu0 0.0
  %3298 = vmatpush1.msra.mxu0 0.0
  %3299 = vmatprep.subr.mxu0 0.0
  %3300 = vmatpush1.msra.mxu0 0.0
  %3301 = vmatprep.subr.mxu0 0.0
  %3302 = vmatpush1.msra.mxu0 0.0
  %3303 = vmatprep.subr.mxu0 0.0
  %3304 = vmatpush1.msra.mxu0 0.0
  %3305 = vmatprep.subr.mxu0 0.0
  %3306 = vmatpush1.msra.mxu0 0.0
  %3307 = vmatprep.subr.mxu0 0.0
  %3308 = vmatpush1.msra.mxu0 0.0
  %3309 = vmatprep.subr.mxu0 0.0
  %3310 = vmatpush1.msra.mxu0 0.0
  %3311 = vmatprep.subr.mxu0 0.0
  %3312 = vmatpush1.msra.mxu0 0.0
  %3313 = vmatprep.subr.mxu0 0.0
  %3314 = vmatpush1.msra.mxu0 0.0
  %3315 = vmatprep.subr.mxu0 0.0
  %3316 = vmatpush1.msra.mxu0 0.0
  %3317 = vmatprep.mubr.f32.mxu0 0.0
  %3318 = vmatmul.mubr.f32.gmra.mrb[0].mxu0 %v3251
  %v3319 = vpop.f32.mrb[0].mxu0
  %v3320 = vadd.f32 0.0, %v3319
  %v3321 = vpop.f32.mrb[0].mxu0
  %3322 = vdwg.mxu0
  %v3323 = vadd.f32 %v3238, %v3320
  %s3324 = scalar_lea.vmem %s5, 192
  %v3325 = vld [vmem:[%s3324] sm:$0xff]
  %v3326 = vld [vmem:[%s3324 + $0x8] sm:$0xff]
  %v3327 = vld [vmem:[%s3324 + $0x10] sm:$0xff]
  %v3328 = vld [vmem:[%s3324 + $0x18] sm:$0xff]
  %v3329 = vld [vmem:[%s3324 + $0x20] sm:$0xff]
  %v3330 = vld [vmem:[%s3324 + $0x28] sm:$0xff]
  %v3331 = vld [vmem:[%s3324 + $0x30] sm:$0xff]
  %v3332 = vld [vmem:[%s3324 + $0x38] sm:$0xff]
  %v3333 = vrot.slane %v3074, 6
  %v3334 = vsel %vm3096, %v3333, 0
  %3336 = vmatprep.subr.mxu0 0.0
  %3337 = vmatpush1.msra.mxu0 %v3325
  %3338 = vmatprep.subr.mxu0 0.0
  %3339 = vmatpush1.msra.mxu0 %v3326
  %3340 = vmatprep.subr.mxu0 0.0
  %3341 = vmatpush1.msra.mxu0 %v3327
  %3342 = vmatprep.subr.mxu0 0.0
  %3343 = vmatpush1.msra.mxu0 %v3328
  %3344 = vmatprep.subr.mxu0 0.0
  %3345 = vmatpush1.msra.mxu0 %v3329
  %3346 = vmatprep.subr.mxu0 0.0
  %3347 = vmatpush1.msra.mxu0 %v3330
  %3348 = vmatprep.subr.mxu0 0.0
  %3349 = vmatpush1.msra.mxu0 %v3331
  %3350 = vmatprep.subr.mxu0 0.0
  %3351 = vmatpush1.msra.mxu0 %v3332
  %3352 = vmatprep.subr.mxu0 0.0
  %3353 = vmatpush1.msra.mxu0 0.0
  %3354 = vmatprep.subr.mxu0 0.0
  %3355 = vmatpush1.msra.mxu0 0.0
  %3356 = vmatprep.subr.mxu0 0.0
  %3357 = vmatpush1.msra.mxu0 0.0
  %3358 = vmatprep.subr.mxu0 0.0
  %3359 = vmatpush1.msra.mxu0 0.0
  %3360 = vmatprep.subr.mxu0 0.0
  %3361 = vmatpush1.msra.mxu0 0.0
  %3362 = vmatprep.subr.mxu0 0.0
  %3363 = vmatpush1.msra.mxu0 0.0
  %3364 = vmatprep.subr.mxu0 0.0
  %3365 = vmatpush1.msra.mxu0 0.0
  %3366 = vmatprep.subr.mxu0 0.0
  %3367 = vmatpush1.msra.mxu0 0.0
  %3368 = vmatprep.subr.mxu0 0.0
  %3369 = vmatpush1.msra.mxu0 0.0
  %3370 = vmatprep.subr.mxu0 0.0
  %3371 = vmatpush1.msra.mxu0 0.0
  %3372 = vmatprep.subr.mxu0 0.0
  %3373 = vmatpush1.msra.mxu0 0.0
  %3374 = vmatprep.subr.mxu0 0.0
  %3375 = vmatpush1.msra.mxu0 0.0
  %3376 = vmatprep.subr.mxu0 0.0
  %3377 = vmatpush1.msra.mxu0 0.0
  %3378 = vmatprep.subr.mxu0 0.0
  %3379 = vmatpush1.msra.mxu0 0.0
  %3380 = vmatprep.subr.mxu0 0.0
  %3381 = vmatpush1.msra.mxu0 0.0
  %3382 = vmatprep.subr.mxu0 0.0
  %3383 = vmatpush1.msra.mxu0 0.0
  %3384 = vmatprep.subr.mxu0 0.0
  %3385 = vmatpush1.msra.mxu0 0.0
  %3386 = vmatprep.subr.mxu0 0.0
  %3387 = vmatpush1.msra.mxu0 0.0
  %3388 = vmatprep.subr.mxu0 0.0
  %3389 = vmatpush1.msra.mxu0 0.0
  %3390 = vmatprep.subr.mxu0 0.0
  %3391 = vmatpush1.msra.mxu0 0.0
  %3392 = vmatprep.subr.mxu0 0.0
  %3393 = vmatpush1.msra.mxu0 0.0
  %3394 = vmatprep.subr.mxu0 0.0
  %3395 = vmatpush1.msra.mxu0 0.0
  %3396 = vmatprep.subr.mxu0 0.0
  %3397 = vmatpush1.msra.mxu0 0.0
  %3398 = vmatprep.subr.mxu0 0.0
  %3399 = vmatpush1.msra.mxu0 0.0
  %3400 = vmatprep.mubr.f32.mxu0 0.0
  %3401 = vmatmul.mubr.f32.gmra.mrb[0].mxu0 %v3334
  %v3402 = vpop.f32.mrb[0].mxu0
  %v3403 = vadd.f32 0.0, %v3402
  %v3404 = vpop.f32.mrb[0].mxu0
  %3405 = vdwg.mxu0
  %v3406 = vadd.f32 %v3323, %v3403
  %s3407 = scalar_lea.vmem %s5, 256
  %v3408 = vld [vmem:[%s3407] sm:$0xff]
  %v3409 = vld [vmem:[%s3407 + $0x8] sm:$0xff]
  %v3410 = vld [vmem:[%s3407 + $0x10] sm:$0xff]
  %v3411 = vld [vmem:[%s3407 + $0x18] sm:$0xff]
  %v3412 = vld [vmem:[%s3407 + $0x20] sm:$0xff]
  %v3413 = vld [vmem:[%s3407 + $0x28] sm:$0xff]
  %v3414 = vld [vmem:[%s3407 + $0x30] sm:$0xff]
  %v3415 = vld [vmem:[%s3407 + $0x38] sm:$0xff]
  %v3417 = vsel %vm3096, %v3075, 0
  %3419 = vmatprep.subr.mxu0 0.0
  %3420 = vmatpush1.msra.mxu0 %v3408
  %3421 = vmatprep.subr.mxu0 0.0
  %3422 = vmatpush1.msra.mxu0 %v3409
  %3423 = vmatprep.subr.mxu0 0.0
  %3424 = vmatpush1.msra.mxu0 %v3410
  %3425 = vmatprep.subr.mxu0 0.0
  %3426 = vmatpush1.msra.mxu0 %v3411
  %3427 = vmatprep.subr.mxu0 0.0
  %3428 = vmatpush1.msra.mxu0 %v3412
  %3429 = vmatprep.subr.mxu0 0.0
  %3430 = vmatpush1.msra.mxu0 %v3413
  %3431 = vmatprep.subr.mxu0 0.0
  %3432 = vmatpush1.msra.mxu0 %v3414
  %3433 = vmatprep.subr.mxu0 0.0
  %3434 = vmatpush1.msra.mxu0 %v3415
  %3435 = vmatprep.subr.mxu0 0.0
  %3436 = vmatpush1.msra.mxu0 0.0
  %3437 = vmatprep.subr.mxu0 0.0
  %3438 = vmatpush1.msra.mxu0 0.0
  %3439 = vmatprep.subr.mxu0 0.0
  %3440 = vmatpush1.msra.mxu0 0.0
  %3441 = vmatprep.subr.mxu0 0.0
  %3442 = vmatpush1.msra.mxu0 0.0
  %3443 = vmatprep.subr.mxu0 0.0
  %3444 = vmatpush1.msra.mxu0 0.0
  %3445 = vmatprep.subr.mxu0 0.0
  %3446 = vmatpush1.msra.mxu0 0.0
  %3447 = vmatprep.subr.mxu0 0.0
  %3448 = vmatpush1.msra.mxu0 0.0
  %3449 = vmatprep.subr.mxu0 0.0
  %3450 = vmatpush1.msra.mxu0 0.0
  %3451 = vmatprep.subr.mxu0 0.0
  %3452 = vmatpush1.msra.mxu0 0.0
  %3453 = vmatprep.subr.mxu0 0.0
  %3454 = vmatpush1.msra.mxu0 0.0
  %3455 = vmatprep.subr.mxu0 0.0
  %3456 = vmatpush1.msra.mxu0 0.0
  %3457 = vmatprep.subr.mxu0 0.0
  %3458 = vmatpush1.msra.mxu0 0.0
  %3459 = vmatprep.subr.mxu0 0.0
  %3460 = vmatpush1.msra.mxu0 0.0
  %3461 = vmatprep.subr.mxu0 0.0
  %3462 = vmatpush1.msra.mxu0 0.0
  %3463 = vmatprep.subr.mxu0 0.0
  %3464 = vmatpush1.msra.mxu0 0.0
  %3465 = vmatprep.subr.mxu0 0.0
  %3466 = vmatpush1.msra.mxu0 0.0
  %3467 = vmatprep.subr.mxu0 0.0
  %3468 = vmatpush1.msra.mxu0 0.0
  %3469 = vmatprep.subr.mxu0 0.0
  %3470 = vmatpush1.msra.mxu0 0.0
  %3471 = vmatprep.subr.mxu0 0.0
  %3472 = vmatpush1.msra.mxu0 0.0
  %3473 = vmatprep.subr.mxu0 0.0
  %3474 = vmatpush1.msra.mxu0 0.0
  %3475 = vmatprep.subr.mxu0 0.0
  %3476 = vmatpush1.msra.mxu0 0.0
  %3477 = vmatprep.subr.mxu0 0.0
  %3478 = vmatpush1.msra.mxu0 0.0
  %3479 = vmatprep.subr.mxu0 0.0
  %3480 = vmatpush1.msra.mxu0 0.0
  %3481 = vmatprep.subr.mxu0 0.0
  %3482 = vmatpush1.msra.mxu0 0.0
  %3483 = vmatprep.mubr.f32.mxu0 0.0
  %3484 = vmatmul.mubr.f32.gmra.mrb[0].mxu0 %v3417
  %v3485 = vpop.f32.mrb[0].mxu0
  %v3486 = vadd.f32 0.0, %v3485
  %v3487 = vpop.f32.mrb[0].mxu0
  %3488 = vdwg.mxu0
  %v3489 = vadd.f32 %v3406, %v3486
  %s3490 = scalar_lea.vmem %s5, 320
  %v3491 = vld [vmem:[%s3490] sm:$0xff]
  %v3492 = vld [vmem:[%s3490 + $0x8] sm:$0xff]
  %v3493 = vld [vmem:[%s3490 + $0x10] sm:$0xff]
  %v3494 = vld [vmem:[%s3490 + $0x18] sm:$0xff]
  %v3495 = vld [vmem:[%s3490 + $0x20] sm:$0xff]
  %v3496 = vld [vmem:[%s3490 + $0x28] sm:$0xff]
  %v3497 = vld [vmem:[%s3490 + $0x30] sm:$0xff]
  %v3498 = vld [vmem:[%s3490 + $0x38] sm:$0xff]
  %v3499 = vrot.slane %v3075, 2
  %v3500 = vsel %vm3096, %v3499, 0
  %3502 = vmatprep.subr.mxu0 0.0
  %3503 = vmatpush1.msra.mxu0 %v3491
  %3504 = vmatprep.subr.mxu0 0.0
  %3505 = vmatpush1.msra.mxu0 %v3492
  %3506 = vmatprep.subr.mxu0 0.0
  %3507 = vmatpush1.msra.mxu0 %v3493
  %3508 = vmatprep.subr.mxu0 0.0
  %3509 = vmatpush1.msra.mxu0 %v3494
  %3510 = vmatprep.subr.mxu0 0.0
  %3511 = vmatpush1.msra.mxu0 %v3495
  %3512 = vmatprep.subr.mxu0 0.0
  %3513 = vmatpush1.msra.mxu0 %v3496
  %3514 = vmatprep.subr.mxu0 0.0
  %3515 = vmatpush1.msra.mxu0 %v3497
  %3516 = vmatprep.subr.mxu0 0.0
  %3517 = vmatpush1.msra.mxu0 %v3498
  %3518 = vmatprep.subr.mxu0 0.0
  %3519 = vmatpush1.msra.mxu0 0.0
  %3520 = vmatprep.subr.mxu0 0.0
  %3521 = vmatpush1.msra.mxu0 0.0
  %3522 = vmatprep.subr.mxu0 0.0
  %3523 = vmatpush1.msra.mxu0 0.0
  %3524 = vmatprep.subr.mxu0 0.0
  %3525 = vmatpush1.msra.mxu0 0.0
  %3526 = vmatprep.subr.mxu0 0.0
  %3527 = vmatpush1.msra.mxu0 0.0
  %3528 = vmatprep.subr.mxu0 0.0
  %3529 = vmatpush1.msra.mxu0 0.0
  %3530 = vmatprep.subr.mxu0 0.0
  %3531 = vmatpush1.msra.mxu0 0.0
  %3532 = vmatprep.subr.mxu0 0.0
  %3533 = vmatpush1.msra.mxu0 0.0
  %3534 = vmatprep.subr.mxu0 0.0
  %3535 = vmatpush1.msra.mxu0 0.0
  %3536 = vmatprep.subr.mxu0 0.0
  %3537 = vmatpush1.msra.mxu0 0.0
  %3538 = vmatprep.subr.mxu0 0.0
  %3539 = vmatpush1.msra.mxu0 0.0
  %3540 = vmatprep.subr.mxu0 0.0
  %3541 = vmatpush1.msra.mxu0 0.0
  %3542 = vmatprep.subr.mxu0 0.0
  %3543 = vmatpush1.msra.mxu0 0.0
  %3544 = vmatprep.subr.mxu0 0.0
  %3545 = vmatpush1.msra.mxu0 0.0
  %3546 = vmatprep.subr.mxu0 0.0
  %3547 = vmatpush1.msra.mxu0 0.0
  %3548 = vmatprep.subr.mxu0 0.0
  %3549 = vmatpush1.msra.mxu0 0.0
  %3550 = vmatprep.subr.mxu0 0.0
  %3551 = vmatpush1.msra.mxu0 0.0
  %3552 = vmatprep.subr.mxu0 0.0
  %3553 = vmatpush1.msra.mxu0 0.0
  %3554 = vmatprep.subr.mxu0 0.0
  %3555 = vmatpush1.msra.mxu0 0.0
  %3556 = vmatprep.subr.mxu0 0.0
  %3557 = vmatpush1.msra.mxu0 0.0
  %3558 = vmatprep.subr.mxu0 0.0
  %3559 = vmatpush1.msra.mxu0 0.0
  %3560 = vmatprep.subr.mxu0 0.0
  %3561 = vmatpush1.msra.mxu0 0.0
  %3562 = vmatprep.subr.mxu0 0.0
  %3563 = vmatpush1.msra.mxu0 0.0
  %3564 = vmatprep.subr.mxu0 0.0
  %3565 = vmatpush1.msra.mxu0 0.0
  %3566 = vmatprep.mubr.f32.mxu0 0.0
  %3567 = vmatmul.mubr.f32.gmra.mrb[0].mxu0 %v3500
  %v3568 = vpop.f32.mrb[0].mxu0
  %v3569 = vadd.f32 0.0, %v3568
  %v3570 = vpop.f32.mrb[0].mxu0
  %3571 = vdwg.mxu0
  %v3572 = vadd.f32 %v3489, %v3569
  %s3573 = scalar_lea.vmem %s5, 384
  %v3574 = vld [vmem:[%s3573] sm:$0xff]
  %v3575 = vld [vmem:[%s3573 + $0x8] sm:$0xff]
  %v3576 = vld [vmem:[%s3573 + $0x10] sm:$0xff]
  %v3577 = vld [vmem:[%s3573 + $0x18] sm:$0xff]
  %v3578 = vld [vmem:[%s3573 + $0x20] sm:$0xff]
  %v3579 = vld [vmem:[%s3573 + $0x28] sm:$0xff]
  %v3580 = vld [vmem:[%s3573 + $0x30] sm:$0xff]
  %v3581 = vld [vmem:[%s3573 + $0x38] sm:$0xff]
  %v3582 = vrot.slane %v3075, 4
  %v3583 = vsel %vm3096, %v3582, 0
  %3585 = vmatprep.subr.mxu0 0.0
  %3586 = vmatpush1.msra.mxu0 %v3574
  %3587 = vmatprep.subr.mxu0 0.0
  %3588 = vmatpush1.msra.mxu0 %v3575
  %3589 = vmatprep.subr.mxu0 0.0
  %3590 = vmatpush1.msra.mxu0 %v3576
  %3591 = vmatprep.subr.mxu0 0.0
  %3592 = vmatpush1.msra.mxu0 %v3577
  %3593 = vmatprep.subr.mxu0 0.0
  %3594 = vmatpush1.msra.mxu0 %v3578
  %3595 = vmatprep.subr.mxu0 0.0
  %3596 = vmatpush1.msra.mxu0 %v3579
  %3597 = vmatprep.subr.mxu0 0.0
  %3598 = vmatpush1.msra.mxu0 %v3580
  %3599 = vmatprep.subr.mxu0 0.0
  %3600 = vmatpush1.msra.mxu0 %v3581
  %3601 = vmatprep.subr.mxu0 0.0
  %3602 = vmatpush1.msra.mxu0 0.0
  %3603 = vmatprep.subr.mxu0 0.0
  %3604 = vmatpush1.msra.mxu0 0.0
  %3605 = vmatprep.subr.mxu0 0.0
  %3606 = vmatpush1.msra.mxu0 0.0
  %3607 = vmatprep.subr.mxu0 0.0
  %3608 = vmatpush1.msra.mxu0 0.0
  %3609 = vmatprep.subr.mxu0 0.0
  %3610 = vmatpush1.msra.mxu0 0.0
  %3611 = vmatprep.subr.mxu0 0.0
  %3612 = vmatpush1.msra.mxu0 0.0
  %3613 = vmatprep.subr.mxu0 0.0
  %3614 = vmatpush1.msra.mxu0 0.0
  %3615 = vmatprep.subr.mxu0 0.0
  %3616 = vmatpush1.msra.mxu0 0.0
  %3617 = vmatprep.subr.mxu0 0.0
  %3618 = vmatpush1.msra.mxu0 0.0
  %3619 = vmatprep.subr.mxu0 0.0
  %3620 = vmatpush1.msra.mxu0 0.0
  %3621 = vmatprep.subr.mxu0 0.0
  %3622 = vmatpush1.msra.mxu0 0.0
  %3623 = vmatprep.subr.mxu0 0.0
  %3624 = vmatpush1.msra.mxu0 0.0
  %3625 = vmatprep.subr.mxu0 0.0
  %3626 = vmatpush1.msra.mxu0 0.0
  %3627 = vmatprep.subr.mxu0 0.0
  %3628 = vmatpush1.msra.mxu0 0.0
  %3629 = vmatprep.subr.mxu0 0.0
  %3630 = vmatpush1.msra.mxu0 0.0
  %3631 = vmatprep.subr.mxu0 0.0
  %3632 = vmatpush1.msra.mxu0 0.0
  %3633 = vmatprep.subr.mxu0 0.0
  %3634 = vmatpush1.msra.mxu0 0.0
  %3635 = vmatprep.subr.mxu0 0.0
  %3636 = vmatpush1.msra.mxu0 0.0
  %3637 = vmatprep.subr.mxu0 0.0
  %3638 = vmatpush1.msra.mxu0 0.0
  %3639 = vmatprep.subr.mxu0 0.0
  %3640 = vmatpush1.msra.mxu0 0.0
  %3641 = vmatprep.subr.mxu0 0.0
  %3642 = vmatpush1.msra.mxu0 0.0
  %3643 = vmatprep.subr.mxu0 0.0
  %3644 = vmatpush1.msra.mxu0 0.0
  %3645 = vmatprep.subr.mxu0 0.0
  %3646 = vmatpush1.msra.mxu0 0.0
  %3647 = vmatprep.subr.mxu0 0.0
  %3648 = vmatpush1.msra.mxu0 0.0
  %3649 = vmatprep.mubr.f32.mxu0 0.0
  %3650 = vmatmul.mubr.f32.gmra.mrb[0].mxu0 %v3583
  %v3651 = vpop.f32.mrb[0].mxu0
  %v3652 = vadd.f32 0.0, %v3651
  %v3653 = vpop.f32.mrb[0].mxu0
  %3654 = vdwg.mxu0
  %v3655 = vadd.f32 %v3572, %v3652
  %s3656 = scalar_lea.vmem %s5, 448
  %v3657 = vld [vmem:[%s3656] sm:$0xff]
  %v3658 = vld [vmem:[%s3656 + $0x8] sm:$0xff]
  %v3659 = vld [vmem:[%s3656 + $0x10] sm:$0xff]
  %v3660 = vld [vmem:[%s3656 + $0x18] sm:$0xff]
  %v3661 = vld [vmem:[%s3656 + $0x20] sm:$0xff]
  %v3662 = vld [vmem:[%s3656 + $0x28] sm:$0xff]
  %v3663 = vld [vmem:[%s3656 + $0x30] sm:$0xff]
  %v3664 = vld [vmem:[%s3656 + $0x38] sm:$0xff]
  %v3665 = vrot.slane %v3075, 6
  %v3666 = vsel %vm3096, %v3665, 0
  %3668 = vmatprep.subr.mxu0 0.0
  %3669 = vmatpush1.msra.mxu0 %v3657
  %3670 = vmatprep.subr.mxu0 0.0
  %3671 = vmatpush1.msra.mxu0 %v3658
  %3672 = vmatprep.subr.mxu0 0.0
  %3673 = vmatpush1.msra.mxu0 %v3659
  %3674 = vmatprep.subr.mxu0 0.0
  %3675 = vmatpush1.msra.mxu0 %v3660
  %3676 = vmatprep.subr.mxu0 0.0
  %3677 = vmatpush1.msra.mxu0 %v3661
  %3678 = vmatprep.subr.mxu0 0.0
  %3679 = vmatpush1.msra.mxu0 %v3662
  %3680 = vmatprep.subr.mxu0 0.0
  %3681 = vmatpush1.msra.mxu0 %v3663
  %3682 = vmatprep.subr.mxu0 0.0
  %3683 = vmatpush1.msra.mxu0 %v3664
  %3684 = vmatprep.subr.mxu0 0.0
  %3685 = vmatpush1.msra.mxu0 0.0
  %3686 = vmatprep.subr.mxu0 0.0
  %3687 = vmatpush1.msra.mxu0 0.0
  %3688 = vmatprep.subr.mxu0 0.0
  %3689 = vmatpush1.msra.mxu0 0.0
  %3690 = vmatprep.subr.mxu0 0.0
  %3691 = vmatpush1.msra.mxu0 0.0
  %3692 = vmatprep.subr.mxu0 0.0
  %3693 = vmatpush1.msra.mxu0 0.0
  %3694 = vmatprep.subr.mxu0 0.0
  %3695 = vmatpush1.msra.mxu0 0.0
  %3696 = vmatprep.subr.mxu0 0.0
  %3697 = vmatpush1.msra.mxu0 0.0
  %3698 = vmatprep.subr.mxu0 0.0
  %3699 = vmatpush1.msra.mxu0 0.0
  %3700 = vmatprep.subr.mxu0 0.0
  %3701 = vmatpush1.msra.mxu0 0.0
  %3702 = vmatprep.subr.mxu0 0.0
  %3703 = vmatpush1.msra.mxu0 0.0
  %3704 = vmatprep.subr.mxu0 0.0
  %3705 = vmatpush1.msra.mxu0 0.0
  %3706 = vmatprep.subr.mxu0 0.0
  %3707 = vmatpush1.msra.mxu0 0.0
  %3708 = vmatprep.subr.mxu0 0.0
  %3709 = vmatpush1.msra.mxu0 0.0
  %3710 = vmatprep.subr.mxu0 0.0
  %3711 = vmatpush1.msra.mxu0 0.0
  %3712 = vmatprep.subr.mxu0 0.0
  %3713 = vmatpush1.msra.mxu0 0.0
  %3714 = vmatprep.subr.mxu0 0.0
  %3715 = vmatpush1.msra.mxu0 0.0
  %3716 = vmatprep.subr.mxu0 0.0
  %3717 = vmatpush1.msra.mxu0 0.0
  %3718 = vmatprep.subr.mxu0 0.0
  %3719 = vmatpush1.msra.mxu0 0.0
  %3720 = vmatprep.subr.mxu0 0.0
  %3721 = vmatpush1.msra.mxu0 0.0
  %3722 = vmatprep.subr.mxu0 0.0
  %3723 = vmatpush1.msra.mxu0 0.0
  %3724 = vmatprep.subr.mxu0 0.0
  %3725 = vmatpush1.msra.mxu0 0.0
  %3726 = vmatprep.subr.mxu0 0.0
  %3727 = vmatpush1.msra.mxu0 0.0
  %3728 = vmatprep.subr.mxu0 0.0
  %3729 = vmatpush1.msra.mxu0 0.0
  %3730 = vmatprep.subr.mxu0 0.0
  %3731 = vmatpush1.msra.mxu0 0.0
  %3732 = vmatprep.mubr.f32.mxu0 0.0
  %3733 = vmatmul.mubr.f32.gmra.mrb[0].mxu0 %v3666
  %v3734 = vpop.f32.mrb[0].mxu0
  %v3735 = vadd.f32 0.0, %v3734
  %v3736 = vpop.f32.mrb[0].mxu0
  %3737 = vdwg.mxu0
  %v3738 = vadd.f32 %v3655, %v3735
  %s3739 = scalar_lea.vmem %s5, 512
  %v3740 = vld [vmem:[%s3739] sm:$0xff]
  %v3741 = vld [vmem:[%s3739 + $0x8] sm:$0xff]
  %v3742 = vld [vmem:[%s3739 + $0x10] sm:$0xff]
  %v3743 = vld [vmem:[%s3739 + $0x18] sm:$0xff]
  %v3744 = vld [vmem:[%s3739 + $0x20] sm:$0xff]
  %v3745 = vld [vmem:[%s3739 + $0x28] sm:$0xff]
  %v3746 = vld [vmem:[%s3739 + $0x30] sm:$0xff]
  %v3747 = vld [vmem:[%s3739 + $0x38] sm:$0xff]
  %v3749 = vsel %vm3096, %v3076, 0
  %3751 = vmatprep.subr.mxu0 0.0
  %3752 = vmatpush1.msra.mxu0 %v3740
  %3753 = vmatprep.subr.mxu0 0.0
  %3754 = vmatpush1.msra.mxu0 %v3741
  %3755 = vmatprep.subr.mxu0 0.0
  %3756 = vmatpush1.msra.mxu0 %v3742
  %3757 = vmatprep.subr.mxu0 0.0
  %3758 = vmatpush1.msra.mxu0 %v3743
  %3759 = vmatprep.subr.mxu0 0.0
  %3760 = vmatpush1.msra.mxu0 %v3744
  %3761 = vmatprep.subr.mxu0 0.0
  %3762 = vmatpush1.msra.mxu0 %v3745
  %3763 = vmatprep.subr.mxu0 0.0
  %3764 = vmatpush1.msra.mxu0 %v3746
  %3765 = vmatprep.subr.mxu0 0.0
  %3766 = vmatpush1.msra.mxu0 %v3747
  %3767 = vmatprep.subr.mxu0 0.0
  %3768 = vmatpush1.msra.mxu0 0.0
  %3769 = vmatprep.subr.mxu0 0.0
  %3770 = vmatpush1.msra.mxu0 0.0
  %3771 = vmatprep.subr.mxu0 0.0
  %3772 = vmatpush1.msra.mxu0 0.0
  %3773 = vmatprep.subr.mxu0 0.0
  %3774 = vmatpush1.msra.mxu0 0.0
  %3775 = vmatprep.subr.mxu0 0.0
  %3776 = vmatpush1.msra.mxu0 0.0
  %3777 = vmatprep.subr.mxu0 0.0
  %3778 = vmatpush1.msra.mxu0 0.0
  %3779 = vmatprep.subr.mxu0 0.0
  %3780 = vmatpush1.msra.mxu0 0.0
  %3781 = vmatprep.subr.mxu0 0.0
  %3782 = vmatpush1.msra.mxu0 0.0
  %3783 = vmatprep.subr.mxu0 0.0
  %3784 = vmatpush1.msra.mxu0 0.0
  %3785 = vmatprep.subr.mxu0 0.0
  %3786 = vmatpush1.msra.mxu0 0.0
  %3787 = vmatprep.subr.mxu0 0.0
  %3788 = vmatpush1.msra.mxu0 0.0
  %3789 = vmatprep.subr.mxu0 0.0
  %3790 = vmatpush1.msra.mxu0 0.0
  %3791 = vmatprep.subr.mxu0 0.0
  %3792 = vmatpush1.msra.mxu0 0.0
  %3793 = vmatprep.subr.mxu0 0.0
  %3794 = vmatpush1.msra.mxu0 0.0
  %3795 = vmatprep.subr.mxu0 0.0
  %3796 = vmatpush1.msra.mxu0 0.0
  %3797 = vmatprep.subr.mxu0 0.0
  %3798 = vmatpush1.msra.mxu0 0.0
  %3799 = vmatprep.subr.mxu0 0.0
  %3800 = vmatpush1.msra.mxu0 0.0
  %3801 = vmatprep.subr.mxu0 0.0
  %3802 = vmatpush1.msra.mxu0 0.0
  %3803 = vmatprep.subr.mxu0 0.0
  %3804 = vmatpush1.msra.mxu0 0.0
  %3805 = vmatprep.subr.mxu0 0.0
  %3806 = vmatpush1.msra.mxu0 0.0
  %3807 = vmatprep.subr.mxu0 0.0
  %3808 = vmatpush1.msra.mxu0 0.0
  %3809 = vmatprep.subr.mxu0 0.0
  %3810 = vmatpush1.msra.mxu0 0.0
  %3811 = vmatprep.subr.mxu0 0.0
  %3812 = vmatpush1.msra.mxu0 0.0
  %3813 = vmatprep.subr.mxu0 0.0
  %3814 = vmatpush1.msra.mxu0 0.0
  %3815 = vmatprep.mubr.f32.mxu0 0.0
  %3816 = vmatmul.mubr.f32.gmra.mrb[0].mxu0 %v3749
  %v3817 = vpop.f32.mrb[0].mxu0
  %v3818 = vadd.f32 0.0, %v3817
  %v3819 = vpop.f32.mrb[0].mxu0
  %3820 = vdwg.mxu0
  %v3821 = vadd.f32 %v3738, %v3818
  %v3822 = vld [vmem:[%s6] sm:$0x1]
  %v3824 = vlaneseq
  %v3825 = vshrl.u32 %v3824, 7
  %v3826 = vsub.s32 0, %v3825
  %v3827 = vrot.slane %v3822, %v3826
  %v3829 = vadd.f32 %v3821, %v3827
  %v3830 = vmax.f32 %v3829, 0.0
  %v3831 = vld [vmem:[%s7] sm:$0xff]
  %v3832 = vld [vmem:[%s7 + $0x8] sm:$0xff]
  %v3833 = vld [vmem:[%s7 + $0x10] sm:$0xff]
  %v3834 = vld [vmem:[%s7 + $0x18] sm:$0xff]
  %v3835 = vld [vmem:[%s7 + $0x20] sm:$0xff]
  %v3836 = vld [vmem:[%s7 + $0x28] sm:$0xff]
  %v3837 = vld [vmem:[%s7 + $0x30] sm:$0xff]
  %v3838 = vld [vmem:[%s7 + $0x38] sm:$0xff]
  %v3839 = vld [vmem:[%s8] sm:$0x1]
  %v3841 = vlaneseq
  %v3842 = vshrl.u32 %v3841, 7
  %v3843 = vsub.s32 0, %v3842
  %v3844 = vrot.slane %v3839, %v3843
  %v3847 = vsel %vm3096, %v3830, 0
  %3849 = vmatprep.subr.mxu0 0.0
  %3850 = vmatpush1.msra.mxu0 %v3831
  %3851 = vmatprep.subr.mxu0 0.0
  %3852 = vmatpush1.msra.mxu0 %v3832
  %3853 = vmatprep.subr.mxu0 0.0
  %3854 = vmatpush1.msra.mxu0 %v3833
  %3855 = vmatprep.subr.mxu0 0.0
  %3856 = vmatpush1.msra.mxu0 %v3834
  %3857 = vmatprep.subr.mxu0 0.0
  %3858 = vmatpush1.msra.mxu0 %v3835
  %3859 = vmatprep.subr.mxu0 0.0
  %3860 = vmatpush1.msra.mxu0 %v3836
  %3861 = vmatprep.subr.mxu0 0.0
  %3862 = vmatpush1.msra.mxu0 %v3837
  %3863 = vmatprep.subr.mxu0 0.0
  %3864 = vmatpush1.msra.mxu0 %v3838
  %3865 = vmatprep.subr.mxu0 0.0
  %3866 = vmatpush1.msra.mxu0 0.0
  %3867 = vmatprep.subr.mxu0 0.0
  %3868 = vmatpush1.msra.mxu0 0.0
  %3869 = vmatprep.subr.mxu0 0.0
  %3870 = vmatpush1.msra.mxu0 0.0
  %3871 = vmatprep.subr.mxu0 0.0
  %3872 = vmatpush1.msra.mxu0 0.0
  %3873 = vmatprep.subr.mxu0 0.0
  %3874 = vmatpush1.msra.mxu0 0.0
  %3875 = vmatprep.subr.mxu0 0.0
  %3876 = vmatpush1.msra.mxu0 0.0
  %3877 = vmatprep.subr.mxu0 0.0
  %3878 = vmatpush1.msra.mxu0 0.0
  %3879 = vmatprep.subr.mxu0 0.0
  %3880 = vmatpush1.msra.mxu0 0.0
  %3881 = vmatprep.subr.mxu0 0.0
  %3882 = vmatpush1.msra.mxu0 0.0
  %3883 = vmatprep.subr.mxu0 0.0
  %3884 = vmatpush1.msra.mxu0 0.0
  %3885 = vmatprep.subr.mxu0 0.0
  %3886 = vmatpush1.msra.mxu0 0.0
  %3887 = vmatprep.subr.mxu0 0.0
  %3888 = vmatpush1.msra.mxu0 0.0
  %3889 = vmatprep.subr.mxu0 0.0
  %3890 = vmatpush1.msra.mxu0 0.0
  %3891 = vmatprep.subr.mxu0 0.0
  %3892 = vmatpush1.msra.mxu0 0.0
  %3893 = vmatprep.subr.mxu0 0.0
  %3894 = vmatpush1.msra.mxu0 0.0
  %3895 = vmatprep.subr.mxu0 0.0
  %3896 = vmatpush1.msra.mxu0 0.0
  %3897 = vmatprep.subr.mxu0 0.0
  %3898 = vmatpush1.msra.mxu0 0.0
  %3899 = vmatprep.subr.mxu0 0.0
  %3900 = vmatpush1.msra.mxu0 0.0
  %3901 = vmatprep.subr.mxu0 0.0
  %3902 = vmatpush1.msra.mxu0 0.0
  %3903 = vmatprep.subr.mxu0 0.0
  %3904 = vmatpush1.msra.mxu0 0.0
  %3905 = vmatprep.subr.mxu0 0.0
  %3906 = vmatpush1.msra.mxu0 0.0
  %3907 = vmatprep.subr.mxu0 0.0
  %3908 = vmatpush1.msra.mxu0 0.0
  %3909 = vmatprep.subr.mxu0 0.0
  %3910 = vmatpush1.msra.mxu0 0.0
  %3911 = vmatprep.subr.mxu0 0.0
  %3912 = vmatpush1.msra.mxu0 0.0
  %3913 = vmatprep.mubr.f32.mxu0 0.0
  %3914 = vmatmul.mubr.f32.gmra.mrb[0].mxu0 %v3847
  %v3915 = vpop.f32.mrb[0].mxu0
  %v3916 = vadd.f32 %v3844, %v3915
  %v3917 = vpop.f32.mrb[0].mxu0
  %3918 = vdwg.mxu0
  %v3919 = vmax.f32 %v3916, 0.0
  %v3920 = vld [vmem:[%s9] sm:$0xff]
  %v3921 = vld [vmem:[%s9 + $0x8] sm:$0xff]
  %v3922 = vld [vmem:[%s9 + $0x10] sm:$0xff]
  %v3923 = vld [vmem:[%s9 + $0x18] sm:$0xff]
  %v3924 = vld [vmem:[%s9 + $0x20] sm:$0xff]
  %v3925 = vld [vmem:[%s9 + $0x28] sm:$0xff]
  %v3926 = vld [vmem:[%s9 + $0x30] sm:$0xff]
  %v3927 = vld [vmem:[%s9 + $0x38] sm:$0xff]
  %v3928 = vld [vmem:[#allocation2] sm:$0x1]
  %v3930 = vlaneseq
  %v3931 = vshrl.u32 %v3930, 7
  %v3932 = vsub.s32 0, %v3931
  %v3933 = vrot.slane %v3928, %v3932
  %v3936 = vsel %vm3096, %v3919, 0
  %3938 = vmatprep.subr.mxu0 0.0
  %3939 = vmatpush1.msra.mxu0 %v3920
  %3940 = vmatprep.subr.mxu0 0.0
  %3941 = vmatpush1.msra.mxu0 %v3921
  %3942 = vmatprep.subr.mxu0 0.0
  %3943 = vmatpush1.msra.mxu0 %v3922
  %3944 = vmatprep.subr.mxu0 0.0
  %3945 = vmatpush1.msra.mxu0 %v3923
  %3946 = vmatprep.subr.mxu0 0.0
  %3947 = vmatpush1.msra.mxu0 %v3924
  %3948 = vmatprep.subr.mxu0 0.0
  %3949 = vmatpush1.msra.mxu0 %v3925
  %3950 = vmatprep.subr.mxu0 0.0
  %3951 = vmatpush1.msra.mxu0 %v3926
  %3952 = vmatprep.subr.mxu0 0.0
  %3953 = vmatpush1.msra.mxu0 %v3927
  %3954 = vmatprep.subr.mxu0 0.0
  %3955 = vmatpush1.msra.mxu0 0.0
  %3956 = vmatprep.subr.mxu0 0.0
  %3957 = vmatpush1.msra.mxu0 0.0
  %3958 = vmatprep.subr.mxu0 0.0
  %3959 = vmatpush1.msra.mxu0 0.0
  %3960 = vmatprep.subr.mxu0 0.0
  %3961 = vmatpush1.msra.mxu0 0.0
  %3962 = vmatprep.subr.mxu0 0.0
  %3963 = vmatpush1.msra.mxu0 0.0
  %3964 = vmatprep.subr.mxu0 0.0
  %3965 = vmatpush1.msra.mxu0 0.0
  %3966 = vmatprep.subr.mxu0 0.0
  %3967 = vmatpush1.msra.mxu0 0.0
  %3968 = vmatprep.subr.mxu0 0.0
  %3969 = vmatpush1.msra.mxu0 0.0
  %3970 = vmatprep.subr.mxu0 0.0
  %3971 = vmatpush1.msra.mxu0 0.0
  %3972 = vmatprep.subr.mxu0 0.0
  %3973 = vmatpush1.msra.mxu0 0.0
  %3974 = vmatprep.subr.mxu0 0.0
  %3975 = vmatpush1.msra.mxu0 0.0
  %3976 = vmatprep.subr.mxu0 0.0
  %3977 = vmatpush1.msra.mxu0 0.0
  %3978 = vmatprep.subr.mxu0 0.0
  %3979 = vmatpush1.msra.mxu0 0.0
  %3980 = vmatprep.subr.mxu0 0.0
  %3981 = vmatpush1.msra.mxu0 0.0
  %3982 = vmatprep.subr.mxu0 0.0
  %3983 = vmatpush1.msra.mxu0 0.0
  %3984 = vmatprep.subr.mxu0 0.0
  %3985 = vmatpush1.msra.mxu0 0.0
  %3986 = vmatprep.subr.mxu0 0.0
  %3987 = vmatpush1.msra.mxu0 0.0
  %3988 = vmatprep.subr.mxu0 0.0
  %3989 = vmatpush1.msra.mxu0 0.0
  %3990 = vmatprep.subr.mxu0 0.0
  %3991 = vmatpush1.msra.mxu0 0.0
  %3992 = vmatprep.subr.mxu0 0.0
  %3993 = vmatpush1.msra.mxu0 0.0
  %3994 = vmatprep.subr.mxu0 0.0
  %3995 = vmatpush1.msra.mxu0 0.0
  %3996 = vmatprep.subr.mxu0 0.0
  %3997 = vmatpush1.msra.mxu0 0.0
  %3998 = vmatprep.subr.mxu0 0.0
  %3999 = vmatpush1.msra.mxu0 0.0
  %4000 = vmatprep.subr.mxu0 0.0
  %4001 = vmatpush1.msra.mxu0 0.0
  %4002 = vmatprep.mubr.f32.mxu0 0.0
  %4003 = vmatmul.mubr.f32.gmra.mrb[0].mxu0 %v3936
  %v4004 = vpop.f32.mrb[0].mxu0
  %v4005 = vadd.f32 %v3933, %v4004
  %v4006 = vpop.f32.mrb[0].mxu0
  %4007 = vdwg.mxu0
  %v4008 = vxor.u32 %v4005, 2147483648
  %v4009 = vmul.f32 %v4008, 1.442695
  %v4010 = vpow.pop %v4009
  %v4011 = vadd.f32 %v4010, 1.0
  %v4012 = vrcp.pop %v4011
  %v4013 = vmul.f32 1.0, %v4012
  %vm4014 = vcmask 1024
  %4015 = vst.msk [vmem:[%s11] sm:$0x3] %vm4014, %v4013
  // Predicated region
  $region46: #{policy_forward.1} parent=0 // pred_check
    _
  $region47: #{policy_forward.1} parent=0 // pred_check_branch
    %4017 = sbr.rel (0) target = $region49
  $region48: #{policy_forward.1} parent=0 // pred_region
    _
  $region49: #{policy_forward.1} parent=0 // pred_fallthru
    _
  // Predicated region
  $region50: #{policy_forward.1} parent=0 // pred_check
    _
  $region51: #{policy_forward.1} parent=0 // pred_check_branch
    %4019 = sbr.rel (0) target = $region53
  $region52: #{policy_forward.1} parent=0 // pred_region
    _
  $region53: #{policy_forward.1} parent=0 // pred_fallthru
    _

</llo_original>
